<compile_context>
chip_gen: v7x
topology: tpu7x:2x2x1
jax: 0.10.0
libtpu: 0.0.40
codegen_flags: <defaults>
</compile_context>

<pallas_src>
import functools

import jax
import jax.numpy as jnp
from jax import lax
from jax.experimental import pallas as pl
from jax.experimental.pallas import tpu as pltpu


def _conv_bn_kernel(x_ref, w_ref, bias_ref, scale_ref, shift_ref, *rest,
                    ksize, wp, l_out, neg_slope, has_residual):
    """One fused stage for a single batch element.

    x_ref:     (1, C, Hp*Wp + k-1)  reflection-padded input, flattened spatial
    w_ref:     (k*k, OC, C)         conv weight, indexed by shift s = i*k + j
    bias_ref:  (OC, 1)              conv bias (column -> lane broadcast is free)
    scale_ref: (OC, 1)              BN gamma / sqrt(var + eps)
    shift_ref: (OC, 1)              BN beta - mean * scale
    rest:      ([res_ref], o_ref)   optional residual (1, OC, Ho*Wp), output
    """
    if has_residual:
        res_ref, o_ref = rest
    else:
        (o_ref,) = rest

    oc = w_ref.shape[1]
    acc = jnp.zeros((oc, l_out), dtype=jnp.float32)

    # In-VMEM im2col: k*k statically shifted views of the flattened plane,
    # accumulated on the MXU. No patch tensor ever touches HBM.
    for i in range(ksize):
        for j in range(ksize):
            s = i * ksize + j
            x_sl = x_ref[0, :, pl.ds(i * wp + j, l_out)]          # (C, L)
            acc = acc + jnp.dot(w_ref[s], x_sl,
                                preferred_element_type=jnp.float32)

    # Fused epilogue, once per output tile, in f32.
    acc = acc + bias_ref[...]                                     # conv bias
    acc = jnp.where(acc >= 0, acc, neg_slope * acc)               # leaky_relu
    acc = acc * scale_ref[...] + shift_ref[...]                   # BN affine
    if has_residual:
        acc = acc + res_ref[0]                                    # skip add
    acc = jnp.maximum(acc, 0.0)                                   # ReLU
    o_ref[0] = acc.astype(o_ref.dtype)


def _conv_bn_stage(xp_flat, w_kk, bias_col, scale_col, shift_col,
                   residual_wide=None, *, ksize, wp, l_out, neg_slope=0.01):
    """Run one fused conv+BN(+residual)+ReLU stage over the batch grid."""
    n, c, lp_in = xp_flat.shape
    kk, oc, c_in = w_kk.shape

    inputs = [xp_flat, w_kk, bias_col, scale_col, shift_col]
    in_specs = [
        pl.BlockSpec((1, c, lp_in), lambda i: (i, 0, 0)),
        pl.BlockSpec((kk, oc, c_in), lambda i: (0, 0, 0)),
        pl.BlockSpec((oc, 1), lambda i: (0, 0)),
        pl.BlockSpec((oc, 1), lambda i: (0, 0)),
        pl.BlockSpec((oc, 1), lambda i: (0, 0)),
    ]
    has_residual = residual_wide is not None
    if has_residual:
        inputs.append(residual_wide)
        in_specs.append(pl.BlockSpec((1, oc, l_out), lambda i: (i, 0, 0)))

    kernel = functools.partial(_conv_bn_kernel, ksize=ksize, wp=wp,
                               l_out=l_out, neg_slope=neg_slope,
                               has_residual=has_residual)

    out_wide = pl.pallas_call(
        kernel,
        out_shape=jax.ShapeDtypeStruct((n, oc, l_out), xp_flat.dtype),
        grid_spec=pltpu.PrefetchScalarGridSpec(
            num_scalar_prefetch=0,
            grid=(n,),
            in_specs=in_specs,
            # Lane-dense output: last dim is the flattened spatial axis.
            out_specs=pl.BlockSpec((1, oc, l_out), lambda i: (i, 0, 0)),
        ),
        compiler_params=pltpu.CompilerParams(
            dimension_semantics=("parallel",)),
    )(*inputs)
    return out_wide


def residual_block(x, params, *, eps=1e-5, neg_slope=0.01):
    """x: (N, C, H, W) float32 NCHW. Returns (N, C, H, W)."""
    n, c, h, w = x.shape
    ksize = params["w1"].shape[2]
    assert ksize % 2 == 1
    assert params["w1"].shape[0] == params["w1"].shape[1] == c
    pad = ksize // 2                       # ResidualBlock uses stride=1 only.
    hp, wp = h + 2 * pad, w + 2 * pad
    ho, wo = hp - ksize + 1, wp - ksize + 1        # == h, w for k=3, pad=1
    l_out = ho * wp                                 # wide output (garbage cols)
    lp_in = hp * wp + (ksize - 1)                   # so all 9 slices are in-bounds

    def prep_input(t):
        tp = jnp.pad(t, ((0, 0), (0, 0), (pad, pad), (pad, pad)),
                     mode="reflect")                # nn.ReflectionPad2d
        tf = tp.reshape(n, c, hp * wp)
        return jnp.pad(tf, ((0, 0), (0, 0), (0, ksize - 1)))

    def prep_weight(wt):
        oc = wt.shape[0]
        # (OC, C, kh, kw) -> (kh*kw, OC, C), shift-major to match the kernel.
        return wt.transpose(2, 3, 0, 1).reshape(ksize * ksize, oc, wt.shape[1])

    def bn_affine(gamma, beta, mean, var):
        scale = gamma / jnp.sqrt(var + eps)
        shift = beta - mean * scale
        return scale.reshape(-1, 1), shift.reshape(-1, 1)

    def unwiden(t_wide):
        return t_wide.reshape(n, c, ho, wp)[:, :, :, :wo]     # already NCHW

    # Stage 1: conv1 + bias + leaky_relu + bn1 + relu
    s1, sh1 = bn_affine(params["bn1_gamma"], params["bn1_beta"],
                        params["bn1_mean"], params["bn1_var"])
    h1_wide = _conv_bn_stage(prep_input(x), prep_weight(params["w1"]),
                             params["b1"].reshape(-1, 1), s1, sh1,
                             ksize=ksize, wp=wp, l_out=l_out,
                             neg_slope=neg_slope)
    h1 = unwiden(h1_wide)

    # Stage 2: conv2 + bias + leaky_relu + bn2 + residual add + relu (fused)
    s2, sh2 = bn_affine(params["bn2_gamma"], params["bn2_beta"],
                        params["bn2_mean"], params["bn2_var"])
    res_wide = jnp.pad(x, ((0, 0), (0, 0), (0, 0), (0, wp - wo))
                       ).reshape(n, c, l_out)
    out_wide = _conv_bn_stage(prep_input(h1), prep_weight(params["w2"]),
                              params["b2"].reshape(-1, 1), s2, sh2, res_wide,
                              ksize=ksize, wp=wp, l_out=l_out,
                              neg_slope=neg_slope)
    return unwiden(out_wide)


def _reference(x, params, eps=1e-5, neg_slope=0.01):
    pad = params["w1"].shape[2] // 2

    def conv_layer(t, wt, b):
        tp = jnp.pad(t, ((0, 0), (0, 0), (pad, pad), (pad, pad)),
                     mode="reflect")
        out = lax.conv_general_dilated(
            tp, wt, window_strides=(1, 1), padding="VALID",
            dimension_numbers=("NCHW", "OIHW", "NCHW"))
        out = out + b.reshape(1, -1, 1, 1)
        return jnp.where(out >= 0, out, neg_slope * out)

    def bn(t, g, be, m, v):
        return (g.reshape(1, -1, 1, 1) * (t - m.reshape(1, -1, 1, 1))
                / jnp.sqrt(v.reshape(1, -1, 1, 1) + eps)
                + be.reshape(1, -1, 1, 1))

    out = jnp.maximum(bn(conv_layer(x, params["w1"], params["b1"]),
                         params["bn1_gamma"], params["bn1_beta"],
                         params["bn1_mean"], params["bn1_var"]), 0.0)
    out = bn(conv_layer(out, params["w2"], params["b2"]),
             params["bn2_gamma"], params["bn2_beta"],
             params["bn2_mean"], params["bn2_var"])
    return jnp.maximum(out + x, 0.0)


if __name__ == "__main__":
    key = jax.random.PRNGKey(0)
    ks = jax.random.split(key, 13)

    batch, channels, spatial, ksz = 2, 4, 16, 3
    x = jax.random.normal(ks[0], (batch, channels, spatial, spatial),
                          dtype=jnp.float32)
    fan_in = channels * ksz * ksz

    def w_init(k_):
        return (jax.random.normal(k_, (channels, channels, ksz, ksz),
                                  dtype=jnp.float32) / jnp.sqrt(fan_in))

    params = {
        "w1": w_init(ks[1]),
        "b1": 0.01 * jax.random.normal(ks[2], (channels,), jnp.float32),
        "bn1_gamma": 1.0 + 0.1 * jax.random.normal(ks[3], (channels,), jnp.float32),
        "bn1_beta": 0.1 * jax.random.normal(ks[4], (channels,), jnp.float32),
        "bn1_mean": 0.1 * jax.random.normal(ks[5], (channels,), jnp.float32),
        "bn1_var": 0.5 + jnp.abs(jax.random.normal(ks[6], (channels,), jnp.float32)),
        "w2": w_init(ks[7]),
        "b2": 0.01 * jax.random.normal(ks[8], (channels,), jnp.float32),
        "bn2_gamma": 1.0 + 0.1 * jax.random.normal(ks[9], (channels,), jnp.float32),
        "bn2_beta": 0.1 * jax.random.normal(ks[10], (channels,), jnp.float32),
        "bn2_mean": 0.1 * jax.random.normal(ks[11], (channels,), jnp.float32),
        "bn2_var": 0.5 + jnp.abs(jax.random.normal(ks[12], (channels,), jnp.float32)),
    }

    out = jax.jit(residual_block)(x, params)
    out = jax.block_until_ready(out)

    ref = _reference(x, params)
    assert out.shape == ref.shape == (batch, channels, spatial, spatial)
    max_err = float(jnp.max(jnp.abs(out - ref)))
    assert jnp.allclose(out, ref, atol=1e-4, rtol=1e-4), max_err

    print("KERNEL_OK")
</pallas_src>

<mosaic_0001>
module attributes {stable_mosaic.version = 11 : i64} {
  func.func @_conv_bn_kernel(%arg0: i32, %arg1: memref<1x4x326xf32, #tpu.memory_space<vmem>>, %arg2: memref<9x4x4xf32, #tpu.memory_space<vmem>>, %arg3: memref<4x1xf32, #tpu.memory_space<vmem>>, %arg4: memref<4x1xf32, #tpu.memory_space<vmem>>, %arg5: memref<4x1xf32, #tpu.memory_space<vmem>>, %arg6: memref<1x4x288xf32, #tpu.memory_space<vmem>>) attributes {dimension_semantics = [#tpu.dimension_semantics<parallel>], iteration_bounds = array<i64: 2>, scalar_prefetch = 0 : i64, scratch_operands = 0 : i64, tpu.core_type = #tpu.core_type<tc>, window_params = [{transform_indices = @transform_0, window_bounds = array<i64: 1, 4, 326>}, {pipeline_mode = #tpu.pipeline_mode<synchronous>, transform_indices = @transform_1, window_bounds = array<i64: 9, 4, 4>}, {pipeline_mode = #tpu.pipeline_mode<synchronous>, transform_indices = @transform_2, window_bounds = array<i64: 4, 1>}, {pipeline_mode = #tpu.pipeline_mode<synchronous>, transform_indices = @transform_3, window_bounds = array<i64: 4, 1>}, {pipeline_mode = #tpu.pipeline_mode<synchronous>, transform_indices = @transform_4, window_bounds = array<i64: 4, 1>}, {transform_indices = @transform_5, window_bounds = array<i64: 1, 4, 288>}]} {
    %cst = arith.constant 0.000000e+00 : f32
    %0 = vector.broadcast %cst : f32 to vector<4x288xf32>
    %c0 = arith.constant 0 : index
    %c0_0 = arith.constant 0 : index
    %c0_1 = arith.constant 0 : index
    %1 = vector.load %arg1[%c0, %c0_0, %c0_1] : memref<1x4x326xf32, #tpu.memory_space<vmem>>, vector<1x4x288xf32>
    %2 = vector.shape_cast %1 : vector<1x4x288xf32> to vector<4x288xf32>
    %c0_2 = arith.constant 0 : index
    %c0_3 = arith.constant 0 : index
    %c0_4 = arith.constant 0 : index
    %3 = vector.load %arg2[%c0_2, %c0_3, %c0_4] : memref<9x4x4xf32, #tpu.memory_space<vmem>>, vector<1x4x4xf32>
    %4 = vector.shape_cast %3 : vector<1x4x4xf32> to vector<4x4xf32>
    %cst_5 = arith.constant dense<0.000000e+00> : vector<4x288xf32>
    %5 = tpu.matmul %4, %2, %cst_5 {dimension_numbers = #tpu.dot_dimension_numbers<[1], [0], [0], [1], [0, 0, 1, 1], [], []>} : vector<4x4xf32>, vector<4x288xf32>, vector<4x288xf32> -> vector<4x288xf32>
    %6 = arith.addf %0, %5 : vector<4x288xf32>
    %c0_6 = arith.constant 0 : index
    %c0_7 = arith.constant 0 : index
    %c1 = arith.constant 1 : index
    %7 = vector.load %arg1[%c0_6, %c0_7, %c1] : memref<1x4x326xf32, #tpu.memory_space<vmem>>, vector<1x4x288xf32>
    %8 = vector.shape_cast %7 : vector<1x4x288xf32> to vector<4x288xf32>
    %c1_8 = arith.constant 1 : index
    %c0_9 = arith.constant 0 : index
    %c0_10 = arith.constant 0 : index
    %9 = vector.load %arg2[%c1_8, %c0_9, %c0_10] : memref<9x4x4xf32, #tpu.memory_space<vmem>>, vector<1x4x4xf32>
    %10 = vector.shape_cast %9 : vector<1x4x4xf32> to vector<4x4xf32>
    %cst_11 = arith.constant dense<0.000000e+00> : vector<4x288xf32>
    %11 = tpu.matmul %10, %8, %cst_11 {dimension_numbers = #tpu.dot_dimension_numbers<[1], [0], [0], [1], [0, 0, 1, 1], [], []>} : vector<4x4xf32>, vector<4x288xf32>, vector<4x288xf32> -> vector<4x288xf32>
    %12 = arith.addf %6, %11 : vector<4x288xf32>
    %c0_12 = arith.constant 0 : index
    %c0_13 = arith.constant 0 : index
    %c2 = arith.constant 2 : index
    %13 = vector.load %arg1[%c0_12, %c0_13, %c2] : memref<1x4x326xf32, #tpu.memory_space<vmem>>, vector<1x4x288xf32>
    %14 = vector.shape_cast %13 : vector<1x4x288xf32> to vector<4x288xf32>
    %c2_14 = arith.constant 2 : index
    %c0_15 = arith.constant 0 : index
    %c0_16 = arith.constant 0 : index
    %15 = vector.load %arg2[%c2_14, %c0_15, %c0_16] : memref<9x4x4xf32, #tpu.memory_space<vmem>>, vector<1x4x4xf32>
    %16 = vector.shape_cast %15 : vector<1x4x4xf32> to vector<4x4xf32>
    %cst_17 = arith.constant dense<0.000000e+00> : vector<4x288xf32>
    %17 = tpu.matmul %16, %14, %cst_17 {dimension_numbers = #tpu.dot_dimension_numbers<[1], [0], [0], [1], [0, 0, 1, 1], [], []>} : vector<4x4xf32>, vector<4x288xf32>, vector<4x288xf32> -> vector<4x288xf32>
    %18 = arith.addf %12, %17 : vector<4x288xf32>
    %c0_18 = arith.constant 0 : index
    %c0_19 = arith.constant 0 : index
    %c18 = arith.constant 18 : index
    %19 = vector.load %arg1[%c0_18, %c0_19, %c18] : memref<1x4x326xf32, #tpu.memory_space<vmem>>, vector<1x4x288xf32>
    %20 = vector.shape_cast %19 : vector<1x4x288xf32> to vector<4x288xf32>
    %c3 = arith.constant 3 : index
    %c0_20 = arith.constant 0 : index
    %c0_21 = arith.constant 0 : index
    %21 = vector.load %arg2[%c3, %c0_20, %c0_21] : memref<9x4x4xf32, #tpu.memory_space<vmem>>, vector<1x4x4xf32>
    %22 = vector.shape_cast %21 : vector<1x4x4xf32> to vector<4x4xf32>
    %cst_22 = arith.constant dense<0.000000e+00> : vector<4x288xf32>
    %23 = tpu.matmul %22, %20, %cst_22 {dimension_numbers = #tpu.dot_dimension_numbers<[1], [0], [0], [1], [0, 0, 1, 1], [], []>} : vector<4x4xf32>, vector<4x288xf32>, vector<4x288xf32> -> vector<4x288xf32>
    %24 = arith.addf %18, %23 : vector<4x288xf32>
    %c0_23 = arith.constant 0 : index
    %c0_24 = arith.constant 0 : index
    %c19 = arith.constant 19 : index
    %25 = vector.load %arg1[%c0_23, %c0_24, %c19] : memref<1x4x326xf32, #tpu.memory_space<vmem>>, vector<1x4x288xf32>
    %26 = vector.shape_cast %25 : vector<1x4x288xf32> to vector<4x288xf32>
    %c4 = arith.constant 4 : index
    %c0_25 = arith.constant 0 : index
    %c0_26 = arith.constant 0 : index
    %27 = vector.load %arg2[%c4, %c0_25, %c0_26] : memref<9x4x4xf32, #tpu.memory_space<vmem>>, vector<1x4x4xf32>
    %28 = vector.shape_cast %27 : vector<1x4x4xf32> to vector<4x4xf32>
    %cst_27 = arith.constant dense<0.000000e+00> : vector<4x288xf32>
    %29 = tpu.matmul %28, %26, %cst_27 {dimension_numbers = #tpu.dot_dimension_numbers<[1], [0], [0], [1], [0, 0, 1, 1], [], []>} : vector<4x4xf32>, vector<4x288xf32>, vector<4x288xf32> -> vector<4x288xf32>
    %30 = arith.addf %24, %29 : vector<4x288xf32>
    %c0_28 = arith.constant 0 : index
    %c0_29 = arith.constant 0 : index
    %c20 = arith.constant 20 : index
    %31 = vector.load %arg1[%c0_28, %c0_29, %c20] : memref<1x4x326xf32, #tpu.memory_space<vmem>>, vector<1x4x288xf32>
    %32 = vector.shape_cast %31 : vector<1x4x288xf32> to vector<4x288xf32>
    %c5 = arith.constant 5 : index
    %c0_30 = arith.constant 0 : index
    %c0_31 = arith.constant 0 : index
    %33 = vector.load %arg2[%c5, %c0_30, %c0_31] : memref<9x4x4xf32, #tpu.memory_space<vmem>>, vector<1x4x4xf32>
    %34 = vector.shape_cast %33 : vector<1x4x4xf32> to vector<4x4xf32>
    %cst_32 = arith.constant dense<0.000000e+00> : vector<4x288xf32>
    %35 = tpu.matmul %34, %32, %cst_32 {dimension_numbers = #tpu.dot_dimension_numbers<[1], [0], [0], [1], [0, 0, 1, 1], [], []>} : vector<4x4xf32>, vector<4x288xf32>, vector<4x288xf32> -> vector<4x288xf32>
    %36 = arith.addf %30, %35 : vector<4x288xf32>
    %c0_33 = arith.constant 0 : index
    %c0_34 = arith.constant 0 : index
    %c36 = arith.constant 36 : index
    %37 = vector.load %arg1[%c0_33, %c0_34, %c36] : memref<1x4x326xf32, #tpu.memory_space<vmem>>, vector<1x4x288xf32>
    %38 = vector.shape_cast %37 : vector<1x4x288xf32> to vector<4x288xf32>
    %c6 = arith.constant 6 : index
    %c0_35 = arith.constant 0 : index
    %c0_36 = arith.constant 0 : index
    %39 = vector.load %arg2[%c6, %c0_35, %c0_36] : memref<9x4x4xf32, #tpu.memory_space<vmem>>, vector<1x4x4xf32>
    %40 = vector.shape_cast %39 : vector<1x4x4xf32> to vector<4x4xf32>
    %cst_37 = arith.constant dense<0.000000e+00> : vector<4x288xf32>
    %41 = tpu.matmul %40, %38, %cst_37 {dimension_numbers = #tpu.dot_dimension_numbers<[1], [0], [0], [1], [0, 0, 1, 1], [], []>} : vector<4x4xf32>, vector<4x288xf32>, vector<4x288xf32> -> vector<4x288xf32>
    %42 = arith.addf %36, %41 : vector<4x288xf32>
    %c0_38 = arith.constant 0 : index
    %c0_39 = arith.constant 0 : index
    %c37 = arith.constant 37 : index
    %43 = vector.load %arg1[%c0_38, %c0_39, %c37] : memref<1x4x326xf32, #tpu.memory_space<vmem>>, vector<1x4x288xf32>
    %44 = vector.shape_cast %43 : vector<1x4x288xf32> to vector<4x288xf32>
    %c7 = arith.constant 7 : index
    %c0_40 = arith.constant 0 : index
    %c0_41 = arith.constant 0 : index
    %45 = vector.load %arg2[%c7, %c0_40, %c0_41] : memref<9x4x4xf32, #tpu.memory_space<vmem>>, vector<1x4x4xf32>
    %46 = vector.shape_cast %45 : vector<1x4x4xf32> to vector<4x4xf32>
    %cst_42 = arith.constant dense<0.000000e+00> : vector<4x288xf32>
    %47 = tpu.matmul %46, %44, %cst_42 {dimension_numbers = #tpu.dot_dimension_numbers<[1], [0], [0], [1], [0, 0, 1, 1], [], []>} : vector<4x4xf32>, vector<4x288xf32>, vector<4x288xf32> -> vector<4x288xf32>
    %48 = arith.addf %42, %47 : vector<4x288xf32>
    %c0_43 = arith.constant 0 : index
    %c0_44 = arith.constant 0 : index
    %c38 = arith.constant 38 : index
    %49 = vector.load %arg1[%c0_43, %c0_44, %c38] : memref<1x4x326xf32, #tpu.memory_space<vmem>>, vector<1x4x288xf32>
    %50 = vector.shape_cast %49 : vector<1x4x288xf32> to vector<4x288xf32>
    %c8 = arith.constant 8 : index
    %c0_45 = arith.constant 0 : index
    %c0_46 = arith.constant 0 : index
    %51 = vector.load %arg2[%c8, %c0_45, %c0_46] : memref<9x4x4xf32, #tpu.memory_space<vmem>>, vector<1x4x4xf32>
    %52 = vector.shape_cast %51 : vector<1x4x4xf32> to vector<4x4xf32>
    %cst_47 = arith.constant dense<0.000000e+00> : vector<4x288xf32>
    %53 = tpu.matmul %52, %50, %cst_47 {dimension_numbers = #tpu.dot_dimension_numbers<[1], [0], [0], [1], [0, 0, 1, 1], [], []>} : vector<4x4xf32>, vector<4x288xf32>, vector<4x288xf32> -> vector<4x288xf32>
    %54 = arith.addf %48, %53 : vector<4x288xf32>
    %c0_48 = arith.constant 0 : index
    %c0_49 = arith.constant 0 : index
    %55 = vector.load %arg3[%c0_48, %c0_49] : memref<4x1xf32, #tpu.memory_space<vmem>>, vector<4x1xf32>
    %56 = vector.broadcast %55 : vector<4x1xf32> to vector<4x288xf32>
    %57 = arith.addf %54, %56 : vector<4x288xf32>
    %cst_50 = arith.constant 0.000000e+00 : f32
    %58 = vector.broadcast %cst_50 : f32 to vector<4x288xf32>
    %59 = arith.cmpf oge, %57, %58 : vector<4x288xf32>
    %cst_51 = arith.constant 0.00999999977 : f32
    %60 = vector.broadcast %cst_51 : f32 to vector<4x288xf32>
    %61 = arith.mulf %60, %57 : vector<4x288xf32>
    %62 = arith.select %59, %57, %61 : vector<4x288xi1>, vector<4x288xf32>
    %c0_52 = arith.constant 0 : index
    %c0_53 = arith.constant 0 : index
    %63 = vector.load %arg4[%c0_52, %c0_53] : memref<4x1xf32, #tpu.memory_space<vmem>>, vector<4x1xf32>
    %64 = vector.broadcast %63 : vector<4x1xf32> to vector<4x288xf32>
    %65 = arith.mulf %62, %64 : vector<4x288xf32>
    %c0_54 = arith.constant 0 : index
    %c0_55 = arith.constant 0 : index
    %66 = vector.load %arg5[%c0_54, %c0_55] : memref<4x1xf32, #tpu.memory_space<vmem>>, vector<4x1xf32>
    %67 = vector.broadcast %66 : vector<4x1xf32> to vector<4x288xf32>
    %68 = arith.addf %65, %67 : vector<4x288xf32>
    %cst_56 = arith.constant 0.000000e+00 : f32
    %69 = vector.broadcast %cst_56 : f32 to vector<4x288xf32>
    %70 = arith.maximumf %68, %69 : vector<4x288xf32>
    %c0_57 = arith.constant 0 : index
    %c0_58 = arith.constant 0 : index
    %c0_59 = arith.constant 0 : index
    %71 = vector.load %arg6[%c0_57, %c0_58, %c0_59] : memref<1x4x288xf32, #tpu.memory_space<vmem>>, vector<1x4x288xf32>
    %72 = vector.shape_cast %71 : vector<1x4x288xf32> to vector<4x288xf32>
    %73 = vector.shape_cast %70 : vector<4x288xf32> to vector<1x4x288xf32>
    tpu.vector_store %arg6[%c0_57, %c0_58, %c0_59], %73 {strides = array<i32>} : memref<1x4x288xf32, #tpu.memory_space<vmem>>, vector<1x4x288xf32>,
    return
  }
  func.func @transform_0(%arg0: i32) -> (i32, i32, i32) {
    %c0_i32 = arith.constant 0 : i32
    %c0_i32_0 = arith.constant 0 : i32
    %c0_i32_1 = arith.constant 0 : i32
    return %arg0, %c0_i32, %c0_i32_0 : i32, i32, i32
  }
  func.func @transform_1(%arg0: i32) -> (i32, i32, i32) {
    %c0_i32 = arith.constant 0 : i32
    %c0_i32_0 = arith.constant 0 : i32
    %c0_i32_1 = arith.constant 0 : i32
    %c0_i32_2 = arith.constant 0 : i32
    return %c0_i32, %c0_i32_0, %c0_i32_1 : i32, i32, i32
  }
  func.func @transform_2(%arg0: i32) -> (i32, i32) {
    %c0_i32 = arith.constant 0 : i32
    %c0_i32_0 = arith.constant 0 : i32
    %c0_i32_1 = arith.constant 0 : i32
    return %c0_i32, %c0_i32_0 : i32, i32
  }
  func.func @transform_3(%arg0: i32) -> (i32, i32) {
    %c0_i32 = arith.constant 0 : i32
    %c0_i32_0 = arith.constant 0 : i32
    %c0_i32_1 = arith.constant 0 : i32
    return %c0_i32, %c0_i32_0 : i32, i32
  }
  func.func @transform_4(%arg0: i32) -> (i32, i32) {
    %c0_i32 = arith.constant 0 : i32
    %c0_i32_0 = arith.constant 0 : i32
    %c0_i32_1 = arith.constant 0 : i32
    return %c0_i32, %c0_i32_0 : i32, i32
  }
  func.func @transform_5(%arg0: i32) -> (i32, i32, i32) {
    %c0_i32 = arith.constant 0 : i32
    %c0_i32_0 = arith.constant 0 : i32
    %c0_i32_1 = arith.constant 0 : i32
    return %arg0, %c0_i32, %c0_i32_0 : i32, i32, i32
  }
}

module attributes {stable_mosaic.version = 11 : i64} {
  func.func @_conv_bn_kernel(%arg0: i32, %arg1: memref<1x4x326xf32, #tpu.memory_space<vmem>>, %arg2: memref<9x4x4xf32, #tpu.memory_space<vmem>>, %arg3: memref<4x1xf32, #tpu.memory_space<vmem>>, %arg4: memref<4x1xf32, #tpu.memory_space<vmem>>, %arg5: memref<4x1xf32, #tpu.memory_space<vmem>>, %arg6: memref<1x4x288xf32, #tpu.memory_space<vmem>>, %arg7: memref<1x4x288xf32, #tpu.memory_space<vmem>>) attributes {dimension_semantics = [#tpu.dimension_semantics<parallel>], iteration_bounds = array<i64: 2>, scalar_prefetch = 0 : i64, scratch_operands = 0 : i64, tpu.core_type = #tpu.core_type<tc>, window_params = [{transform_indices = @transform_0, window_bounds = array<i64: 1, 4, 326>}, {pipeline_mode = #tpu.pipeline_mode<synchronous>, transform_indices = @transform_1, window_bounds = array<i64: 9, 4, 4>}, {pipeline_mode = #tpu.pipeline_mode<synchronous>, transform_indices = @transform_2, window_bounds = array<i64: 4, 1>}, {pipeline_mode = #tpu.pipeline_mode<synchronous>, transform_indices = @transform_3, window_bounds = array<i64: 4, 1>}, {pipeline_mode = #tpu.pipeline_mode<synchronous>, transform_indices = @transform_4, window_bounds = array<i64: 4, 1>}, {transform_indices = @transform_5, window_bounds = array<i64: 1, 4, 288>}, {transform_indices = @transform_6, window_bounds = array<i64: 1, 4, 288>}]} {
    %cst = arith.constant 0.000000e+00 : f32
    %0 = vector.broadcast %cst : f32 to vector<4x288xf32>
    %c0 = arith.constant 0 : index
    %c0_0 = arith.constant 0 : index
    %c0_1 = arith.constant 0 : index
    %1 = vector.load %arg1[%c0, %c0_0, %c0_1] : memref<1x4x326xf32, #tpu.memory_space<vmem>>, vector<1x4x288xf32>
    %2 = vector.shape_cast %1 : vector<1x4x288xf32> to vector<4x288xf32>
    %c0_2 = arith.constant 0 : index
    %c0_3 = arith.constant 0 : index
    %c0_4 = arith.constant 0 : index
    %3 = vector.load %arg2[%c0_2, %c0_3, %c0_4] : memref<9x4x4xf32, #tpu.memory_space<vmem>>, vector<1x4x4xf32>
    %4 = vector.shape_cast %3 : vector<1x4x4xf32> to vector<4x4xf32>
    %cst_5 = arith.constant dense<0.000000e+00> : vector<4x288xf32>
    %5 = tpu.matmul %4, %2, %cst_5 {dimension_numbers = #tpu.dot_dimension_numbers<[1], [0], [0], [1], [0, 0, 1, 1], [], []>} : vector<4x4xf32>, vector<4x288xf32>, vector<4x288xf32> -> vector<4x288xf32>
    %6 = arith.addf %0, %5 : vector<4x288xf32>
    %c0_6 = arith.constant 0 : index
    %c0_7 = arith.constant 0 : index
    %c1 = arith.constant 1 : index
    %7 = vector.load %arg1[%c0_6, %c0_7, %c1] : memref<1x4x326xf32, #tpu.memory_space<vmem>>, vector<1x4x288xf32>
    %8 = vector.shape_cast %7 : vector<1x4x288xf32> to vector<4x288xf32>
    %c1_8 = arith.constant 1 : index
    %c0_9 = arith.constant 0 : index
    %c0_10 = arith.constant 0 : index
    %9 = vector.load %arg2[%c1_8, %c0_9, %c0_10] : memref<9x4x4xf32, #tpu.memory_space<vmem>>, vector<1x4x4xf32>
    %10 = vector.shape_cast %9 : vector<1x4x4xf32> to vector<4x4xf32>
    %cst_11 = arith.constant dense<0.000000e+00> : vector<4x288xf32>
    %11 = tpu.matmul %10, %8, %cst_11 {dimension_numbers = #tpu.dot_dimension_numbers<[1], [0], [0], [1], [0, 0, 1, 1], [], []>} : vector<4x4xf32>, vector<4x288xf32>, vector<4x288xf32> -> vector<4x288xf32>
    %12 = arith.addf %6, %11 : vector<4x288xf32>
    %c0_12 = arith.constant 0 : index
    %c0_13 = arith.constant 0 : index
    %c2 = arith.constant 2 : index
    %13 = vector.load %arg1[%c0_12, %c0_13, %c2] : memref<1x4x326xf32, #tpu.memory_space<vmem>>, vector<1x4x288xf32>
    %14 = vector.shape_cast %13 : vector<1x4x288xf32> to vector<4x288xf32>
    %c2_14 = arith.constant 2 : index
    %c0_15 = arith.constant 0 : index
    %c0_16 = arith.constant 0 : index
    %15 = vector.load %arg2[%c2_14, %c0_15, %c0_16] : memref<9x4x4xf32, #tpu.memory_space<vmem>>, vector<1x4x4xf32>
    %16 = vector.shape_cast %15 : vector<1x4x4xf32> to vector<4x4xf32>
    %cst_17 = arith.constant dense<0.000000e+00> : vector<4x288xf32>
    %17 = tpu.matmul %16, %14, %cst_17 {dimension_numbers = #tpu.dot_dimension_numbers<[1], [0], [0], [1], [0, 0, 1, 1], [], []>} : vector<4x4xf32>, vector<4x288xf32>, vector<4x288xf32> -> vector<4x288xf32>
    %18 = arith.addf %12, %17 : vector<4x288xf32>
    %c0_18 = arith.constant 0 : index
    %c0_19 = arith.constant 0 : index
    %c18 = arith.constant 18 : index
    %19 = vector.load %arg1[%c0_18, %c0_19, %c18] : memref<1x4x326xf32, #tpu.memory_space<vmem>>, vector<1x4x288xf32>
    %20 = vector.shape_cast %19 : vector<1x4x288xf32> to vector<4x288xf32>
    %c3 = arith.constant 3 : index
    %c0_20 = arith.constant 0 : index
    %c0_21 = arith.constant 0 : index
    %21 = vector.load %arg2[%c3, %c0_20, %c0_21] : memref<9x4x4xf32, #tpu.memory_space<vmem>>, vector<1x4x4xf32>
    %22 = vector.shape_cast %21 : vector<1x4x4xf32> to vector<4x4xf32>
    %cst_22 = arith.constant dense<0.000000e+00> : vector<4x288xf32>
    %23 = tpu.matmul %22, %20, %cst_22 {dimension_numbers = #tpu.dot_dimension_numbers<[1], [0], [0], [1], [0, 0, 1, 1], [], []>} : vector<4x4xf32>, vector<4x288xf32>, vector<4x288xf32> -> vector<4x288xf32>
    %24 = arith.addf %18, %23 : vector<4x288xf32>
    %c0_23 = arith.constant 0 : index
    %c0_24 = arith.constant 0 : index
    %c19 = arith.constant 19 : index
    %25 = vector.load %arg1[%c0_23, %c0_24, %c19] : memref<1x4x326xf32, #tpu.memory_space<vmem>>, vector<1x4x288xf32>
    %26 = vector.shape_cast %25 : vector<1x4x288xf32> to vector<4x288xf32>
    %c4 = arith.constant 4 : index
    %c0_25 = arith.constant 0 : index
    %c0_26 = arith.constant 0 : index
    %27 = vector.load %arg2[%c4, %c0_25, %c0_26] : memref<9x4x4xf32, #tpu.memory_space<vmem>>, vector<1x4x4xf32>
    %28 = vector.shape_cast %27 : vector<1x4x4xf32> to vector<4x4xf32>
    %cst_27 = arith.constant dense<0.000000e+00> : vector<4x288xf32>
    %29 = tpu.matmul %28, %26, %cst_27 {dimension_numbers = #tpu.dot_dimension_numbers<[1], [0], [0], [1], [0, 0, 1, 1], [], []>} : vector<4x4xf32>, vector<4x288xf32>, vector<4x288xf32> -> vector<4x288xf32>
    %30 = arith.addf %24, %29 : vector<4x288xf32>
    %c0_28 = arith.constant 0 : index
    %c0_29 = arith.constant 0 : index
    %c20 = arith.constant 20 : index
    %31 = vector.load %arg1[%c0_28, %c0_29, %c20] : memref<1x4x326xf32, #tpu.memory_space<vmem>>, vector<1x4x288xf32>
    %32 = vector.shape_cast %31 : vector<1x4x288xf32> to vector<4x288xf32>
    %c5 = arith.constant 5 : index
    %c0_30 = arith.constant 0 : index
    %c0_31 = arith.constant 0 : index
    %33 = vector.load %arg2[%c5, %c0_30, %c0_31] : memref<9x4x4xf32, #tpu.memory_space<vmem>>, vector<1x4x4xf32>
    %34 = vector.shape_cast %33 : vector<1x4x4xf32> to vector<4x4xf32>
    %cst_32 = arith.constant dense<0.000000e+00> : vector<4x288xf32>
    %35 = tpu.matmul %34, %32, %cst_32 {dimension_numbers = #tpu.dot_dimension_numbers<[1], [0], [0], [1], [0, 0, 1, 1], [], []>} : vector<4x4xf32>, vector<4x288xf32>, vector<4x288xf32> -> vector<4x288xf32>
    %36 = arith.addf %30, %35 : vector<4x288xf32>
    %c0_33 = arith.constant 0 : index
    %c0_34 = arith.constant 0 : index
    %c36 = arith.constant 36 : index
    %37 = vector.load %arg1[%c0_33, %c0_34, %c36] : memref<1x4x326xf32, #tpu.memory_space<vmem>>, vector<1x4x288xf32>
    %38 = vector.shape_cast %37 : vector<1x4x288xf32> to vector<4x288xf32>
    %c6 = arith.constant 6 : index
    %c0_35 = arith.constant 0 : index
    %c0_36 = arith.constant 0 : index
    %39 = vector.load %arg2[%c6, %c0_35, %c0_36] : memref<9x4x4xf32, #tpu.memory_space<vmem>>, vector<1x4x4xf32>
    %40 = vector.shape_cast %39 : vector<1x4x4xf32> to vector<4x4xf32>
    %cst_37 = arith.constant dense<0.000000e+00> : vector<4x288xf32>
    %41 = tpu.matmul %40, %38, %cst_37 {dimension_numbers = #tpu.dot_dimension_numbers<[1], [0], [0], [1], [0, 0, 1, 1], [], []>} : vector<4x4xf32>, vector<4x288xf32>, vector<4x288xf32> -> vector<4x288xf32>
    %42 = arith.addf %36, %41 : vector<4x288xf32>
    %c0_38 = arith.constant 0 : index
    %c0_39 = arith.constant 0 : index
    %c37 = arith.constant 37 : index
    %43 = vector.load %arg1[%c0_38, %c0_39, %c37] : memref<1x4x326xf32, #tpu.memory_space<vmem>>, vector<1x4x288xf32>
    %44 = vector.shape_cast %43 : vector<1x4x288xf32> to vector<4x288xf32>
    %c7 = arith.constant 7 : index
    %c0_40 = arith.constant 0 : index
    %c0_41 = arith.constant 0 : index
    %45 = vector.load %arg2[%c7, %c0_40, %c0_41] : memref<9x4x4xf32, #tpu.memory_space<vmem>>, vector<1x4x4xf32>
    %46 = vector.shape_cast %45 : vector<1x4x4xf32> to vector<4x4xf32>
    %cst_42 = arith.constant dense<0.000000e+00> : vector<4x288xf32>
    %47 = tpu.matmul %46, %44, %cst_42 {dimension_numbers = #tpu.dot_dimension_numbers<[1], [0], [0], [1], [0, 0, 1, 1], [], []>} : vector<4x4xf32>, vector<4x288xf32>, vector<4x288xf32> -> vector<4x288xf32>
    %48 = arith.addf %42, %47 : vector<4x288xf32>
    %c0_43 = arith.constant 0 : index
    %c0_44 = arith.constant 0 : index
    %c38 = arith.constant 38 : index
    %49 = vector.load %arg1[%c0_43, %c0_44, %c38] : memref<1x4x326xf32, #tpu.memory_space<vmem>>, vector<1x4x288xf32>
    %50 = vector.shape_cast %49 : vector<1x4x288xf32> to vector<4x288xf32>
    %c8 = arith.constant 8 : index
    %c0_45 = arith.constant 0 : index
    %c0_46 = arith.constant 0 : index
    %51 = vector.load %arg2[%c8, %c0_45, %c0_46] : memref<9x4x4xf32, #tpu.memory_space<vmem>>, vector<1x4x4xf32>
    %52 = vector.shape_cast %51 : vector<1x4x4xf32> to vector<4x4xf32>
    %cst_47 = arith.constant dense<0.000000e+00> : vector<4x288xf32>
    %53 = tpu.matmul %52, %50, %cst_47 {dimension_numbers = #tpu.dot_dimension_numbers<[1], [0], [0], [1], [0, 0, 1, 1], [], []>} : vector<4x4xf32>, vector<4x288xf32>, vector<4x288xf32> -> vector<4x288xf32>
    %54 = arith.addf %48, %53 : vector<4x288xf32>
    %c0_48 = arith.constant 0 : index
    %c0_49 = arith.constant 0 : index
    %55 = vector.load %arg3[%c0_48, %c0_49] : memref<4x1xf32, #tpu.memory_space<vmem>>, vector<4x1xf32>
    %56 = vector.broadcast %55 : vector<4x1xf32> to vector<4x288xf32>
    %57 = arith.addf %54, %56 : vector<4x288xf32>
    %cst_50 = arith.constant 0.000000e+00 : f32
    %58 = vector.broadcast %cst_50 : f32 to vector<4x288xf32>
    %59 = arith.cmpf oge, %57, %58 : vector<4x288xf32>
    %cst_51 = arith.constant 0.00999999977 : f32
    %60 = vector.broadcast %cst_51 : f32 to vector<4x288xf32>
    %61 = arith.mulf %60, %57 : vector<4x288xf32>
    %62 = arith.select %59, %57, %61 : vector<4x288xi1>, vector<4x288xf32>
    %c0_52 = arith.constant 0 : index
    %c0_53 = arith.constant 0 : index
    %63 = vector.load %arg4[%c0_52, %c0_53] : memref<4x1xf32, #tpu.memory_space<vmem>>, vector<4x1xf32>
    %64 = vector.broadcast %63 : vector<4x1xf32> to vector<4x288xf32>
    %65 = arith.mulf %62, %64 : vector<4x288xf32>
    %c0_54 = arith.constant 0 : index
    %c0_55 = arith.constant 0 : index
    %66 = vector.load %arg5[%c0_54, %c0_55] : memref<4x1xf32, #tpu.memory_space<vmem>>, vector<4x1xf32>
    %67 = vector.broadcast %66 : vector<4x1xf32> to vector<4x288xf32>
    %68 = arith.addf %65, %67 : vector<4x288xf32>
    %c0_56 = arith.constant 0 : index
    %c0_57 = arith.constant 0 : index
    %c0_58 = arith.constant 0 : index
    %69 = vector.load %arg6[%c0_56, %c0_57, %c0_58] : memref<1x4x288xf32, #tpu.memory_space<vmem>>, vector<1x4x288xf32>
    %70 = vector.shape_cast %69 : vector<1x4x288xf32> to vector<4x288xf32>
    %71 = arith.addf %68, %70 : vector<4x288xf32>
    %cst_59 = arith.constant 0.000000e+00 : f32
    %72 = vector.broadcast %cst_59 : f32 to vector<4x288xf32>
    %73 = arith.maximumf %71, %72 : vector<4x288xf32>
    %c0_60 = arith.constant 0 : index
    %c0_61 = arith.constant 0 : index
    %c0_62 = arith.constant 0 : index
    %74 = vector.load %arg7[%c0_60, %c0_61, %c0_62] : memref<1x4x288xf32, #tpu.memory_space<vmem>>, vector<1x4x288xf32>
    %75 = vector.shape_cast %74 : vector<1x4x288xf32> to vector<4x288xf32>
    %76 = vector.shape_cast %73 : vector<4x288xf32> to vector<1x4x288xf32>
    tpu.vector_store %arg7[%c0_60, %c0_61, %c0_62], %76 {strides = array<i32>} : memref<1x4x288xf32, #tpu.memory_space<vmem>>, vector<1x4x288xf32>,
    return
  }
  func.func @transform_0(%arg0: i32) -> (i32, i32, i32) {
    %c0_i32 = arith.constant 0 : i32
    %c0_i32_0 = arith.constant 0 : i32
    %c0_i32_1 = arith.constant 0 : i32
    return %arg0, %c0_i32, %c0_i32_0 : i32, i32, i32
  }
  func.func @transform_1(%arg0: i32) -> (i32, i32, i32) {
    %c0_i32 = arith.constant 0 : i32
    %c0_i32_0 = arith.constant 0 : i32
    %c0_i32_1 = arith.constant 0 : i32
    %c0_i32_2 = arith.constant 0 : i32
    return %c0_i32, %c0_i32_0, %c0_i32_1 : i32, i32, i32
  }
  func.func @transform_2(%arg0: i32) -> (i32, i32) {
    %c0_i32 = arith.constant 0 : i32
    %c0_i32_0 = arith.constant 0 : i32
    %c0_i32_1 = arith.constant 0 : i32
    return %c0_i32, %c0_i32_0 : i32, i32
  }
  func.func @transform_3(%arg0: i32) -> (i32, i32) {
    %c0_i32 = arith.constant 0 : i32
    %c0_i32_0 = arith.constant 0 : i32
    %c0_i32_1 = arith.constant 0 : i32
    return %c0_i32, %c0_i32_0 : i32, i32
  }
  func.func @transform_4(%arg0: i32) -> (i32, i32) {
    %c0_i32 = arith.constant 0 : i32
    %c0_i32_0 = arith.constant 0 : i32
    %c0_i32_1 = arith.constant 0 : i32
    return %c0_i32, %c0_i32_0 : i32, i32
  }
  func.func @transform_5(%arg0: i32) -> (i32, i32, i32) {
    %c0_i32 = arith.constant 0 : i32
    %c0_i32_0 = arith.constant 0 : i32
    %c0_i32_1 = arith.constant 0 : i32
    return %arg0, %c0_i32, %c0_i32_0 : i32, i32, i32
  }
  func.func @transform_6(%arg0: i32) -> (i32, i32, i32) {
    %c0_i32 = arith.constant 0 : i32
    %c0_i32_0 = arith.constant 0 : i32
    %c0_i32_1 = arith.constant 0 : i32
    return %arg0, %c0_i32, %c0_i32_0 : i32, i32, i32
  }
}

</mosaic_0001>

<llo_original>
// kernel: residual_block.2
$region0: #{residual_block.2}
  #allocation0 [shape = 'u32[]', space=smem, size = 0x4, offset = 0x4, fixed_abs, tag = 'smem constant byte address 0x4 - core index']
  #allocation1 [shape = 'u32[144,128]{1,0:T(1,128)}', space=vmem, size = 0x12000, scoped, tag = 'internal scratch']
  %s0 = inlined_call_operand.vmem [shape: f32[2,4,326], index: 0, kind: input, shape index: {}]
  %s1 = inlined_call_operand.vmem [shape: f32[9,4,4], index: 1, kind: input, shape index: {}]
  %s2 = inlined_call_operand.vmem [shape: f32[4,1], index: 2, kind: input, shape index: {}]
  %s3 = inlined_call_operand.vmem [shape: f32[4,1], index: 3, kind: input, shape index: {}]
  %s4 = inlined_call_operand.vmem [shape: f32[4,1], index: 4, kind: input, shape index: {}]
  %s5 = inlined_call_operand.vmem [shape: f32[2,4,288], index: 5, kind: output, shape index: {}]
  %s6 = sld [smem:[#allocation0]]
  $region53: #{residual_block.2} parent=0
    _
  %s8 = ssub.s32 1, %s6
  %s9 = scalar_select 0, %s8, %s6
  loop: start=0, step=1, limit=4
  $region2: #{residual_block.2} parent=0 // loop_pre_header
    _
  $region3: #{residual_block.2} parent=0 // loop_header
    %s11 = sphi 0, %s15
    %p12 = scmp.ge.s32.totalorder %s11, 4
    %s21 = sphi 0, %s23
    %s24 = sphi 0, %s21
    %s25 = sphi 0, %s24
    %s41 = sphi 0, %s25
    %s45 = sphi 0, %s45
    %s47 = sphi 0, %s45
    %s48 = sphi 0, %s47
    %s62 = sphi 0, %s48
    %s66 = sphi 0, %s66
    %s68 = sphi 0, %s66
    %s69 = sphi 0, %s68
    %s83 = sphi 0, %s69
    %s87 = sphi 0, %s87
    %s89 = sphi 0, %s87
    %s90 = sphi 0, %s89
    %s104 = sphi 0, %s90
    %s108 = sphi 0, %s108
    %s110 = sphi 0, %s108
    %s111 = sphi 0, %s110
    %s125 = sphi 0, %s111
    %s131 = sphi 0, %s133
    %s134 = sphi 0, %s131
    %s135 = sphi 0, %s134
    %s151 = sphi 0, %s135
  $region4: #{residual_block.2} parent=0 // loop_header_branch
    %14 = sbr.rel (%p12) target = $region8
  $region5: #{residual_block.2} parent=0 // loop_body
    %s16 = ssub.s32 %s11, 1
    %s17 = ssub.s32 %s11, 2
    %s18 = sadd.s32 %s11, 1
    %s19 = ssub.s32 %s11, %s18
    %p20 = scmp.eq.s32.totalorder %s19, 0
    %s22 = sadd.s32 %s21, 1
    %s23 = scalar_select %p20, %s21, %s22
    %p26 = pneg %p20
    %p27 = scmp.eq.s32.totalorder %s11, 1
    %p28 = por %p26, %p27
    %p29 = scmp.ne.s32.totalorder %s21, %s24
    %p30 = scmp.eq.s32.totalorder %s11, 0
    %p31 = por %p29, %p30
    %p32 = scmp.ne.s32.totalorder %s21, %s24
    %p33 = scmp.eq.s32.totalorder %s16, 1
    %p34 = por %p32, %p33
    %p35 = scmp.ne.s32.totalorder %s24, %s25
    %p36 = scmp.eq.s32.totalorder %s16, 0
    %p37 = por %p35, %p36
    %p38 = scmp.ne.s32.totalorder %s24, %s25
    %p39 = scmp.eq.s32.totalorder %s17, 1
    %p40 = por %p38, %p39
    %p42 = scmp.ne.s32.totalorder %s25, %s41
    %p43 = scmp.eq.s32.totalorder %s17, 0
    %p44 = por %p42, %p43
    %s46 = sadd.s32 %s45, 1
    %p49 = scmp.eq.s32.totalorder %s11, 1
    %p50 = scmp.ne.s32.totalorder %s45, %s47
    %p51 = scmp.eq.s32.totalorder %s11, 0
    %p52 = por %p50, %p51
    %p53 = scmp.ne.s32.totalorder %s45, %s47
    %p54 = scmp.eq.s32.totalorder %s16, 1
    %p55 = por %p53, %p54
    %p56 = scmp.ne.s32.totalorder %s47, %s48
    %p57 = scmp.eq.s32.totalorder %s16, 0
    %p58 = por %p56, %p57
    %p59 = scmp.ne.s32.totalorder %s47, %s48
    %p60 = scmp.eq.s32.totalorder %s17, 1
    %p61 = por %p59, %p60
    %p63 = scmp.ne.s32.totalorder %s48, %s62
    %p64 = scmp.eq.s32.totalorder %s17, 0
    %p65 = por %p63, %p64
    %s67 = sadd.s32 %s66, 1
    %p70 = scmp.eq.s32.totalorder %s11, 1
    %p71 = scmp.ne.s32.totalorder %s66, %s68
    %p72 = scmp.eq.s32.totalorder %s11, 0
    %p73 = por %p71, %p72
    %p74 = scmp.ne.s32.totalorder %s66, %s68
    %p75 = scmp.eq.s32.totalorder %s16, 1
    %p76 = por %p74, %p75
    %p77 = scmp.ne.s32.totalorder %s68, %s69
    %p78 = scmp.eq.s32.totalorder %s16, 0
    %p79 = por %p77, %p78
    %p80 = scmp.ne.s32.totalorder %s68, %s69
    %p81 = scmp.eq.s32.totalorder %s17, 1
    %p82 = por %p80, %p81
    %p84 = scmp.ne.s32.totalorder %s69, %s83
    %p85 = scmp.eq.s32.totalorder %s17, 0
    %p86 = por %p84, %p85
    %s88 = sadd.s32 %s87, 1
    %p91 = scmp.eq.s32.totalorder %s11, 1
    %p92 = scmp.ne.s32.totalorder %s87, %s89
    %p93 = scmp.eq.s32.totalorder %s11, 0
    %p94 = por %p92, %p93
    %p95 = scmp.ne.s32.totalorder %s87, %s89
    %p96 = scmp.eq.s32.totalorder %s16, 1
    %p97 = por %p95, %p96
    %p98 = scmp.ne.s32.totalorder %s89, %s90
    %p99 = scmp.eq.s32.totalorder %s16, 0
    %p100 = por %p98, %p99
    %p101 = scmp.ne.s32.totalorder %s89, %s90
    %p102 = scmp.eq.s32.totalorder %s17, 1
    %p103 = por %p101, %p102
    %p105 = scmp.ne.s32.totalorder %s90, %s104
    %p106 = scmp.eq.s32.totalorder %s17, 0
    %p107 = por %p105, %p106
    %s109 = sadd.s32 %s108, 1
    %p112 = scmp.eq.s32.totalorder %s11, 1
    %p113 = scmp.ne.s32.totalorder %s108, %s110
    %p114 = scmp.eq.s32.totalorder %s11, 0
    %p115 = por %p113, %p114
    %p116 = scmp.ne.s32.totalorder %s108, %s110
    %p117 = scmp.eq.s32.totalorder %s16, 1
    %p118 = por %p116, %p117
    %p119 = scmp.ne.s32.totalorder %s110, %s111
    %p120 = scmp.eq.s32.totalorder %s16, 0
    %p121 = por %p119, %p120
    %p122 = scmp.ne.s32.totalorder %s110, %s111
    %p123 = scmp.eq.s32.totalorder %s17, 1
    %p124 = por %p122, %p123
    %p126 = scmp.ne.s32.totalorder %s111, %s125
    %p127 = scmp.eq.s32.totalorder %s17, 0
    %p128 = por %p126, %p127
    %s129 = ssub.s32 %s11, %s18
    %p130 = scmp.eq.s32.totalorder %s129, 0
    %s132 = sadd.s32 %s131, 1
    %s133 = scalar_select %p130, %s131, %s132
    %p136 = pneg %p130
    %p137 = scmp.eq.s32.totalorder %s11, 1
    %p138 = por %p136, %p137
    %p139 = scmp.ne.s32.totalorder %s131, %s134
    %p140 = scmp.eq.s32.totalorder %s11, 0
    %p141 = por %p139, %p140
    %p142 = scmp.ne.s32.totalorder %s131, %s134
    %p143 = scmp.eq.s32.totalorder %s16, 1
    %p144 = por %p142, %p143
    %p145 = scmp.ne.s32.totalorder %s134, %s135
    %p146 = scmp.eq.s32.totalorder %s16, 0
    %p147 = por %p145, %p146
    %p148 = scmp.ne.s32.totalorder %s134, %s135
    %p149 = scmp.eq.s32.totalorder %s17, 1
    %p150 = por %p148, %p149
    %p152 = scmp.ne.s32.totalorder %s135, %s151
    %p153 = scmp.eq.s32.totalorder %s17, 0
    %p154 = por %p152, %p153
    %p155 = scmp.le.s32.totalorder 1, %s11
    %p156 = scmp.lt.s32.totalorder %s11, 3
    %p157 = pnand %p155, %p156
    %p158 = pneg %p157
    // Predicated region
    $region9: #{residual_block.2} parent=5 // pred_check
      _
    $region10: #{residual_block.2} parent=5 // pred_check_branch
      %160 = sbr.rel (%p157) target = $region12
    $region11: #{residual_block.2} parent=5 // pred_region
      %s161 = ssub.s32 %s11, 1
      // Predicated region
      $region13: #{residual_block.2} parent=11 // pred_check
        %p162 = pneg %p58
      $region14: #{residual_block.2} parent=11 // pred_check_branch
        %164 = sbr.rel (%p162) target = $region16
      $region15: #{residual_block.2} parent=11 // pred_region
        _
      $region16: #{residual_block.2} parent=11 // pred_fallthru
        _
      // Predicated region
      $region17: #{residual_block.2} parent=11 // pred_check
        %p165 = pneg %p79
      $region18: #{residual_block.2} parent=11 // pred_check_branch
        %167 = sbr.rel (%p165) target = $region20
      $region19: #{residual_block.2} parent=11 // pred_region
        _
      $region20: #{residual_block.2} parent=11 // pred_fallthru
        _
      // Predicated region
      $region21: #{residual_block.2} parent=11 // pred_check
        %p168 = pneg %p100
      $region22: #{residual_block.2} parent=11 // pred_check_branch
        %170 = sbr.rel (%p168) target = $region24
      $region23: #{residual_block.2} parent=11 // pred_region
        _
      $region24: #{residual_block.2} parent=11 // pred_fallthru
        _
      // Predicated region
      $region25: #{residual_block.2} parent=11 // pred_check
        %p171 = pneg %p121
      $region26: #{residual_block.2} parent=11 // pred_check_branch
        %173 = sbr.rel (%p171) target = $region28
      $region27: #{residual_block.2} parent=11 // pred_region
        _
      $region28: #{residual_block.2} parent=11 // pred_fallthru
        _
    $region12: #{residual_block.2} parent=5 // pred_fallthru
      _
    %p174 = scmp.lt.s32.totalorder %s11, 2
    // Predicated region
    $region29: #{residual_block.2} parent=5 // pred_check
      %p175 = pneg %p174
    $region30: #{residual_block.2} parent=5 // pred_check_branch
      %177 = sbr.rel (%p175) target = $region32
    $region31: #{residual_block.2} parent=5 // pred_region
      // Predicated region
      $region33: #{residual_block.2} parent=31 // pred_check
        %p178 = pneg %p31
      $region34: #{residual_block.2} parent=31 // pred_check_branch
        %180 = sbr.rel (%p178) target = $region36
      $region35: #{residual_block.2} parent=31 // pred_region
        %p181 = scmp.lt.s32.totalorder %s11, 1
        %s182 = scalar_select %p181, %s11, 1
        %s183 = smul.addr %s182, 3
        %s184 = smul.addr %s183, 4
        %s185 = scalar_lea.vmem %s0, %s184
      $region36: #{residual_block.2} parent=31 // pred_fallthru
        _
    $region32: #{residual_block.2} parent=5 // pred_fallthru
      _
    %p186 = scmp.le.s32.totalorder 1, %s11
    %p187 = scmp.lt.s32.totalorder %s11, 3
    %p188 = pnand %p186, %p187
    %p189 = pneg %p188
    // Predicated region
    $region37: #{residual_block.2} parent=5 // pred_check
      _
    $region38: #{residual_block.2} parent=5 // pred_check_branch
      %191 = sbr.rel (%p188) target = $region40
    $region39: #{residual_block.2} parent=5 // pred_region
      %s192 = ssub.s32 %s11, 1
      %p193 = scmp.lt.s32.totalorder %s16, 1
      %s194 = scalar_select %p193, %s16, 1
      %s195 = smul.addr %s194, 3
      %s196 = smul.addr %s195, 4
      %s197 = scalar_lea.vmem %s0, %s196
      %p198 = pneg %p37
      %p199 = pneg %p34
      %p200 = pneg %p58
      %p201 = pneg %p55
      %p202 = pneg %p79
      %p203 = pneg %p76
      %p204 = pneg %p100
      %p205 = pneg %p97
      %p206 = pneg %p121
      %p207 = pneg %p118
      %p208 = pneg %p147
      %p209 = pneg %p144
      %p210 = scmp.lt.s32.totalorder %s16, 1
      %s211 = scalar_select %p210, %s16, 1
      %s212 = smul.addr %s211, 3
      %s213 = smul.addr %s212, 4
      %s214 = scalar_lea.vmem %s5, %s213
      %p215 = scmp.lt.s32.totalorder %s16, 1
      %s216 = scalar_select %p215, %s16, 1
      %s217 = smul.addr %s216, 3
      %s218 = smul.addr %s217, 4
      %s219 = scalar_lea.vmem %s0, %s218
      %p220 = scmp.lt.s32.totalorder %s16, 1
      %s221 = scalar_select %p220, %s16, 1
      %s222 = smul.addr %s221, 3
      %s223 = smul.addr %s222, 4
      %s224 = scalar_lea.vmem %s5, %s223
      %v225 = vld [vmem:[%s219] sm:$0xff]
      %v226 = vld [vmem:[%s219 + $0x8] sm:$0xf]
      %v227 = vld [vmem:[%s1] sm:$0xf]
      %s228 = scalar_lea.vmem %s1, 4
      %v229 = vld [vmem:[%s228] sm:$0xf]
      %v232 = vcombine.high %v225, %v225
      %233 = vrot.lane.b32.xlu0 %v225, 127
      %v234 = vpop.permute.xlu0 %233
      %235 = vrot.lane.b32.xlu0 %v232, 127
      %v236 = vpop.permute.xlu0 %235
      %237 = vrot.lane.b32.xlu0 %v226, 127
      %v238 = vpop.permute.xlu0 %237
      %vm239 = vcmask 1039360
      %v240 = vsel %vm239, %v234, %v236
      %v241 = vsel %vm239, %v236, %v238
      %vm242 = vcmask 31744
      %v244 = vsel %vm242, %v229, 0
      %vm246 = vcmask 1043456
      %v247 = vsel %vm246, %v240, 0
      %v249 = vsel %vm246, %v241, 0
      %v251 = vsel %vm246, %v238, 0
      %253 = vmatprep.subr.mxu0 %v249
      %254 = vmatpush1.msra.mxu0 %v247
      %255 = vmatprep.subr.mxu0 0.0
      %256 = vmatpush1.msra.mxu0 0.0
      %257 = vmatprep.subr.mxu0 0.0
      %258 = vmatpush1.msra.mxu0 0.0
      %259 = vmatprep.subr.mxu0 0.0
      %260 = vmatpush1.msra.mxu0 0.0
      %261 = vmatprep.subr.mxu0 0.0
      %262 = vmatpush1.msra.mxu0 0.0
      %263 = vmatprep.subr.mxu0 0.0
      %264 = vmatpush1.msra.mxu0 0.0
      %265 = vmatprep.subr.mxu0 0.0
      %266 = vmatpush1.msra.mxu0 0.0
      %267 = vmatprep.subr.mxu0 0.0
      %268 = vmatpush1.msra.mxu0 0.0
      %269 = vmatprep.subr.mxu0 0.0
      %270 = vmatpush1.msra.mxu0 0.0
      %271 = vmatprep.subr.mxu0 0.0
      %272 = vmatpush1.msra.mxu0 0.0
      %273 = vmatprep.subr.mxu0 0.0
      %274 = vmatpush1.msra.mxu0 0.0
      %275 = vmatprep.subr.mxu0 0.0
      %276 = vmatpush1.msra.mxu0 0.0
      %277 = vmatprep.subr.mxu0 0.0
      %278 = vmatpush1.msra.mxu0 0.0
      %279 = vmatprep.subr.mxu0 0.0
      %280 = vmatpush1.msra.mxu0 0.0
      %281 = vmatprep.subr.mxu0 0.0
      %282 = vmatpush1.msra.mxu0 0.0
      %283 = vmatprep.subr.mxu0 0.0
      %284 = vmatpush1.msra.mxu0 0.0
      %285 = vmatprep.subr.mxu0 0.0
      %286 = vmatpush1.msra.mxu0 0.0
      %287 = vmatprep.subr.mxu0 0.0
      %288 = vmatpush1.msra.mxu0 0.0
      %289 = vmatprep.subr.mxu0 0.0
      %290 = vmatpush1.msra.mxu0 0.0
      %291 = vmatprep.subr.mxu0 0.0
      %292 = vmatpush1.msra.mxu0 0.0
      %293 = vmatprep.subr.mxu0 0.0
      %294 = vmatpush1.msra.mxu0 0.0
      %295 = vmatprep.subr.mxu0 0.0
      %296 = vmatpush1.msra.mxu0 0.0
      %297 = vmatprep.subr.mxu0 0.0
      %298 = vmatpush1.msra.mxu0 0.0
      %299 = vmatprep.subr.mxu0 0.0
      %300 = vmatpush1.msra.mxu0 0.0
      %301 = vmatprep.subr.mxu0 0.0
      %302 = vmatpush1.msra.mxu0 0.0
      %303 = vmatprep.subr.mxu0 0.0
      %304 = vmatpush1.msra.mxu0 0.0
      %305 = vmatprep.subr.mxu0 0.0
      %306 = vmatpush1.msra.mxu0 0.0
      %307 = vmatprep.subr.mxu0 0.0
      %308 = vmatpush1.msra.mxu0 0.0
      %309 = vmatprep.subr.mxu0 0.0
      %310 = vmatpush1.msra.mxu0 0.0
      %311 = vmatprep.subr.mxu0 0.0
      %312 = vmatpush1.msra.mxu0 0.0
      %313 = vmatprep.subr.mxu0 0.0
      %314 = vmatpush1.msra.mxu0 0.0
      %315 = vmatprep.subr.mxu0 0.0
      %316 = vmatpush1.msra.mxu0 0.0
      %317 = vmatprep.mubr.f32.mxu0 0.0
      %318 = vmatmul.mubr.f32.gmra.mrb[0].mxu0 %v244
      %v319 = vpop.f32.mrb[0].mxu0
      %v320 = vadd.f32 0.0, %v319
      %v321 = vpop.f32.mrb[0].mxu0
      %v322 = vadd.f32 0.0, %v321
      %323 = vdwg.mxu0
      %324 = vmatprep.subr.mxu0 0.0
      %325 = vmatpush1.msra.mxu0 %v251
      %326 = vmatprep.subr.mxu0 0.0
      %327 = vmatpush1.msra.mxu0 0.0
      %328 = vmatprep.subr.mxu0 0.0
      %329 = vmatpush1.msra.mxu0 0.0
      %330 = vmatprep.subr.mxu0 0.0
      %331 = vmatpush1.msra.mxu0 0.0
      %332 = vmatprep.subr.mxu0 0.0
      %333 = vmatpush1.msra.mxu0 0.0
      %334 = vmatprep.subr.mxu0 0.0
      %335 = vmatpush1.msra.mxu0 0.0
      %336 = vmatprep.subr.mxu0 0.0
      %337 = vmatpush1.msra.mxu0 0.0
      %338 = vmatprep.subr.mxu0 0.0
      %339 = vmatpush1.msra.mxu0 0.0
      %340 = vmatprep.subr.mxu0 0.0
      %341 = vmatpush1.msra.mxu0 0.0
      %342 = vmatprep.subr.mxu0 0.0
      %343 = vmatpush1.msra.mxu0 0.0
      %344 = vmatprep.subr.mxu0 0.0
      %345 = vmatpush1.msra.mxu0 0.0
      %346 = vmatprep.subr.mxu0 0.0
      %347 = vmatpush1.msra.mxu0 0.0
      %348 = vmatprep.subr.mxu0 0.0
      %349 = vmatpush1.msra.mxu0 0.0
      %350 = vmatprep.subr.mxu0 0.0
      %351 = vmatpush1.msra.mxu0 0.0
      %352 = vmatprep.subr.mxu0 0.0
      %353 = vmatpush1.msra.mxu0 0.0
      %354 = vmatprep.subr.mxu0 0.0
      %355 = vmatpush1.msra.mxu0 0.0
      %356 = vmatprep.subr.mxu0 0.0
      %357 = vmatpush1.msra.mxu0 0.0
      %358 = vmatprep.subr.mxu0 0.0
      %359 = vmatpush1.msra.mxu0 0.0
      %360 = vmatprep.subr.mxu0 0.0
      %361 = vmatpush1.msra.mxu0 0.0
      %362 = vmatprep.subr.mxu0 0.0
      %363 = vmatpush1.msra.mxu0 0.0
      %364 = vmatprep.subr.mxu0 0.0
      %365 = vmatpush1.msra.mxu0 0.0
      %366 = vmatprep.subr.mxu0 0.0
      %367 = vmatpush1.msra.mxu0 0.0
      %368 = vmatprep.subr.mxu0 0.0
      %369 = vmatpush1.msra.mxu0 0.0
      %370 = vmatprep.subr.mxu0 0.0
      %371 = vmatpush1.msra.mxu0 0.0
      %372 = vmatprep.subr.mxu0 0.0
      %373 = vmatpush1.msra.mxu0 0.0
      %374 = vmatprep.subr.mxu0 0.0
      %375 = vmatpush1.msra.mxu0 0.0
      %376 = vmatprep.subr.mxu0 0.0
      %377 = vmatpush1.msra.mxu0 0.0
      %378 = vmatprep.subr.mxu0 0.0
      %379 = vmatpush1.msra.mxu0 0.0
      %380 = vmatprep.subr.mxu0 0.0
      %381 = vmatpush1.msra.mxu0 0.0
      %382 = vmatprep.subr.mxu0 0.0
      %383 = vmatpush1.msra.mxu0 0.0
      %384 = vmatprep.subr.mxu0 0.0
      %385 = vmatpush1.msra.mxu0 0.0
      %386 = vmatprep.subr.mxu0 0.0
      %387 = vmatpush1.msra.mxu0 0.0
      %388 = vmatprep.mubr.f32.mxu0 0.0
      %389 = vmatmul.mubr.f32.gmra.mrb[0].mxu0 %v244
      %v390 = vpop.f32.mrb[0].mxu0
      %v391 = vadd.f32 0.0, %v390
      %v392 = vpop.f32.mrb[0].mxu0
      %393 = vdwg.mxu0
      %v395 = vsel %vm242, %v227, 0
      %v397 = vsel %vm246, %v225, 0
      %v399 = vsel %vm246, %v232, 0
      %v401 = vsel %vm246, %v226, 0
      %403 = vmatprep.subr.mxu0 %v399
      %404 = vmatpush1.msra.mxu0 %v397
      %405 = vmatprep.subr.mxu0 0.0
      %406 = vmatpush1.msra.mxu0 0.0
      %407 = vmatprep.subr.mxu0 0.0
      %408 = vmatpush1.msra.mxu0 0.0
      %409 = vmatprep.subr.mxu0 0.0
      %410 = vmatpush1.msra.mxu0 0.0
      %411 = vmatprep.subr.mxu0 0.0
      %412 = vmatpush1.msra.mxu0 0.0
      %413 = vmatprep.subr.mxu0 0.0
      %414 = vmatpush1.msra.mxu0 0.0
      %415 = vmatprep.subr.mxu0 0.0
      %416 = vmatpush1.msra.mxu0 0.0
      %417 = vmatprep.subr.mxu0 0.0
      %418 = vmatpush1.msra.mxu0 0.0
      %419 = vmatprep.subr.mxu0 0.0
      %420 = vmatpush1.msra.mxu0 0.0
      %421 = vmatprep.subr.mxu0 0.0
      %422 = vmatpush1.msra.mxu0 0.0
      %423 = vmatprep.subr.mxu0 0.0
      %424 = vmatpush1.msra.mxu0 0.0
      %425 = vmatprep.subr.mxu0 0.0
      %426 = vmatpush1.msra.mxu0 0.0
      %427 = vmatprep.subr.mxu0 0.0
      %428 = vmatpush1.msra.mxu0 0.0
      %429 = vmatprep.subr.mxu0 0.0
      %430 = vmatpush1.msra.mxu0 0.0
      %431 = vmatprep.subr.mxu0 0.0
      %432 = vmatpush1.msra.mxu0 0.0
      %433 = vmatprep.subr.mxu0 0.0
      %434 = vmatpush1.msra.mxu0 0.0
      %435 = vmatprep.subr.mxu0 0.0
      %436 = vmatpush1.msra.mxu0 0.0
      %437 = vmatprep.subr.mxu0 0.0
      %438 = vmatpush1.msra.mxu0 0.0
      %439 = vmatprep.subr.mxu0 0.0
      %440 = vmatpush1.msra.mxu0 0.0
      %441 = vmatprep.subr.mxu0 0.0
      %442 = vmatpush1.msra.mxu0 0.0
      %443 = vmatprep.subr.mxu0 0.0
      %444 = vmatpush1.msra.mxu0 0.0
      %445 = vmatprep.subr.mxu0 0.0
      %446 = vmatpush1.msra.mxu0 0.0
      %447 = vmatprep.subr.mxu0 0.0
      %448 = vmatpush1.msra.mxu0 0.0
      %449 = vmatprep.subr.mxu0 0.0
      %450 = vmatpush1.msra.mxu0 0.0
      %451 = vmatprep.subr.mxu0 0.0
      %452 = vmatpush1.msra.mxu0 0.0
      %453 = vmatprep.subr.mxu0 0.0
      %454 = vmatpush1.msra.mxu0 0.0
      %455 = vmatprep.subr.mxu0 0.0
      %456 = vmatpush1.msra.mxu0 0.0
      %457 = vmatprep.subr.mxu0 0.0
      %458 = vmatpush1.msra.mxu0 0.0
      %459 = vmatprep.subr.mxu0 0.0
      %460 = vmatpush1.msra.mxu0 0.0
      %461 = vmatprep.subr.mxu0 0.0
      %462 = vmatpush1.msra.mxu0 0.0
      %463 = vmatprep.subr.mxu0 0.0
      %464 = vmatpush1.msra.mxu0 0.0
      %465 = vmatprep.subr.mxu0 0.0
      %466 = vmatpush1.msra.mxu0 0.0
      %467 = vmatprep.mubr.f32.mxu0 0.0
      %468 = vmatmul.mubr.f32.gmra.mrb[0].mxu0 %v395
      %v469 = vpop.f32.mrb[0].mxu0
      %v470 = vadd.f32 %v320, %v469
      %v471 = vpop.f32.mrb[0].mxu0
      %v472 = vadd.f32 %v322, %v471
      %473 = vdwg.mxu0
      %474 = vmatprep.subr.mxu0 0.0
      %475 = vmatpush1.msra.mxu0 %v401
      %476 = vmatprep.subr.mxu0 0.0
      %477 = vmatpush1.msra.mxu0 0.0
      %478 = vmatprep.subr.mxu0 0.0
      %479 = vmatpush1.msra.mxu0 0.0
      %480 = vmatprep.subr.mxu0 0.0
      %481 = vmatpush1.msra.mxu0 0.0
      %482 = vmatprep.subr.mxu0 0.0
      %483 = vmatpush1.msra.mxu0 0.0
      %484 = vmatprep.subr.mxu0 0.0
      %485 = vmatpush1.msra.mxu0 0.0
      %486 = vmatprep.subr.mxu0 0.0
      %487 = vmatpush1.msra.mxu0 0.0
      %488 = vmatprep.subr.mxu0 0.0
      %489 = vmatpush1.msra.mxu0 0.0
      %490 = vmatprep.subr.mxu0 0.0
      %491 = vmatpush1.msra.mxu0 0.0
      %492 = vmatprep.subr.mxu0 0.0
      %493 = vmatpush1.msra.mxu0 0.0
      %494 = vmatprep.subr.mxu0 0.0
      %495 = vmatpush1.msra.mxu0 0.0
      %496 = vmatprep.subr.mxu0 0.0
      %497 = vmatpush1.msra.mxu0 0.0
      %498 = vmatprep.subr.mxu0 0.0
      %499 = vmatpush1.msra.mxu0 0.0
      %500 = vmatprep.subr.mxu0 0.0
      %501 = vmatpush1.msra.mxu0 0.0
      %502 = vmatprep.subr.mxu0 0.0
      %503 = vmatpush1.msra.mxu0 0.0
      %504 = vmatprep.subr.mxu0 0.0
      %505 = vmatpush1.msra.mxu0 0.0
      %506 = vmatprep.subr.mxu0 0.0
      %507 = vmatpush1.msra.mxu0 0.0
      %508 = vmatprep.subr.mxu0 0.0
      %509 = vmatpush1.msra.mxu0 0.0
      %510 = vmatprep.subr.mxu0 0.0
      %511 = vmatpush1.msra.mxu0 0.0
      %512 = vmatprep.subr.mxu0 0.0
      %513 = vmatpush1.msra.mxu0 0.0
      %514 = vmatprep.subr.mxu0 0.0
      %515 = vmatpush1.msra.mxu0 0.0
      %516 = vmatprep.subr.mxu0 0.0
      %517 = vmatpush1.msra.mxu0 0.0
      %518 = vmatprep.subr.mxu0 0.0
      %519 = vmatpush1.msra.mxu0 0.0
      %520 = vmatprep.subr.mxu0 0.0
      %521 = vmatpush1.msra.mxu0 0.0
      %522 = vmatprep.subr.mxu0 0.0
      %523 = vmatpush1.msra.mxu0 0.0
      %524 = vmatprep.subr.mxu0 0.0
      %525 = vmatpush1.msra.mxu0 0.0
      %526 = vmatprep.subr.mxu0 0.0
      %527 = vmatpush1.msra.mxu0 0.0
      %528 = vmatprep.subr.mxu0 0.0
      %529 = vmatpush1.msra.mxu0 0.0
      %530 = vmatprep.subr.mxu0 0.0
      %531 = vmatpush1.msra.mxu0 0.0
      %532 = vmatprep.subr.mxu0 0.0
      %533 = vmatpush1.msra.mxu0 0.0
      %534 = vmatprep.subr.mxu0 0.0
      %535 = vmatpush1.msra.mxu0 0.0
      %536 = vmatprep.subr.mxu0 0.0
      %537 = vmatpush1.msra.mxu0 0.0
      %538 = vmatprep.mubr.f32.mxu0 0.0
      %539 = vmatmul.mubr.f32.gmra.mrb[0].mxu0 %v395
      %v540 = vpop.f32.mrb[0].mxu0
      %v541 = vadd.f32 %v391, %v540
      %v542 = vpop.f32.mrb[0].mxu0
      %543 = vdwg.mxu0
      %v544 = vld [vmem:[%s219] sm:$0xff]
      %v545 = vld [vmem:[%s219 + $0x8] sm:$0xf]
      %s546 = scalar_lea.vmem %s1, 8
      %v547 = vld [vmem:[%s546] sm:$0xf]
      %v550 = vcombine.high %v544, %v544
      %551 = vrot.lane.b32.xlu0 %v544, 126
      %v552 = vpop.permute.xlu0 %551
      %553 = vrot.lane.b32.xlu0 %v550, 126
      %v554 = vpop.permute.xlu0 %553
      %555 = vrot.lane.b32.xlu0 %v545, 126
      %v556 = vpop.permute.xlu0 %555
      %vm557 = vcmask 1031168
      %v558 = vsel %vm557, %v552, %v554
      %v559 = vsel %vm557, %v554, %v556
      %v561 = vsel %vm242, %v547, 0
      %v563 = vsel %vm246, %v558, 0
      %v565 = vsel %vm246, %v559, 0
      %v567 = vsel %vm246, %v556, 0
      %569 = vmatprep.subr.mxu0 %v565
      %570 = vmatpush1.msra.mxu0 %v563
      %571 = vmatprep.subr.mxu0 0.0
      %572 = vmatpush1.msra.mxu0 0.0
      %573 = vmatprep.subr.mxu0 0.0
      %574 = vmatpush1.msra.mxu0 0.0
      %575 = vmatprep.subr.mxu0 0.0
      %576 = vmatpush1.msra.mxu0 0.0
      %577 = vmatprep.subr.mxu0 0.0
      %578 = vmatpush1.msra.mxu0 0.0
      %579 = vmatprep.subr.mxu0 0.0
      %580 = vmatpush1.msra.mxu0 0.0
      %581 = vmatprep.subr.mxu0 0.0
      %582 = vmatpush1.msra.mxu0 0.0
      %583 = vmatprep.subr.mxu0 0.0
      %584 = vmatpush1.msra.mxu0 0.0
      %585 = vmatprep.subr.mxu0 0.0
      %586 = vmatpush1.msra.mxu0 0.0
      %587 = vmatprep.subr.mxu0 0.0
      %588 = vmatpush1.msra.mxu0 0.0
      %589 = vmatprep.subr.mxu0 0.0
      %590 = vmatpush1.msra.mxu0 0.0
      %591 = vmatprep.subr.mxu0 0.0
      %592 = vmatpush1.msra.mxu0 0.0
      %593 = vmatprep.subr.mxu0 0.0
      %594 = vmatpush1.msra.mxu0 0.0
      %595 = vmatprep.subr.mxu0 0.0
      %596 = vmatpush1.msra.mxu0 0.0
      %597 = vmatprep.subr.mxu0 0.0
      %598 = vmatpush1.msra.mxu0 0.0
      %599 = vmatprep.subr.mxu0 0.0
      %600 = vmatpush1.msra.mxu0 0.0
      %601 = vmatprep.subr.mxu0 0.0
      %602 = vmatpush1.msra.mxu0 0.0
      %603 = vmatprep.subr.mxu0 0.0
      %604 = vmatpush1.msra.mxu0 0.0
      %605 = vmatprep.subr.mxu0 0.0
      %606 = vmatpush1.msra.mxu0 0.0
      %607 = vmatprep.subr.mxu0 0.0
      %608 = vmatpush1.msra.mxu0 0.0
      %609 = vmatprep.subr.mxu0 0.0
      %610 = vmatpush1.msra.mxu0 0.0
      %611 = vmatprep.subr.mxu0 0.0
      %612 = vmatpush1.msra.mxu0 0.0
      %613 = vmatprep.subr.mxu0 0.0
      %614 = vmatpush1.msra.mxu0 0.0
      %615 = vmatprep.subr.mxu0 0.0
      %616 = vmatpush1.msra.mxu0 0.0
      %617 = vmatprep.subr.mxu0 0.0
      %618 = vmatpush1.msra.mxu0 0.0
      %619 = vmatprep.subr.mxu0 0.0
      %620 = vmatpush1.msra.mxu0 0.0
      %621 = vmatprep.subr.mxu0 0.0
      %622 = vmatpush1.msra.mxu0 0.0
      %623 = vmatprep.subr.mxu0 0.0
      %624 = vmatpush1.msra.mxu0 0.0
      %625 = vmatprep.subr.mxu0 0.0
      %626 = vmatpush1.msra.mxu0 0.0
      %627 = vmatprep.subr.mxu0 0.0
      %628 = vmatpush1.msra.mxu0 0.0
      %629 = vmatprep.subr.mxu0 0.0
      %630 = vmatpush1.msra.mxu0 0.0
      %631 = vmatprep.subr.mxu0 0.0
      %632 = vmatpush1.msra.mxu0 0.0
      %633 = vmatprep.mubr.f32.mxu0 0.0
      %634 = vmatmul.mubr.f32.gmra.mrb[0].mxu0 %v561
      %v635 = vpop.f32.mrb[0].mxu0
      %v636 = vadd.f32 0.0, %v635
      %v637 = vpop.f32.mrb[0].mxu0
      %v638 = vadd.f32 0.0, %v637
      %639 = vdwg.mxu0
      %640 = vmatprep.subr.mxu0 0.0
      %641 = vmatpush1.msra.mxu0 %v567
      %642 = vmatprep.subr.mxu0 0.0
      %643 = vmatpush1.msra.mxu0 0.0
      %644 = vmatprep.subr.mxu0 0.0
      %645 = vmatpush1.msra.mxu0 0.0
      %646 = vmatprep.subr.mxu0 0.0
      %647 = vmatpush1.msra.mxu0 0.0
      %648 = vmatprep.subr.mxu0 0.0
      %649 = vmatpush1.msra.mxu0 0.0
      %650 = vmatprep.subr.mxu0 0.0
      %651 = vmatpush1.msra.mxu0 0.0
      %652 = vmatprep.subr.mxu0 0.0
      %653 = vmatpush1.msra.mxu0 0.0
      %654 = vmatprep.subr.mxu0 0.0
      %655 = vmatpush1.msra.mxu0 0.0
      %656 = vmatprep.subr.mxu0 0.0
      %657 = vmatpush1.msra.mxu0 0.0
      %658 = vmatprep.subr.mxu0 0.0
      %659 = vmatpush1.msra.mxu0 0.0
      %660 = vmatprep.subr.mxu0 0.0
      %661 = vmatpush1.msra.mxu0 0.0
      %662 = vmatprep.subr.mxu0 0.0
      %663 = vmatpush1.msra.mxu0 0.0
      %664 = vmatprep.subr.mxu0 0.0
      %665 = vmatpush1.msra.mxu0 0.0
      %666 = vmatprep.subr.mxu0 0.0
      %667 = vmatpush1.msra.mxu0 0.0
      %668 = vmatprep.subr.mxu0 0.0
      %669 = vmatpush1.msra.mxu0 0.0
      %670 = vmatprep.subr.mxu0 0.0
      %671 = vmatpush1.msra.mxu0 0.0
      %672 = vmatprep.subr.mxu0 0.0
      %673 = vmatpush1.msra.mxu0 0.0
      %674 = vmatprep.subr.mxu0 0.0
      %675 = vmatpush1.msra.mxu0 0.0
      %676 = vmatprep.subr.mxu0 0.0
      %677 = vmatpush1.msra.mxu0 0.0
      %678 = vmatprep.subr.mxu0 0.0
      %679 = vmatpush1.msra.mxu0 0.0
      %680 = vmatprep.subr.mxu0 0.0
      %681 = vmatpush1.msra.mxu0 0.0
      %682 = vmatprep.subr.mxu0 0.0
      %683 = vmatpush1.msra.mxu0 0.0
      %684 = vmatprep.subr.mxu0 0.0
      %685 = vmatpush1.msra.mxu0 0.0
      %686 = vmatprep.subr.mxu0 0.0
      %687 = vmatpush1.msra.mxu0 0.0
      %688 = vmatprep.subr.mxu0 0.0
      %689 = vmatpush1.msra.mxu0 0.0
      %690 = vmatprep.subr.mxu0 0.0
      %691 = vmatpush1.msra.mxu0 0.0
      %692 = vmatprep.subr.mxu0 0.0
      %693 = vmatpush1.msra.mxu0 0.0
      %694 = vmatprep.subr.mxu0 0.0
      %695 = vmatpush1.msra.mxu0 0.0
      %696 = vmatprep.subr.mxu0 0.0
      %697 = vmatpush1.msra.mxu0 0.0
      %698 = vmatprep.subr.mxu0 0.0
      %699 = vmatpush1.msra.mxu0 0.0
      %700 = vmatprep.subr.mxu0 0.0
      %701 = vmatpush1.msra.mxu0 0.0
      %702 = vmatprep.subr.mxu0 0.0
      %703 = vmatpush1.msra.mxu0 0.0
      %704 = vmatprep.mubr.f32.mxu0 0.0
      %705 = vmatmul.mubr.f32.gmra.mrb[0].mxu0 %v561
      %v706 = vpop.f32.mrb[0].mxu0
      %v707 = vadd.f32 0.0, %v706
      %v708 = vpop.f32.mrb[0].mxu0
      %709 = vdwg.mxu0
      %v710 = vadd.f32 %v470, %v636
      %v711 = vadd.f32 %v472, %v638
      %v712 = vadd.f32 %v541, %v707
      %v713 = vld [vmem:[%s219] sm:$0xff]
      %v714 = vld [vmem:[%s219 + $0x8] sm:$0xf]
      %s715 = scalar_lea.vmem %s1, 12
      %v716 = vld [vmem:[%s715] sm:$0xf]
      %v719 = vcombine.high %v713, %v713
      %720 = vrot.lane.b32.xlu0 %v713, 110
      %v721 = vpop.permute.xlu0 %720
      %722 = vrot.lane.b32.xlu0 %v719, 110
      %v723 = vpop.permute.xlu0 %722
      %724 = vrot.lane.b32.xlu0 %v714, 110
      %v725 = vpop.permute.xlu0 %724
      %vm726 = vcmask 900096
      %v727 = vsel %vm726, %v721, %v723
      %v728 = vsel %vm726, %v723, %v725
      %v730 = vsel %vm242, %v716, 0
      %v732 = vsel %vm246, %v727, 0
      %v734 = vsel %vm246, %v728, 0
      %v736 = vsel %vm246, %v725, 0
      %738 = vmatprep.subr.mxu0 %v734
      %739 = vmatpush1.msra.mxu0 %v732
      %740 = vmatprep.subr.mxu0 0.0
      %741 = vmatpush1.msra.mxu0 0.0
      %742 = vmatprep.subr.mxu0 0.0
      %743 = vmatpush1.msra.mxu0 0.0
      %744 = vmatprep.subr.mxu0 0.0
      %745 = vmatpush1.msra.mxu0 0.0
      %746 = vmatprep.subr.mxu0 0.0
      %747 = vmatpush1.msra.mxu0 0.0
      %748 = vmatprep.subr.mxu0 0.0
      %749 = vmatpush1.msra.mxu0 0.0
      %750 = vmatprep.subr.mxu0 0.0
      %751 = vmatpush1.msra.mxu0 0.0
      %752 = vmatprep.subr.mxu0 0.0
      %753 = vmatpush1.msra.mxu0 0.0
      %754 = vmatprep.subr.mxu0 0.0
      %755 = vmatpush1.msra.mxu0 0.0
      %756 = vmatprep.subr.mxu0 0.0
      %757 = vmatpush1.msra.mxu0 0.0
      %758 = vmatprep.subr.mxu0 0.0
      %759 = vmatpush1.msra.mxu0 0.0
      %760 = vmatprep.subr.mxu0 0.0
      %761 = vmatpush1.msra.mxu0 0.0
      %762 = vmatprep.subr.mxu0 0.0
      %763 = vmatpush1.msra.mxu0 0.0
      %764 = vmatprep.subr.mxu0 0.0
      %765 = vmatpush1.msra.mxu0 0.0
      %766 = vmatprep.subr.mxu0 0.0
      %767 = vmatpush1.msra.mxu0 0.0
      %768 = vmatprep.subr.mxu0 0.0
      %769 = vmatpush1.msra.mxu0 0.0
      %770 = vmatprep.subr.mxu0 0.0
      %771 = vmatpush1.msra.mxu0 0.0
      %772 = vmatprep.subr.mxu0 0.0
      %773 = vmatpush1.msra.mxu0 0.0
      %774 = vmatprep.subr.mxu0 0.0
      %775 = vmatpush1.msra.mxu0 0.0
      %776 = vmatprep.subr.mxu0 0.0
      %777 = vmatpush1.msra.mxu0 0.0
      %778 = vmatprep.subr.mxu0 0.0
      %779 = vmatpush1.msra.mxu0 0.0
      %780 = vmatprep.subr.mxu0 0.0
      %781 = vmatpush1.msra.mxu0 0.0
      %782 = vmatprep.subr.mxu0 0.0
      %783 = vmatpush1.msra.mxu0 0.0
      %784 = vmatprep.subr.mxu0 0.0
      %785 = vmatpush1.msra.mxu0 0.0
      %786 = vmatprep.subr.mxu0 0.0
      %787 = vmatpush1.msra.mxu0 0.0
      %788 = vmatprep.subr.mxu0 0.0
      %789 = vmatpush1.msra.mxu0 0.0
      %790 = vmatprep.subr.mxu0 0.0
      %791 = vmatpush1.msra.mxu0 0.0
      %792 = vmatprep.subr.mxu0 0.0
      %793 = vmatpush1.msra.mxu0 0.0
      %794 = vmatprep.subr.mxu0 0.0
      %795 = vmatpush1.msra.mxu0 0.0
      %796 = vmatprep.subr.mxu0 0.0
      %797 = vmatpush1.msra.mxu0 0.0
      %798 = vmatprep.subr.mxu0 0.0
      %799 = vmatpush1.msra.mxu0 0.0
      %800 = vmatprep.subr.mxu0 0.0
      %801 = vmatpush1.msra.mxu0 0.0
      %802 = vmatprep.mubr.f32.mxu0 0.0
      %803 = vmatmul.mubr.f32.gmra.mrb[0].mxu0 %v730
      %v804 = vpop.f32.mrb[0].mxu0
      %v805 = vadd.f32 0.0, %v804
      %v806 = vpop.f32.mrb[0].mxu0
      %v807 = vadd.f32 0.0, %v806
      %808 = vdwg.mxu0
      %809 = vmatprep.subr.mxu0 0.0
      %810 = vmatpush1.msra.mxu0 %v736
      %811 = vmatprep.subr.mxu0 0.0
      %812 = vmatpush1.msra.mxu0 0.0
      %813 = vmatprep.subr.mxu0 0.0
      %814 = vmatpush1.msra.mxu0 0.0
      %815 = vmatprep.subr.mxu0 0.0
      %816 = vmatpush1.msra.mxu0 0.0
      %817 = vmatprep.subr.mxu0 0.0
      %818 = vmatpush1.msra.mxu0 0.0
      %819 = vmatprep.subr.mxu0 0.0
      %820 = vmatpush1.msra.mxu0 0.0
      %821 = vmatprep.subr.mxu0 0.0
      %822 = vmatpush1.msra.mxu0 0.0
      %823 = vmatprep.subr.mxu0 0.0
      %824 = vmatpush1.msra.mxu0 0.0
      %825 = vmatprep.subr.mxu0 0.0
      %826 = vmatpush1.msra.mxu0 0.0
      %827 = vmatprep.subr.mxu0 0.0
      %828 = vmatpush1.msra.mxu0 0.0
      %829 = vmatprep.subr.mxu0 0.0
      %830 = vmatpush1.msra.mxu0 0.0
      %831 = vmatprep.subr.mxu0 0.0
      %832 = vmatpush1.msra.mxu0 0.0
      %833 = vmatprep.subr.mxu0 0.0
      %834 = vmatpush1.msra.mxu0 0.0
      %835 = vmatprep.subr.mxu0 0.0
      %836 = vmatpush1.msra.mxu0 0.0
      %837 = vmatprep.subr.mxu0 0.0
      %838 = vmatpush1.msra.mxu0 0.0
      %839 = vmatprep.subr.mxu0 0.0
      %840 = vmatpush1.msra.mxu0 0.0
      %841 = vmatprep.subr.mxu0 0.0
      %842 = vmatpush1.msra.mxu0 0.0
      %843 = vmatprep.subr.mxu0 0.0
      %844 = vmatpush1.msra.mxu0 0.0
      %845 = vmatprep.subr.mxu0 0.0
      %846 = vmatpush1.msra.mxu0 0.0
      %847 = vmatprep.subr.mxu0 0.0
      %848 = vmatpush1.msra.mxu0 0.0
      %849 = vmatprep.subr.mxu0 0.0
      %850 = vmatpush1.msra.mxu0 0.0
      %851 = vmatprep.subr.mxu0 0.0
      %852 = vmatpush1.msra.mxu0 0.0
      %853 = vmatprep.subr.mxu0 0.0
      %854 = vmatpush1.msra.mxu0 0.0
      %855 = vmatprep.subr.mxu0 0.0
      %856 = vmatpush1.msra.mxu0 0.0
      %857 = vmatprep.subr.mxu0 0.0
      %858 = vmatpush1.msra.mxu0 0.0
      %859 = vmatprep.subr.mxu0 0.0
      %860 = vmatpush1.msra.mxu0 0.0
      %861 = vmatprep.subr.mxu0 0.0
      %862 = vmatpush1.msra.mxu0 0.0
      %863 = vmatprep.subr.mxu0 0.0
      %864 = vmatpush1.msra.mxu0 0.0
      %865 = vmatprep.subr.mxu0 0.0
      %866 = vmatpush1.msra.mxu0 0.0
      %867 = vmatprep.subr.mxu0 0.0
      %868 = vmatpush1.msra.mxu0 0.0
      %869 = vmatprep.subr.mxu0 0.0
      %870 = vmatpush1.msra.mxu0 0.0
      %871 = vmatprep.subr.mxu0 0.0
      %872 = vmatpush1.msra.mxu0 0.0
      %873 = vmatprep.mubr.f32.mxu0 0.0
      %874 = vmatmul.mubr.f32.gmra.mrb[0].mxu0 %v730
      %v875 = vpop.f32.mrb[0].mxu0
      %v876 = vadd.f32 0.0, %v875
      %v877 = vpop.f32.mrb[0].mxu0
      %878 = vdwg.mxu0
      %v879 = vadd.f32 %v710, %v805
      %v880 = vadd.f32 %v711, %v807
      %v881 = vadd.f32 %v712, %v876
      %v882 = vld [vmem:[%s219] sm:$0xff]
      %v883 = vld [vmem:[%s219 + $0x8] sm:$0xf]
      %s884 = scalar_lea.vmem %s1, 16
      %v885 = vld [vmem:[%s884] sm:$0xf]
      %v888 = vcombine.high %v882, %v882
      %889 = vrot.lane.b32.xlu0 %v882, 109
      %v890 = vpop.permute.xlu0 %889
      %891 = vrot.lane.b32.xlu0 %v888, 109
      %v892 = vpop.permute.xlu0 %891
      %893 = vrot.lane.b32.xlu0 %v883, 109
      %v894 = vpop.permute.xlu0 %893
      %vm895 = vcmask 891904
      %v896 = vsel %vm895, %v890, %v892
      %v897 = vsel %vm895, %v892, %v894
      %v899 = vsel %vm242, %v885, 0
      %v901 = vsel %vm246, %v896, 0
      %v903 = vsel %vm246, %v897, 0
      %v905 = vsel %vm246, %v894, 0
      %907 = vmatprep.subr.mxu0 %v903
      %908 = vmatpush1.msra.mxu0 %v901
      %909 = vmatprep.subr.mxu0 0.0
      %910 = vmatpush1.msra.mxu0 0.0
      %911 = vmatprep.subr.mxu0 0.0
      %912 = vmatpush1.msra.mxu0 0.0
      %913 = vmatprep.subr.mxu0 0.0
      %914 = vmatpush1.msra.mxu0 0.0
      %915 = vmatprep.subr.mxu0 0.0
      %916 = vmatpush1.msra.mxu0 0.0
      %917 = vmatprep.subr.mxu0 0.0
      %918 = vmatpush1.msra.mxu0 0.0
      %919 = vmatprep.subr.mxu0 0.0
      %920 = vmatpush1.msra.mxu0 0.0
      %921 = vmatprep.subr.mxu0 0.0
      %922 = vmatpush1.msra.mxu0 0.0
      %923 = vmatprep.subr.mxu0 0.0
      %924 = vmatpush1.msra.mxu0 0.0
      %925 = vmatprep.subr.mxu0 0.0
      %926 = vmatpush1.msra.mxu0 0.0
      %927 = vmatprep.subr.mxu0 0.0
      %928 = vmatpush1.msra.mxu0 0.0
      %929 = vmatprep.subr.mxu0 0.0
      %930 = vmatpush1.msra.mxu0 0.0
      %931 = vmatprep.subr.mxu0 0.0
      %932 = vmatpush1.msra.mxu0 0.0
      %933 = vmatprep.subr.mxu0 0.0
      %934 = vmatpush1.msra.mxu0 0.0
      %935 = vmatprep.subr.mxu0 0.0
      %936 = vmatpush1.msra.mxu0 0.0
      %937 = vmatprep.subr.mxu0 0.0
      %938 = vmatpush1.msra.mxu0 0.0
      %939 = vmatprep.subr.mxu0 0.0
      %940 = vmatpush1.msra.mxu0 0.0
      %941 = vmatprep.subr.mxu0 0.0
      %942 = vmatpush1.msra.mxu0 0.0
      %943 = vmatprep.subr.mxu0 0.0
      %944 = vmatpush1.msra.mxu0 0.0
      %945 = vmatprep.subr.mxu0 0.0
      %946 = vmatpush1.msra.mxu0 0.0
      %947 = vmatprep.subr.mxu0 0.0
      %948 = vmatpush1.msra.mxu0 0.0
      %949 = vmatprep.subr.mxu0 0.0
      %950 = vmatpush1.msra.mxu0 0.0
      %951 = vmatprep.subr.mxu0 0.0
      %952 = vmatpush1.msra.mxu0 0.0
      %953 = vmatprep.subr.mxu0 0.0
      %954 = vmatpush1.msra.mxu0 0.0
      %955 = vmatprep.subr.mxu0 0.0
      %956 = vmatpush1.msra.mxu0 0.0
      %957 = vmatprep.subr.mxu0 0.0
      %958 = vmatpush1.msra.mxu0 0.0
      %959 = vmatprep.subr.mxu0 0.0
      %960 = vmatpush1.msra.mxu0 0.0
      %961 = vmatprep.subr.mxu0 0.0
      %962 = vmatpush1.msra.mxu0 0.0
      %963 = vmatprep.subr.mxu0 0.0
      %964 = vmatpush1.msra.mxu0 0.0
      %965 = vmatprep.subr.mxu0 0.0
      %966 = vmatpush1.msra.mxu0 0.0
      %967 = vmatprep.subr.mxu0 0.0
      %968 = vmatpush1.msra.mxu0 0.0
      %969 = vmatprep.subr.mxu0 0.0
      %970 = vmatpush1.msra.mxu0 0.0
      %971 = vmatprep.mubr.f32.mxu0 0.0
      %972 = vmatmul.mubr.f32.gmra.mrb[0].mxu0 %v899
      %v973 = vpop.f32.mrb[0].mxu0
      %v974 = vadd.f32 0.0, %v973
      %v975 = vpop.f32.mrb[0].mxu0
      %v976 = vadd.f32 0.0, %v975
      %977 = vdwg.mxu0
      %978 = vmatprep.subr.mxu0 0.0
      %979 = vmatpush1.msra.mxu0 %v905
      %980 = vmatprep.subr.mxu0 0.0
      %981 = vmatpush1.msra.mxu0 0.0
      %982 = vmatprep.subr.mxu0 0.0
      %983 = vmatpush1.msra.mxu0 0.0
      %984 = vmatprep.subr.mxu0 0.0
      %985 = vmatpush1.msra.mxu0 0.0
      %986 = vmatprep.subr.mxu0 0.0
      %987 = vmatpush1.msra.mxu0 0.0
      %988 = vmatprep.subr.mxu0 0.0
      %989 = vmatpush1.msra.mxu0 0.0
      %990 = vmatprep.subr.mxu0 0.0
      %991 = vmatpush1.msra.mxu0 0.0
      %992 = vmatprep.subr.mxu0 0.0
      %993 = vmatpush1.msra.mxu0 0.0
      %994 = vmatprep.subr.mxu0 0.0
      %995 = vmatpush1.msra.mxu0 0.0
      %996 = vmatprep.subr.mxu0 0.0
      %997 = vmatpush1.msra.mxu0 0.0
      %998 = vmatprep.subr.mxu0 0.0
      %999 = vmatpush1.msra.mxu0 0.0
      %1000 = vmatprep.subr.mxu0 0.0
      %1001 = vmatpush1.msra.mxu0 0.0
      %1002 = vmatprep.subr.mxu0 0.0
      %1003 = vmatpush1.msra.mxu0 0.0
      %1004 = vmatprep.subr.mxu0 0.0
      %1005 = vmatpush1.msra.mxu0 0.0
      %1006 = vmatprep.subr.mxu0 0.0
      %1007 = vmatpush1.msra.mxu0 0.0
      %1008 = vmatprep.subr.mxu0 0.0
      %1009 = vmatpush1.msra.mxu0 0.0
      %1010 = vmatprep.subr.mxu0 0.0
      %1011 = vmatpush1.msra.mxu0 0.0
      %1012 = vmatprep.subr.mxu0 0.0
      %1013 = vmatpush1.msra.mxu0 0.0
      %1014 = vmatprep.subr.mxu0 0.0
      %1015 = vmatpush1.msra.mxu0 0.0
      %1016 = vmatprep.subr.mxu0 0.0
      %1017 = vmatpush1.msra.mxu0 0.0
      %1018 = vmatprep.subr.mxu0 0.0
      %1019 = vmatpush1.msra.mxu0 0.0
      %1020 = vmatprep.subr.mxu0 0.0
      %1021 = vmatpush1.msra.mxu0 0.0
      %1022 = vmatprep.subr.mxu0 0.0
      %1023 = vmatpush1.msra.mxu0 0.0
      %1024 = vmatprep.subr.mxu0 0.0
      %1025 = vmatpush1.msra.mxu0 0.0
      %1026 = vmatprep.subr.mxu0 0.0
      %1027 = vmatpush1.msra.mxu0 0.0
      %1028 = vmatprep.subr.mxu0 0.0
      %1029 = vmatpush1.msra.mxu0 0.0
      %1030 = vmatprep.subr.mxu0 0.0
      %1031 = vmatpush1.msra.mxu0 0.0
      %1032 = vmatprep.subr.mxu0 0.0
      %1033 = vmatpush1.msra.mxu0 0.0
      %1034 = vmatprep.subr.mxu0 0.0
      %1035 = vmatpush1.msra.mxu0 0.0
      %1036 = vmatprep.subr.mxu0 0.0
      %1037 = vmatpush1.msra.mxu0 0.0
      %1038 = vmatprep.subr.mxu0 0.0
      %1039 = vmatpush1.msra.mxu0 0.0
      %1040 = vmatprep.subr.mxu0 0.0
      %1041 = vmatpush1.msra.mxu0 0.0
      %1042 = vmatprep.mubr.f32.mxu0 0.0
      %1043 = vmatmul.mubr.f32.gmra.mrb[0].mxu0 %v899
      %v1044 = vpop.f32.mrb[0].mxu0
      %v1045 = vadd.f32 0.0, %v1044
      %v1046 = vpop.f32.mrb[0].mxu0
      %1047 = vdwg.mxu0
      %v1048 = vadd.f32 %v879, %v974
      %v1049 = vadd.f32 %v880, %v976
      %v1050 = vadd.f32 %v881, %v1045
      %v1051 = vld [vmem:[%s219] sm:$0xff]
      %v1052 = vld [vmem:[%s219 + $0x8] sm:$0xf]
      %s1053 = scalar_lea.vmem %s1, 20
      %v1054 = vld [vmem:[%s1053] sm:$0xf]
      %v1057 = vcombine.high %v1051, %v1051
      %1058 = vrot.lane.b32.xlu0 %v1051, 108
      %v1059 = vpop.permute.xlu0 %1058
      %1060 = vrot.lane.b32.xlu0 %v1057, 108
      %v1061 = vpop.permute.xlu0 %1060
      %1062 = vrot.lane.b32.xlu0 %v1052, 108
      %v1063 = vpop.permute.xlu0 %1062
      %vm1064 = vcmask 883712
      %v1065 = vsel %vm1064, %v1059, %v1061
      %v1066 = vsel %vm1064, %v1061, %v1063
      %v1068 = vsel %vm242, %v1054, 0
      %v1070 = vsel %vm246, %v1065, 0
      %v1072 = vsel %vm246, %v1066, 0
      %v1074 = vsel %vm246, %v1063, 0
      %1076 = vmatprep.subr.mxu0 %v1072
      %1077 = vmatpush1.msra.mxu0 %v1070
      %1078 = vmatprep.subr.mxu0 0.0
      %1079 = vmatpush1.msra.mxu0 0.0
      %1080 = vmatprep.subr.mxu0 0.0
      %1081 = vmatpush1.msra.mxu0 0.0
      %1082 = vmatprep.subr.mxu0 0.0
      %1083 = vmatpush1.msra.mxu0 0.0
      %1084 = vmatprep.subr.mxu0 0.0
      %1085 = vmatpush1.msra.mxu0 0.0
      %1086 = vmatprep.subr.mxu0 0.0
      %1087 = vmatpush1.msra.mxu0 0.0
      %1088 = vmatprep.subr.mxu0 0.0
      %1089 = vmatpush1.msra.mxu0 0.0
      %1090 = vmatprep.subr.mxu0 0.0
      %1091 = vmatpush1.msra.mxu0 0.0
      %1092 = vmatprep.subr.mxu0 0.0
      %1093 = vmatpush1.msra.mxu0 0.0
      %1094 = vmatprep.subr.mxu0 0.0
      %1095 = vmatpush1.msra.mxu0 0.0
      %1096 = vmatprep.subr.mxu0 0.0
      %1097 = vmatpush1.msra.mxu0 0.0
      %1098 = vmatprep.subr.mxu0 0.0
      %1099 = vmatpush1.msra.mxu0 0.0
      %1100 = vmatprep.subr.mxu0 0.0
      %1101 = vmatpush1.msra.mxu0 0.0
      %1102 = vmatprep.subr.mxu0 0.0
      %1103 = vmatpush1.msra.mxu0 0.0
      %1104 = vmatprep.subr.mxu0 0.0
      %1105 = vmatpush1.msra.mxu0 0.0
      %1106 = vmatprep.subr.mxu0 0.0
      %1107 = vmatpush1.msra.mxu0 0.0
      %1108 = vmatprep.subr.mxu0 0.0
      %1109 = vmatpush1.msra.mxu0 0.0
      %1110 = vmatprep.subr.mxu0 0.0
      %1111 = vmatpush1.msra.mxu0 0.0
      %1112 = vmatprep.subr.mxu0 0.0
      %1113 = vmatpush1.msra.mxu0 0.0
      %1114 = vmatprep.subr.mxu0 0.0
      %1115 = vmatpush1.msra.mxu0 0.0
      %1116 = vmatprep.subr.mxu0 0.0
      %1117 = vmatpush1.msra.mxu0 0.0
      %1118 = vmatprep.subr.mxu0 0.0
      %1119 = vmatpush1.msra.mxu0 0.0
      %1120 = vmatprep.subr.mxu0 0.0
      %1121 = vmatpush1.msra.mxu0 0.0
      %1122 = vmatprep.subr.mxu0 0.0
      %1123 = vmatpush1.msra.mxu0 0.0
      %1124 = vmatprep.subr.mxu0 0.0
      %1125 = vmatpush1.msra.mxu0 0.0
      %1126 = vmatprep.subr.mxu0 0.0
      %1127 = vmatpush1.msra.mxu0 0.0
      %1128 = vmatprep.subr.mxu0 0.0
      %1129 = vmatpush1.msra.mxu0 0.0
      %1130 = vmatprep.subr.mxu0 0.0
      %1131 = vmatpush1.msra.mxu0 0.0
      %1132 = vmatprep.subr.mxu0 0.0
      %1133 = vmatpush1.msra.mxu0 0.0
      %1134 = vmatprep.subr.mxu0 0.0
      %1135 = vmatpush1.msra.mxu0 0.0
      %1136 = vmatprep.subr.mxu0 0.0
      %1137 = vmatpush1.msra.mxu0 0.0
      %1138 = vmatprep.subr.mxu0 0.0
      %1139 = vmatpush1.msra.mxu0 0.0
      %1140 = vmatprep.mubr.f32.mxu0 0.0
      %1141 = vmatmul.mubr.f32.gmra.mrb[0].mxu0 %v1068
      %v1142 = vpop.f32.mrb[0].mxu0
      %v1143 = vadd.f32 0.0, %v1142
      %v1144 = vpop.f32.mrb[0].mxu0
      %v1145 = vadd.f32 0.0, %v1144
      %1146 = vdwg.mxu0
      %1147 = vmatprep.subr.mxu0 0.0
      %1148 = vmatpush1.msra.mxu0 %v1074
      %1149 = vmatprep.subr.mxu0 0.0
      %1150 = vmatpush1.msra.mxu0 0.0
      %1151 = vmatprep.subr.mxu0 0.0
      %1152 = vmatpush1.msra.mxu0 0.0
      %1153 = vmatprep.subr.mxu0 0.0
      %1154 = vmatpush1.msra.mxu0 0.0
      %1155 = vmatprep.subr.mxu0 0.0
      %1156 = vmatpush1.msra.mxu0 0.0
      %1157 = vmatprep.subr.mxu0 0.0
      %1158 = vmatpush1.msra.mxu0 0.0
      %1159 = vmatprep.subr.mxu0 0.0
      %1160 = vmatpush1.msra.mxu0 0.0
      %1161 = vmatprep.subr.mxu0 0.0
      %1162 = vmatpush1.msra.mxu0 0.0
      %1163 = vmatprep.subr.mxu0 0.0
      %1164 = vmatpush1.msra.mxu0 0.0
      %1165 = vmatprep.subr.mxu0 0.0
      %1166 = vmatpush1.msra.mxu0 0.0
      %1167 = vmatprep.subr.mxu0 0.0
      %1168 = vmatpush1.msra.mxu0 0.0
      %1169 = vmatprep.subr.mxu0 0.0
      %1170 = vmatpush1.msra.mxu0 0.0
      %1171 = vmatprep.subr.mxu0 0.0
      %1172 = vmatpush1.msra.mxu0 0.0
      %1173 = vmatprep.subr.mxu0 0.0
      %1174 = vmatpush1.msra.mxu0 0.0
      %1175 = vmatprep.subr.mxu0 0.0
      %1176 = vmatpush1.msra.mxu0 0.0
      %1177 = vmatprep.subr.mxu0 0.0
      %1178 = vmatpush1.msra.mxu0 0.0
      %1179 = vmatprep.subr.mxu0 0.0
      %1180 = vmatpush1.msra.mxu0 0.0
      %1181 = vmatprep.subr.mxu0 0.0
      %1182 = vmatpush1.msra.mxu0 0.0
      %1183 = vmatprep.subr.mxu0 0.0
      %1184 = vmatpush1.msra.mxu0 0.0
      %1185 = vmatprep.subr.mxu0 0.0
      %1186 = vmatpush1.msra.mxu0 0.0
      %1187 = vmatprep.subr.mxu0 0.0
      %1188 = vmatpush1.msra.mxu0 0.0
      %1189 = vmatprep.subr.mxu0 0.0
      %1190 = vmatpush1.msra.mxu0 0.0
      %1191 = vmatprep.subr.mxu0 0.0
      %1192 = vmatpush1.msra.mxu0 0.0
      %1193 = vmatprep.subr.mxu0 0.0
      %1194 = vmatpush1.msra.mxu0 0.0
      %1195 = vmatprep.subr.mxu0 0.0
      %1196 = vmatpush1.msra.mxu0 0.0
      %1197 = vmatprep.subr.mxu0 0.0
      %1198 = vmatpush1.msra.mxu0 0.0
      %1199 = vmatprep.subr.mxu0 0.0
      %1200 = vmatpush1.msra.mxu0 0.0
      %1201 = vmatprep.subr.mxu0 0.0
      %1202 = vmatpush1.msra.mxu0 0.0
      %1203 = vmatprep.subr.mxu0 0.0
      %1204 = vmatpush1.msra.mxu0 0.0
      %1205 = vmatprep.subr.mxu0 0.0
      %1206 = vmatpush1.msra.mxu0 0.0
      %1207 = vmatprep.subr.mxu0 0.0
      %1208 = vmatpush1.msra.mxu0 0.0
      %1209 = vmatprep.subr.mxu0 0.0
      %1210 = vmatpush1.msra.mxu0 0.0
      %1211 = vmatprep.mubr.f32.mxu0 0.0
      %1212 = vmatmul.mubr.f32.gmra.mrb[0].mxu0 %v1068
      %v1213 = vpop.f32.mrb[0].mxu0
      %v1214 = vadd.f32 0.0, %v1213
      %v1215 = vpop.f32.mrb[0].mxu0
      %1216 = vdwg.mxu0
      %v1217 = vadd.f32 %v1048, %v1143
      %v1218 = vadd.f32 %v1049, %v1145
      %v1219 = vadd.f32 %v1050, %v1214
      %v1220 = vld [vmem:[%s219] sm:$0xff]
      %v1221 = vld [vmem:[%s219 + $0x8] sm:$0xf]
      %s1222 = scalar_lea.vmem %s1, 24
      %v1223 = vld [vmem:[%s1222] sm:$0xf]
      %v1226 = vcombine.high %v1220, %v1220
      %1227 = vrot.lane.b32.xlu0 %v1220, 92
      %v1228 = vpop.permute.xlu0 %1227
      %1229 = vrot.lane.b32.xlu0 %v1226, 92
      %v1230 = vpop.permute.xlu0 %1229
      %1231 = vrot.lane.b32.xlu0 %v1221, 92
      %v1232 = vpop.permute.xlu0 %1231
      %vm1233 = vcmask 752640
      %v1234 = vsel %vm1233, %v1228, %v1230
      %v1235 = vsel %vm1233, %v1230, %v1232
      %v1237 = vsel %vm242, %v1223, 0
      %v1239 = vsel %vm246, %v1234, 0
      %v1241 = vsel %vm246, %v1235, 0
      %v1243 = vsel %vm246, %v1232, 0
      %1245 = vmatprep.subr.mxu0 %v1241
      %1246 = vmatpush1.msra.mxu0 %v1239
      %1247 = vmatprep.subr.mxu0 0.0
      %1248 = vmatpush1.msra.mxu0 0.0
      %1249 = vmatprep.subr.mxu0 0.0
      %1250 = vmatpush1.msra.mxu0 0.0
      %1251 = vmatprep.subr.mxu0 0.0
      %1252 = vmatpush1.msra.mxu0 0.0
      %1253 = vmatprep.subr.mxu0 0.0
      %1254 = vmatpush1.msra.mxu0 0.0
      %1255 = vmatprep.subr.mxu0 0.0
      %1256 = vmatpush1.msra.mxu0 0.0
      %1257 = vmatprep.subr.mxu0 0.0
      %1258 = vmatpush1.msra.mxu0 0.0
      %1259 = vmatprep.subr.mxu0 0.0
      %1260 = vmatpush1.msra.mxu0 0.0
      %1261 = vmatprep.subr.mxu0 0.0
      %1262 = vmatpush1.msra.mxu0 0.0
      %1263 = vmatprep.subr.mxu0 0.0
      %1264 = vmatpush1.msra.mxu0 0.0
      %1265 = vmatprep.subr.mxu0 0.0
      %1266 = vmatpush1.msra.mxu0 0.0
      %1267 = vmatprep.subr.mxu0 0.0
      %1268 = vmatpush1.msra.mxu0 0.0
      %1269 = vmatprep.subr.mxu0 0.0
      %1270 = vmatpush1.msra.mxu0 0.0
      %1271 = vmatprep.subr.mxu0 0.0
      %1272 = vmatpush1.msra.mxu0 0.0
      %1273 = vmatprep.subr.mxu0 0.0
      %1274 = vmatpush1.msra.mxu0 0.0
      %1275 = vmatprep.subr.mxu0 0.0
      %1276 = vmatpush1.msra.mxu0 0.0
      %1277 = vmatprep.subr.mxu0 0.0
      %1278 = vmatpush1.msra.mxu0 0.0
      %1279 = vmatprep.subr.mxu0 0.0
      %1280 = vmatpush1.msra.mxu0 0.0
      %1281 = vmatprep.subr.mxu0 0.0
      %1282 = vmatpush1.msra.mxu0 0.0
      %1283 = vmatprep.subr.mxu0 0.0
      %1284 = vmatpush1.msra.mxu0 0.0
      %1285 = vmatprep.subr.mxu0 0.0
      %1286 = vmatpush1.msra.mxu0 0.0
      %1287 = vmatprep.subr.mxu0 0.0
      %1288 = vmatpush1.msra.mxu0 0.0
      %1289 = vmatprep.subr.mxu0 0.0
      %1290 = vmatpush1.msra.mxu0 0.0
      %1291 = vmatprep.subr.mxu0 0.0
      %1292 = vmatpush1.msra.mxu0 0.0
      %1293 = vmatprep.subr.mxu0 0.0
      %1294 = vmatpush1.msra.mxu0 0.0
      %1295 = vmatprep.subr.mxu0 0.0
      %1296 = vmatpush1.msra.mxu0 0.0
      %1297 = vmatprep.subr.mxu0 0.0
      %1298 = vmatpush1.msra.mxu0 0.0
      %1299 = vmatprep.subr.mxu0 0.0
      %1300 = vmatpush1.msra.mxu0 0.0
      %1301 = vmatprep.subr.mxu0 0.0
      %1302 = vmatpush1.msra.mxu0 0.0
      %1303 = vmatprep.subr.mxu0 0.0
      %1304 = vmatpush1.msra.mxu0 0.0
      %1305 = vmatprep.subr.mxu0 0.0
      %1306 = vmatpush1.msra.mxu0 0.0
      %1307 = vmatprep.subr.mxu0 0.0
      %1308 = vmatpush1.msra.mxu0 0.0
      %1309 = vmatprep.mubr.f32.mxu0 0.0
      %1310 = vmatmul.mubr.f32.gmra.mrb[0].mxu0 %v1237
      %v1311 = vpop.f32.mrb[0].mxu0
      %v1312 = vadd.f32 0.0, %v1311
      %v1313 = vpop.f32.mrb[0].mxu0
      %v1314 = vadd.f32 0.0, %v1313
      %1315 = vdwg.mxu0
      %1316 = vmatprep.subr.mxu0 0.0
      %1317 = vmatpush1.msra.mxu0 %v1243
      %1318 = vmatprep.subr.mxu0 0.0
      %1319 = vmatpush1.msra.mxu0 0.0
      %1320 = vmatprep.subr.mxu0 0.0
      %1321 = vmatpush1.msra.mxu0 0.0
      %1322 = vmatprep.subr.mxu0 0.0
      %1323 = vmatpush1.msra.mxu0 0.0
      %1324 = vmatprep.subr.mxu0 0.0
      %1325 = vmatpush1.msra.mxu0 0.0
      %1326 = vmatprep.subr.mxu0 0.0
      %1327 = vmatpush1.msra.mxu0 0.0
      %1328 = vmatprep.subr.mxu0 0.0
      %1329 = vmatpush1.msra.mxu0 0.0
      %1330 = vmatprep.subr.mxu0 0.0
      %1331 = vmatpush1.msra.mxu0 0.0
      %1332 = vmatprep.subr.mxu0 0.0
      %1333 = vmatpush1.msra.mxu0 0.0
      %1334 = vmatprep.subr.mxu0 0.0
      %1335 = vmatpush1.msra.mxu0 0.0
      %1336 = vmatprep.subr.mxu0 0.0
      %1337 = vmatpush1.msra.mxu0 0.0
      %1338 = vmatprep.subr.mxu0 0.0
      %1339 = vmatpush1.msra.mxu0 0.0
      %1340 = vmatprep.subr.mxu0 0.0
      %1341 = vmatpush1.msra.mxu0 0.0
      %1342 = vmatprep.subr.mxu0 0.0
      %1343 = vmatpush1.msra.mxu0 0.0
      %1344 = vmatprep.subr.mxu0 0.0
      %1345 = vmatpush1.msra.mxu0 0.0
      %1346 = vmatprep.subr.mxu0 0.0
      %1347 = vmatpush1.msra.mxu0 0.0
      %1348 = vmatprep.subr.mxu0 0.0
      %1349 = vmatpush1.msra.mxu0 0.0
      %1350 = vmatprep.subr.mxu0 0.0
      %1351 = vmatpush1.msra.mxu0 0.0
      %1352 = vmatprep.subr.mxu0 0.0
      %1353 = vmatpush1.msra.mxu0 0.0
      %1354 = vmatprep.subr.mxu0 0.0
      %1355 = vmatpush1.msra.mxu0 0.0
      %1356 = vmatprep.subr.mxu0 0.0
      %1357 = vmatpush1.msra.mxu0 0.0
      %1358 = vmatprep.subr.mxu0 0.0
      %1359 = vmatpush1.msra.mxu0 0.0
      %1360 = vmatprep.subr.mxu0 0.0
      %1361 = vmatpush1.msra.mxu0 0.0
      %1362 = vmatprep.subr.mxu0 0.0
      %1363 = vmatpush1.msra.mxu0 0.0
      %1364 = vmatprep.subr.mxu0 0.0
      %1365 = vmatpush1.msra.mxu0 0.0
      %1366 = vmatprep.subr.mxu0 0.0
      %1367 = vmatpush1.msra.mxu0 0.0
      %1368 = vmatprep.subr.mxu0 0.0
      %1369 = vmatpush1.msra.mxu0 0.0
      %1370 = vmatprep.subr.mxu0 0.0
      %1371 = vmatpush1.msra.mxu0 0.0
      %1372 = vmatprep.subr.mxu0 0.0
      %1373 = vmatpush1.msra.mxu0 0.0
      %1374 = vmatprep.subr.mxu0 0.0
      %1375 = vmatpush1.msra.mxu0 0.0
      %1376 = vmatprep.subr.mxu0 0.0
      %1377 = vmatpush1.msra.mxu0 0.0
      %1378 = vmatprep.subr.mxu0 0.0
      %1379 = vmatpush1.msra.mxu0 0.0
      %1380 = vmatprep.mubr.f32.mxu0 0.0
      %1381 = vmatmul.mubr.f32.gmra.mrb[0].mxu0 %v1237
      %v1382 = vpop.f32.mrb[0].mxu0
      %v1383 = vadd.f32 0.0, %v1382
      %v1384 = vpop.f32.mrb[0].mxu0
      %1385 = vdwg.mxu0
      %v1386 = vadd.f32 %v1217, %v1312
      %v1387 = vadd.f32 %v1218, %v1314
      %v1388 = vadd.f32 %v1219, %v1383
      %v1389 = vld [vmem:[%s219] sm:$0xff]
      %v1390 = vld [vmem:[%s219 + $0x8] sm:$0xf]
      %s1391 = scalar_lea.vmem %s1, 28
      %v1392 = vld [vmem:[%s1391] sm:$0xf]
      %v1395 = vcombine.high %v1389, %v1389
      %1396 = vrot.lane.b32.xlu0 %v1389, 91
      %v1397 = vpop.permute.xlu0 %1396
      %1398 = vrot.lane.b32.xlu0 %v1395, 91
      %v1399 = vpop.permute.xlu0 %1398
      %1400 = vrot.lane.b32.xlu0 %v1390, 91
      %v1401 = vpop.permute.xlu0 %1400
      %vm1402 = vcmask 744448
      %v1403 = vsel %vm1402, %v1397, %v1399
      %v1404 = vsel %vm1402, %v1399, %v1401
      %v1406 = vsel %vm242, %v1392, 0
      %v1408 = vsel %vm246, %v1403, 0
      %v1410 = vsel %vm246, %v1404, 0
      %v1412 = vsel %vm246, %v1401, 0
      %1414 = vmatprep.subr.mxu0 %v1410
      %1415 = vmatpush1.msra.mxu0 %v1408
      %1416 = vmatprep.subr.mxu0 0.0
      %1417 = vmatpush1.msra.mxu0 0.0
      %1418 = vmatprep.subr.mxu0 0.0
      %1419 = vmatpush1.msra.mxu0 0.0
      %1420 = vmatprep.subr.mxu0 0.0
      %1421 = vmatpush1.msra.mxu0 0.0
      %1422 = vmatprep.subr.mxu0 0.0
      %1423 = vmatpush1.msra.mxu0 0.0
      %1424 = vmatprep.subr.mxu0 0.0
      %1425 = vmatpush1.msra.mxu0 0.0
      %1426 = vmatprep.subr.mxu0 0.0
      %1427 = vmatpush1.msra.mxu0 0.0
      %1428 = vmatprep.subr.mxu0 0.0
      %1429 = vmatpush1.msra.mxu0 0.0
      %1430 = vmatprep.subr.mxu0 0.0
      %1431 = vmatpush1.msra.mxu0 0.0
      %1432 = vmatprep.subr.mxu0 0.0
      %1433 = vmatpush1.msra.mxu0 0.0
      %1434 = vmatprep.subr.mxu0 0.0
      %1435 = vmatpush1.msra.mxu0 0.0
      %1436 = vmatprep.subr.mxu0 0.0
      %1437 = vmatpush1.msra.mxu0 0.0
      %1438 = vmatprep.subr.mxu0 0.0
      %1439 = vmatpush1.msra.mxu0 0.0
      %1440 = vmatprep.subr.mxu0 0.0
      %1441 = vmatpush1.msra.mxu0 0.0
      %1442 = vmatprep.subr.mxu0 0.0
      %1443 = vmatpush1.msra.mxu0 0.0
      %1444 = vmatprep.subr.mxu0 0.0
      %1445 = vmatpush1.msra.mxu0 0.0
      %1446 = vmatprep.subr.mxu0 0.0
      %1447 = vmatpush1.msra.mxu0 0.0
      %1448 = vmatprep.subr.mxu0 0.0
      %1449 = vmatpush1.msra.mxu0 0.0
      %1450 = vmatprep.subr.mxu0 0.0
      %1451 = vmatpush1.msra.mxu0 0.0
      %1452 = vmatprep.subr.mxu0 0.0
      %1453 = vmatpush1.msra.mxu0 0.0
      %1454 = vmatprep.subr.mxu0 0.0
      %1455 = vmatpush1.msra.mxu0 0.0
      %1456 = vmatprep.subr.mxu0 0.0
      %1457 = vmatpush1.msra.mxu0 0.0
      %1458 = vmatprep.subr.mxu0 0.0
      %1459 = vmatpush1.msra.mxu0 0.0
      %1460 = vmatprep.subr.mxu0 0.0
      %1461 = vmatpush1.msra.mxu0 0.0
      %1462 = vmatprep.subr.mxu0 0.0
      %1463 = vmatpush1.msra.mxu0 0.0
      %1464 = vmatprep.subr.mxu0 0.0
      %1465 = vmatpush1.msra.mxu0 0.0
      %1466 = vmatprep.subr.mxu0 0.0
      %1467 = vmatpush1.msra.mxu0 0.0
      %1468 = vmatprep.subr.mxu0 0.0
      %1469 = vmatpush1.msra.mxu0 0.0
      %1470 = vmatprep.subr.mxu0 0.0
      %1471 = vmatpush1.msra.mxu0 0.0
      %1472 = vmatprep.subr.mxu0 0.0
      %1473 = vmatpush1.msra.mxu0 0.0
      %1474 = vmatprep.subr.mxu0 0.0
      %1475 = vmatpush1.msra.mxu0 0.0
      %1476 = vmatprep.subr.mxu0 0.0
      %1477 = vmatpush1.msra.mxu0 0.0
      %1478 = vmatprep.mubr.f32.mxu0 0.0
      %1479 = vmatmul.mubr.f32.gmra.mrb[0].mxu0 %v1406
      %v1480 = vpop.f32.mrb[0].mxu0
      %v1481 = vadd.f32 0.0, %v1480
      %v1482 = vpop.f32.mrb[0].mxu0
      %v1483 = vadd.f32 0.0, %v1482
      %1484 = vdwg.mxu0
      %1485 = vmatprep.subr.mxu0 0.0
      %1486 = vmatpush1.msra.mxu0 %v1412
      %1487 = vmatprep.subr.mxu0 0.0
      %1488 = vmatpush1.msra.mxu0 0.0
      %1489 = vmatprep.subr.mxu0 0.0
      %1490 = vmatpush1.msra.mxu0 0.0
      %1491 = vmatprep.subr.mxu0 0.0
      %1492 = vmatpush1.msra.mxu0 0.0
      %1493 = vmatprep.subr.mxu0 0.0
      %1494 = vmatpush1.msra.mxu0 0.0
      %1495 = vmatprep.subr.mxu0 0.0
      %1496 = vmatpush1.msra.mxu0 0.0
      %1497 = vmatprep.subr.mxu0 0.0
      %1498 = vmatpush1.msra.mxu0 0.0
      %1499 = vmatprep.subr.mxu0 0.0
      %1500 = vmatpush1.msra.mxu0 0.0
      %1501 = vmatprep.subr.mxu0 0.0
      %1502 = vmatpush1.msra.mxu0 0.0
      %1503 = vmatprep.subr.mxu0 0.0
      %1504 = vmatpush1.msra.mxu0 0.0
      %1505 = vmatprep.subr.mxu0 0.0
      %1506 = vmatpush1.msra.mxu0 0.0
      %1507 = vmatprep.subr.mxu0 0.0
      %1508 = vmatpush1.msra.mxu0 0.0
      %1509 = vmatprep.subr.mxu0 0.0
      %1510 = vmatpush1.msra.mxu0 0.0
      %1511 = vmatprep.subr.mxu0 0.0
      %1512 = vmatpush1.msra.mxu0 0.0
      %1513 = vmatprep.subr.mxu0 0.0
      %1514 = vmatpush1.msra.mxu0 0.0
      %1515 = vmatprep.subr.mxu0 0.0
      %1516 = vmatpush1.msra.mxu0 0.0
      %1517 = vmatprep.subr.mxu0 0.0
      %1518 = vmatpush1.msra.mxu0 0.0
      %1519 = vmatprep.subr.mxu0 0.0
      %1520 = vmatpush1.msra.mxu0 0.0
      %1521 = vmatprep.subr.mxu0 0.0
      %1522 = vmatpush1.msra.mxu0 0.0
      %1523 = vmatprep.subr.mxu0 0.0
      %1524 = vmatpush1.msra.mxu0 0.0
      %1525 = vmatprep.subr.mxu0 0.0
      %1526 = vmatpush1.msra.mxu0 0.0
      %1527 = vmatprep.subr.mxu0 0.0
      %1528 = vmatpush1.msra.mxu0 0.0
      %1529 = vmatprep.subr.mxu0 0.0
      %1530 = vmatpush1.msra.mxu0 0.0
      %1531 = vmatprep.subr.mxu0 0.0
      %1532 = vmatpush1.msra.mxu0 0.0
      %1533 = vmatprep.subr.mxu0 0.0
      %1534 = vmatpush1.msra.mxu0 0.0
      %1535 = vmatprep.subr.mxu0 0.0
      %1536 = vmatpush1.msra.mxu0 0.0
      %1537 = vmatprep.subr.mxu0 0.0
      %1538 = vmatpush1.msra.mxu0 0.0
      %1539 = vmatprep.subr.mxu0 0.0
      %1540 = vmatpush1.msra.mxu0 0.0
      %1541 = vmatprep.subr.mxu0 0.0
      %1542 = vmatpush1.msra.mxu0 0.0
      %1543 = vmatprep.subr.mxu0 0.0
      %1544 = vmatpush1.msra.mxu0 0.0
      %1545 = vmatprep.subr.mxu0 0.0
      %1546 = vmatpush1.msra.mxu0 0.0
      %1547 = vmatprep.subr.mxu0 0.0
      %1548 = vmatpush1.msra.mxu0 0.0
      %1549 = vmatprep.mubr.f32.mxu0 0.0
      %1550 = vmatmul.mubr.f32.gmra.mrb[0].mxu0 %v1406
      %v1551 = vpop.f32.mrb[0].mxu0
      %v1552 = vadd.f32 0.0, %v1551
      %v1553 = vpop.f32.mrb[0].mxu0
      %1554 = vdwg.mxu0
      %v1555 = vadd.f32 %v1386, %v1481
      %v1556 = vadd.f32 %v1387, %v1483
      %v1557 = vadd.f32 %v1388, %v1552
      %v1558 = vld [vmem:[%s219] sm:$0xff]
      %v1559 = vld [vmem:[%s219 + $0x8] sm:$0xf]
      %s1560 = scalar_lea.vmem %s1, 32
      %v1561 = vld [vmem:[%s1560] sm:$0xf]
      %v1564 = vcombine.high %v1558, %v1558
      %1565 = vrot.lane.b32.xlu0 %v1558, 90
      %v1566 = vpop.permute.xlu0 %1565
      %1567 = vrot.lane.b32.xlu0 %v1564, 90
      %v1568 = vpop.permute.xlu0 %1567
      %1569 = vrot.lane.b32.xlu0 %v1559, 90
      %v1570 = vpop.permute.xlu0 %1569
      %vm1571 = vcmask 736256
      %v1572 = vsel %vm1571, %v1566, %v1568
      %v1573 = vsel %vm1571, %v1568, %v1570
      %v1575 = vsel %vm242, %v1561, 0
      %v1577 = vsel %vm246, %v1572, 0
      %v1579 = vsel %vm246, %v1573, 0
      %v1581 = vsel %vm246, %v1570, 0
      %1583 = vmatprep.subr.mxu0 %v1579
      %1584 = vmatpush1.msra.mxu0 %v1577
      %1585 = vmatprep.subr.mxu0 0.0
      %1586 = vmatpush1.msra.mxu0 0.0
      %1587 = vmatprep.subr.mxu0 0.0
      %1588 = vmatpush1.msra.mxu0 0.0
      %1589 = vmatprep.subr.mxu0 0.0
      %1590 = vmatpush1.msra.mxu0 0.0
      %1591 = vmatprep.subr.mxu0 0.0
      %1592 = vmatpush1.msra.mxu0 0.0
      %1593 = vmatprep.subr.mxu0 0.0
      %1594 = vmatpush1.msra.mxu0 0.0
      %1595 = vmatprep.subr.mxu0 0.0
      %1596 = vmatpush1.msra.mxu0 0.0
      %1597 = vmatprep.subr.mxu0 0.0
      %1598 = vmatpush1.msra.mxu0 0.0
      %1599 = vmatprep.subr.mxu0 0.0
      %1600 = vmatpush1.msra.mxu0 0.0
      %1601 = vmatprep.subr.mxu0 0.0
      %1602 = vmatpush1.msra.mxu0 0.0
      %1603 = vmatprep.subr.mxu0 0.0
      %1604 = vmatpush1.msra.mxu0 0.0
      %1605 = vmatprep.subr.mxu0 0.0
      %1606 = vmatpush1.msra.mxu0 0.0
      %1607 = vmatprep.subr.mxu0 0.0
      %1608 = vmatpush1.msra.mxu0 0.0
      %1609 = vmatprep.subr.mxu0 0.0
      %1610 = vmatpush1.msra.mxu0 0.0
      %1611 = vmatprep.subr.mxu0 0.0
      %1612 = vmatpush1.msra.mxu0 0.0
      %1613 = vmatprep.subr.mxu0 0.0
      %1614 = vmatpush1.msra.mxu0 0.0
      %1615 = vmatprep.subr.mxu0 0.0
      %1616 = vmatpush1.msra.mxu0 0.0
      %1617 = vmatprep.subr.mxu0 0.0
      %1618 = vmatpush1.msra.mxu0 0.0
      %1619 = vmatprep.subr.mxu0 0.0
      %1620 = vmatpush1.msra.mxu0 0.0
      %1621 = vmatprep.subr.mxu0 0.0
      %1622 = vmatpush1.msra.mxu0 0.0
      %1623 = vmatprep.subr.mxu0 0.0
      %1624 = vmatpush1.msra.mxu0 0.0
      %1625 = vmatprep.subr.mxu0 0.0
      %1626 = vmatpush1.msra.mxu0 0.0
      %1627 = vmatprep.subr.mxu0 0.0
      %1628 = vmatpush1.msra.mxu0 0.0
      %1629 = vmatprep.subr.mxu0 0.0
      %1630 = vmatpush1.msra.mxu0 0.0
      %1631 = vmatprep.subr.mxu0 0.0
      %1632 = vmatpush1.msra.mxu0 0.0
      %1633 = vmatprep.subr.mxu0 0.0
      %1634 = vmatpush1.msra.mxu0 0.0
      %1635 = vmatprep.subr.mxu0 0.0
      %1636 = vmatpush1.msra.mxu0 0.0
      %1637 = vmatprep.subr.mxu0 0.0
      %1638 = vmatpush1.msra.mxu0 0.0
      %1639 = vmatprep.subr.mxu0 0.0
      %1640 = vmatpush1.msra.mxu0 0.0
      %1641 = vmatprep.subr.mxu0 0.0
      %1642 = vmatpush1.msra.mxu0 0.0
      %1643 = vmatprep.subr.mxu0 0.0
      %1644 = vmatpush1.msra.mxu0 0.0
      %1645 = vmatprep.subr.mxu0 0.0
      %1646 = vmatpush1.msra.mxu0 0.0
      %1647 = vmatprep.mubr.f32.mxu0 0.0
      %1648 = vmatmul.mubr.f32.gmra.mrb[0].mxu0 %v1575
      %v1649 = vpop.f32.mrb[0].mxu0
      %v1650 = vadd.f32 0.0, %v1649
      %v1651 = vpop.f32.mrb[0].mxu0
      %v1652 = vadd.f32 0.0, %v1651
      %1653 = vdwg.mxu0
      %1654 = vmatprep.subr.mxu0 0.0
      %1655 = vmatpush1.msra.mxu0 %v1581
      %1656 = vmatprep.subr.mxu0 0.0
      %1657 = vmatpush1.msra.mxu0 0.0
      %1658 = vmatprep.subr.mxu0 0.0
      %1659 = vmatpush1.msra.mxu0 0.0
      %1660 = vmatprep.subr.mxu0 0.0
      %1661 = vmatpush1.msra.mxu0 0.0
      %1662 = vmatprep.subr.mxu0 0.0
      %1663 = vmatpush1.msra.mxu0 0.0
      %1664 = vmatprep.subr.mxu0 0.0
      %1665 = vmatpush1.msra.mxu0 0.0
      %1666 = vmatprep.subr.mxu0 0.0
      %1667 = vmatpush1.msra.mxu0 0.0
      %1668 = vmatprep.subr.mxu0 0.0
      %1669 = vmatpush1.msra.mxu0 0.0
      %1670 = vmatprep.subr.mxu0 0.0
      %1671 = vmatpush1.msra.mxu0 0.0
      %1672 = vmatprep.subr.mxu0 0.0
      %1673 = vmatpush1.msra.mxu0 0.0
      %1674 = vmatprep.subr.mxu0 0.0
      %1675 = vmatpush1.msra.mxu0 0.0
      %1676 = vmatprep.subr.mxu0 0.0
      %1677 = vmatpush1.msra.mxu0 0.0
      %1678 = vmatprep.subr.mxu0 0.0
      %1679 = vmatpush1.msra.mxu0 0.0
      %1680 = vmatprep.subr.mxu0 0.0
      %1681 = vmatpush1.msra.mxu0 0.0
      %1682 = vmatprep.subr.mxu0 0.0
      %1683 = vmatpush1.msra.mxu0 0.0
      %1684 = vmatprep.subr.mxu0 0.0
      %1685 = vmatpush1.msra.mxu0 0.0
      %1686 = vmatprep.subr.mxu0 0.0
      %1687 = vmatpush1.msra.mxu0 0.0
      %1688 = vmatprep.subr.mxu0 0.0
      %1689 = vmatpush1.msra.mxu0 0.0
      %1690 = vmatprep.subr.mxu0 0.0
      %1691 = vmatpush1.msra.mxu0 0.0
      %1692 = vmatprep.subr.mxu0 0.0
      %1693 = vmatpush1.msra.mxu0 0.0
      %1694 = vmatprep.subr.mxu0 0.0
      %1695 = vmatpush1.msra.mxu0 0.0
      %1696 = vmatprep.subr.mxu0 0.0
      %1697 = vmatpush1.msra.mxu0 0.0
      %1698 = vmatprep.subr.mxu0 0.0
      %1699 = vmatpush1.msra.mxu0 0.0
      %1700 = vmatprep.subr.mxu0 0.0
      %1701 = vmatpush1.msra.mxu0 0.0
      %1702 = vmatprep.subr.mxu0 0.0
      %1703 = vmatpush1.msra.mxu0 0.0
      %1704 = vmatprep.subr.mxu0 0.0
      %1705 = vmatpush1.msra.mxu0 0.0
      %1706 = vmatprep.subr.mxu0 0.0
      %1707 = vmatpush1.msra.mxu0 0.0
      %1708 = vmatprep.subr.mxu0 0.0
      %1709 = vmatpush1.msra.mxu0 0.0
      %1710 = vmatprep.subr.mxu0 0.0
      %1711 = vmatpush1.msra.mxu0 0.0
      %1712 = vmatprep.subr.mxu0 0.0
      %1713 = vmatpush1.msra.mxu0 0.0
      %1714 = vmatprep.subr.mxu0 0.0
      %1715 = vmatpush1.msra.mxu0 0.0
      %1716 = vmatprep.subr.mxu0 0.0
      %1717 = vmatpush1.msra.mxu0 0.0
      %1718 = vmatprep.mubr.f32.mxu0 0.0
      %1719 = vmatmul.mubr.f32.gmra.mrb[0].mxu0 %v1575
      %v1720 = vpop.f32.mrb[0].mxu0
      %v1721 = vadd.f32 0.0, %v1720
      %v1722 = vpop.f32.mrb[0].mxu0
      %1723 = vdwg.mxu0
      %v1724 = vadd.f32 %v1555, %v1650
      %v1725 = vadd.f32 %v1556, %v1652
      %v1726 = vadd.f32 %v1557, %v1721
      %v1727 = vld [vmem:[%s2] sm:$0xf]
      %1729 = vset.pattern.permute.xlu0 0
      %1730 = vperm.xlu0 %1729, %v1727
      %v1731 = vpop.permute.xlu0 %1730
      %v1733 = vadd.f32 %v1724, %v1731
      %v1734 = vadd.f32 %v1725, %v1731
      %v1735 = vadd.f32 %v1726, %v1731
      %vm1736 = vcmp.ge.f32.partialorder %v1733, 0.0
      %vm1737 = vcmp.ge.f32.partialorder %v1734, 0.0
      %vm1738 = vcmp.ge.f32.partialorder %v1735, 0.0
      %v1739 = vmul.f32 %v1733, 0.01
      %v1740 = vmul.f32 %v1734, 0.01
      %v1741 = vmul.f32 %v1735, 0.01
      %v1742 = vsel %vm1736, %v1733, %v1739
      %v1743 = vsel %vm1737, %v1734, %v1740
      %v1744 = vsel %vm1738, %v1735, %v1741
      %v1745 = vld [vmem:[%s3] sm:$0xf]
      %1747 = vset.pattern.permute.xlu0 0
      %1748 = vperm.xlu0 %1747, %v1745
      %v1749 = vpop.permute.xlu0 %1748
      %v1751 = vmul.f32 %v1742, %v1749
      %v1752 = vmul.f32 %v1743, %v1749
      %v1753 = vmul.f32 %v1744, %v1749
      %v1754 = vld [vmem:[%s4] sm:$0xf]
      %1756 = vset.pattern.permute.xlu0 0
      %1757 = vperm.xlu0 %1756, %v1754
      %v1758 = vpop.permute.xlu0 %1757
      %v1760 = vadd.f32 %v1751, %v1758
      %v1761 = vadd.f32 %v1752, %v1758
      %v1762 = vadd.f32 %v1753, %v1758
      %v1763 = vmax.f32 %v1760, 0.0
      %v1764 = vmax.f32 %v1761, 0.0
      %v1765 = vmax.f32 %v1762, 0.0
      %v1768 = vcombine.low %v1763, %v1764
      %1770 = vst [vmem:[%s224] sm:$0xff] %v1768
      %vm1771 = vcmask 257024
      %1772 = vst.msk [vmem:[%s224 + $0x8] sm:$0xf] %vm1771, %v1765
      %p1773 = scmp.lt.s32.totalorder %s16, 1
      %s1774 = scalar_select %p1773, %s16, 1
      %s1775 = smul.addr %s1774, 3
      %s1776 = smul.addr %s1775, 4
      %s1777 = scalar_lea.vmem %s5, %s1776
      // Predicated region
      $region41: #{residual_block.2} parent=39 // pred_check
        %p1778 = pneg %p144
      $region42: #{residual_block.2} parent=39 // pred_check_branch
        %1780 = sbr.rel (%p1778) target = $region44
      $region43: #{residual_block.2} parent=39 // pred_region
        _
      $region44: #{residual_block.2} parent=39 // pred_fallthru
        _
    $region40: #{residual_block.2} parent=5 // pred_fallthru
      _
    %p1781 = scmp.le.s32.totalorder 2, %s11
    // Predicated region
    $region45: #{residual_block.2} parent=5 // pred_check
      %p1782 = pneg %p1781
    $region46: #{residual_block.2} parent=5 // pred_check_branch
      %1784 = sbr.rel (%p1782) target = $region48
    $region47: #{residual_block.2} parent=5 // pred_region
      %s1785 = ssub.s32 %s11, 2
      // Predicated region
      $region49: #{residual_block.2} parent=47 // pred_check
        %p1786 = pneg %p150
      $region50: #{residual_block.2} parent=47 // pred_check_branch
        %1788 = sbr.rel (%p1786) target = $region52
      $region51: #{residual_block.2} parent=47 // pred_region
        %p1789 = scmp.lt.s32.totalorder %s17, 1
        %s1790 = scalar_select %p1789, %s17, 1
        %s1791 = smul.addr %s1790, 3
        %s1792 = smul.addr %s1791, 4
        %s1793 = scalar_lea.vmem %s5, %s1792
      $region52: #{residual_block.2} parent=47 // pred_fallthru
        _
    $region48: #{residual_block.2} parent=5 // pred_fallthru
      _
  $region6: #{residual_block.2} parent=0 // loop_footer
    %s15 = sadd.s32 1, %s11
  $region7: #{residual_block.2} parent=0 // loop_footer_branch
    %10 = sbr.rel target = $region3
  $region8: #{residual_block.2} parent=0 // loop_exit
    _

// kernel: residual_block.3
$region0: #{residual_block.3}
  #allocation0 [shape = 'u32[]', space=smem, size = 0x4, offset = 0x4, fixed_abs, tag = 'smem constant byte address 0x4 - core index']
  #allocation1 [shape = 'u32[144,128]{1,0:T(1,128)}', space=vmem, size = 0x12000, scoped, tag = 'internal scratch']
  %s0 = inlined_call_operand.vmem [shape: f32[2,4,326], index: 0, kind: input, shape index: {}]
  %s1 = inlined_call_operand.vmem [shape: f32[9,4,4], index: 1, kind: input, shape index: {}]
  %s2 = inlined_call_operand.vmem [shape: f32[4,1], index: 2, kind: input, shape index: {}]
  %s3 = inlined_call_operand.vmem [shape: f32[4,1], index: 3, kind: input, shape index: {}]
  %s4 = inlined_call_operand.vmem [shape: f32[4,1], index: 4, kind: input, shape index: {}]
  %s5 = inlined_call_operand.vmem [shape: f32[2,4,288], index: 5, kind: input, shape index: {}]
  %s6 = inlined_call_operand.vmem [shape: f32[2,4,288], index: 6, kind: output, shape index: {}]
  %s7 = sld [smem:[#allocation0]]
  $region57: #{residual_block.3} parent=0
    _
  %s9 = ssub.s32 1, %s7
  %s10 = scalar_select 0, %s9, %s7
  loop: start=0, step=1, limit=4
  $region2: #{residual_block.3} parent=0 // loop_pre_header
    _
  $region3: #{residual_block.3} parent=0 // loop_header
    %s12 = sphi 0, %s16
    %p13 = scmp.ge.s32.totalorder %s12, 4
    %s22 = sphi 0, %s24
    %s25 = sphi 0, %s22
    %s26 = sphi 0, %s25
    %s42 = sphi 0, %s26
    %s46 = sphi 0, %s46
    %s48 = sphi 0, %s46
    %s49 = sphi 0, %s48
    %s63 = sphi 0, %s49
    %s67 = sphi 0, %s67
    %s69 = sphi 0, %s67
    %s70 = sphi 0, %s69
    %s84 = sphi 0, %s70
    %s88 = sphi 0, %s88
    %s90 = sphi 0, %s88
    %s91 = sphi 0, %s90
    %s105 = sphi 0, %s91
    %s109 = sphi 0, %s109
    %s111 = sphi 0, %s109
    %s112 = sphi 0, %s111
    %s126 = sphi 0, %s112
    %s132 = sphi 0, %s134
    %s135 = sphi 0, %s132
    %s136 = sphi 0, %s135
    %s152 = sphi 0, %s136
    %s158 = sphi 0, %s160
    %s161 = sphi 0, %s158
    %s162 = sphi 0, %s161
    %s178 = sphi 0, %s162
  $region4: #{residual_block.3} parent=0 // loop_header_branch
    %15 = sbr.rel (%p13) target = $region8
  $region5: #{residual_block.3} parent=0 // loop_body
    %s17 = ssub.s32 %s12, 1
    %s18 = ssub.s32 %s12, 2
    %s19 = sadd.s32 %s12, 1
    %s20 = ssub.s32 %s12, %s19
    %p21 = scmp.eq.s32.totalorder %s20, 0
    %s23 = sadd.s32 %s22, 1
    %s24 = scalar_select %p21, %s22, %s23
    %p27 = pneg %p21
    %p28 = scmp.eq.s32.totalorder %s12, 1
    %p29 = por %p27, %p28
    %p30 = scmp.ne.s32.totalorder %s22, %s25
    %p31 = scmp.eq.s32.totalorder %s12, 0
    %p32 = por %p30, %p31
    %p33 = scmp.ne.s32.totalorder %s22, %s25
    %p34 = scmp.eq.s32.totalorder %s17, 1
    %p35 = por %p33, %p34
    %p36 = scmp.ne.s32.totalorder %s25, %s26
    %p37 = scmp.eq.s32.totalorder %s17, 0
    %p38 = por %p36, %p37
    %p39 = scmp.ne.s32.totalorder %s25, %s26
    %p40 = scmp.eq.s32.totalorder %s18, 1
    %p41 = por %p39, %p40
    %p43 = scmp.ne.s32.totalorder %s26, %s42
    %p44 = scmp.eq.s32.totalorder %s18, 0
    %p45 = por %p43, %p44
    %s47 = sadd.s32 %s46, 1
    %p50 = scmp.eq.s32.totalorder %s12, 1
    %p51 = scmp.ne.s32.totalorder %s46, %s48
    %p52 = scmp.eq.s32.totalorder %s12, 0
    %p53 = por %p51, %p52
    %p54 = scmp.ne.s32.totalorder %s46, %s48
    %p55 = scmp.eq.s32.totalorder %s17, 1
    %p56 = por %p54, %p55
    %p57 = scmp.ne.s32.totalorder %s48, %s49
    %p58 = scmp.eq.s32.totalorder %s17, 0
    %p59 = por %p57, %p58
    %p60 = scmp.ne.s32.totalorder %s48, %s49
    %p61 = scmp.eq.s32.totalorder %s18, 1
    %p62 = por %p60, %p61
    %p64 = scmp.ne.s32.totalorder %s49, %s63
    %p65 = scmp.eq.s32.totalorder %s18, 0
    %p66 = por %p64, %p65
    %s68 = sadd.s32 %s67, 1
    %p71 = scmp.eq.s32.totalorder %s12, 1
    %p72 = scmp.ne.s32.totalorder %s67, %s69
    %p73 = scmp.eq.s32.totalorder %s12, 0
    %p74 = por %p72, %p73
    %p75 = scmp.ne.s32.totalorder %s67, %s69
    %p76 = scmp.eq.s32.totalorder %s17, 1
    %p77 = por %p75, %p76
    %p78 = scmp.ne.s32.totalorder %s69, %s70
    %p79 = scmp.eq.s32.totalorder %s17, 0
    %p80 = por %p78, %p79
    %p81 = scmp.ne.s32.totalorder %s69, %s70
    %p82 = scmp.eq.s32.totalorder %s18, 1
    %p83 = por %p81, %p82
    %p85 = scmp.ne.s32.totalorder %s70, %s84
    %p86 = scmp.eq.s32.totalorder %s18, 0
    %p87 = por %p85, %p86
    %s89 = sadd.s32 %s88, 1
    %p92 = scmp.eq.s32.totalorder %s12, 1
    %p93 = scmp.ne.s32.totalorder %s88, %s90
    %p94 = scmp.eq.s32.totalorder %s12, 0
    %p95 = por %p93, %p94
    %p96 = scmp.ne.s32.totalorder %s88, %s90
    %p97 = scmp.eq.s32.totalorder %s17, 1
    %p98 = por %p96, %p97
    %p99 = scmp.ne.s32.totalorder %s90, %s91
    %p100 = scmp.eq.s32.totalorder %s17, 0
    %p101 = por %p99, %p100
    %p102 = scmp.ne.s32.totalorder %s90, %s91
    %p103 = scmp.eq.s32.totalorder %s18, 1
    %p104 = por %p102, %p103
    %p106 = scmp.ne.s32.totalorder %s91, %s105
    %p107 = scmp.eq.s32.totalorder %s18, 0
    %p108 = por %p106, %p107
    %s110 = sadd.s32 %s109, 1
    %p113 = scmp.eq.s32.totalorder %s12, 1
    %p114 = scmp.ne.s32.totalorder %s109, %s111
    %p115 = scmp.eq.s32.totalorder %s12, 0
    %p116 = por %p114, %p115
    %p117 = scmp.ne.s32.totalorder %s109, %s111
    %p118 = scmp.eq.s32.totalorder %s17, 1
    %p119 = por %p117, %p118
    %p120 = scmp.ne.s32.totalorder %s111, %s112
    %p121 = scmp.eq.s32.totalorder %s17, 0
    %p122 = por %p120, %p121
    %p123 = scmp.ne.s32.totalorder %s111, %s112
    %p124 = scmp.eq.s32.totalorder %s18, 1
    %p125 = por %p123, %p124
    %p127 = scmp.ne.s32.totalorder %s112, %s126
    %p128 = scmp.eq.s32.totalorder %s18, 0
    %p129 = por %p127, %p128
    %s130 = ssub.s32 %s12, %s19
    %p131 = scmp.eq.s32.totalorder %s130, 0
    %s133 = sadd.s32 %s132, 1
    %s134 = scalar_select %p131, %s132, %s133
    %p137 = pneg %p131
    %p138 = scmp.eq.s32.totalorder %s12, 1
    %p139 = por %p137, %p138
    %p140 = scmp.ne.s32.totalorder %s132, %s135
    %p141 = scmp.eq.s32.totalorder %s12, 0
    %p142 = por %p140, %p141
    %p143 = scmp.ne.s32.totalorder %s132, %s135
    %p144 = scmp.eq.s32.totalorder %s17, 1
    %p145 = por %p143, %p144
    %p146 = scmp.ne.s32.totalorder %s135, %s136
    %p147 = scmp.eq.s32.totalorder %s17, 0
    %p148 = por %p146, %p147
    %p149 = scmp.ne.s32.totalorder %s135, %s136
    %p150 = scmp.eq.s32.totalorder %s18, 1
    %p151 = por %p149, %p150
    %p153 = scmp.ne.s32.totalorder %s136, %s152
    %p154 = scmp.eq.s32.totalorder %s18, 0
    %p155 = por %p153, %p154
    %s156 = ssub.s32 %s12, %s19
    %p157 = scmp.eq.s32.totalorder %s156, 0
    %s159 = sadd.s32 %s158, 1
    %s160 = scalar_select %p157, %s158, %s159
    %p163 = pneg %p157
    %p164 = scmp.eq.s32.totalorder %s12, 1
    %p165 = por %p163, %p164
    %p166 = scmp.ne.s32.totalorder %s158, %s161
    %p167 = scmp.eq.s32.totalorder %s12, 0
    %p168 = por %p166, %p167
    %p169 = scmp.ne.s32.totalorder %s158, %s161
    %p170 = scmp.eq.s32.totalorder %s17, 1
    %p171 = por %p169, %p170
    %p172 = scmp.ne.s32.totalorder %s161, %s162
    %p173 = scmp.eq.s32.totalorder %s17, 0
    %p174 = por %p172, %p173
    %p175 = scmp.ne.s32.totalorder %s161, %s162
    %p176 = scmp.eq.s32.totalorder %s18, 1
    %p177 = por %p175, %p176
    %p179 = scmp.ne.s32.totalorder %s162, %s178
    %p180 = scmp.eq.s32.totalorder %s18, 0
    %p181 = por %p179, %p180
    %p182 = scmp.le.s32.totalorder 1, %s12
    %p183 = scmp.lt.s32.totalorder %s12, 3
    %p184 = pnand %p182, %p183
    %p185 = pneg %p184
    // Predicated region
    $region9: #{residual_block.3} parent=5 // pred_check
      _
    $region10: #{residual_block.3} parent=5 // pred_check_branch
      %187 = sbr.rel (%p184) target = $region12
    $region11: #{residual_block.3} parent=5 // pred_region
      %s188 = ssub.s32 %s12, 1
      // Predicated region
      $region13: #{residual_block.3} parent=11 // pred_check
        %p189 = pneg %p59
      $region14: #{residual_block.3} parent=11 // pred_check_branch
        %191 = sbr.rel (%p189) target = $region16
      $region15: #{residual_block.3} parent=11 // pred_region
        _
      $region16: #{residual_block.3} parent=11 // pred_fallthru
        _
      // Predicated region
      $region17: #{residual_block.3} parent=11 // pred_check
        %p192 = pneg %p80
      $region18: #{residual_block.3} parent=11 // pred_check_branch
        %194 = sbr.rel (%p192) target = $region20
      $region19: #{residual_block.3} parent=11 // pred_region
        _
      $region20: #{residual_block.3} parent=11 // pred_fallthru
        _
      // Predicated region
      $region21: #{residual_block.3} parent=11 // pred_check
        %p195 = pneg %p101
      $region22: #{residual_block.3} parent=11 // pred_check_branch
        %197 = sbr.rel (%p195) target = $region24
      $region23: #{residual_block.3} parent=11 // pred_region
        _
      $region24: #{residual_block.3} parent=11 // pred_fallthru
        _
      // Predicated region
      $region25: #{residual_block.3} parent=11 // pred_check
        %p198 = pneg %p122
      $region26: #{residual_block.3} parent=11 // pred_check_branch
        %200 = sbr.rel (%p198) target = $region28
      $region27: #{residual_block.3} parent=11 // pred_region
        _
      $region28: #{residual_block.3} parent=11 // pred_fallthru
        _
    $region12: #{residual_block.3} parent=5 // pred_fallthru
      _
    %p201 = scmp.lt.s32.totalorder %s12, 2
    // Predicated region
    $region29: #{residual_block.3} parent=5 // pred_check
      %p202 = pneg %p201
    $region30: #{residual_block.3} parent=5 // pred_check_branch
      %204 = sbr.rel (%p202) target = $region32
    $region31: #{residual_block.3} parent=5 // pred_region
      // Predicated region
      $region33: #{residual_block.3} parent=31 // pred_check
        %p205 = pneg %p32
      $region34: #{residual_block.3} parent=31 // pred_check_branch
        %207 = sbr.rel (%p205) target = $region36
      $region35: #{residual_block.3} parent=31 // pred_region
        %p208 = scmp.lt.s32.totalorder %s12, 1
        %s209 = scalar_select %p208, %s12, 1
        %s210 = smul.addr %s209, 3
        %s211 = smul.addr %s210, 4
        %s212 = scalar_lea.vmem %s0, %s211
      $region36: #{residual_block.3} parent=31 // pred_fallthru
        _
      // Predicated region
      $region37: #{residual_block.3} parent=31 // pred_check
        %p213 = pneg %p142
      $region38: #{residual_block.3} parent=31 // pred_check_branch
        %215 = sbr.rel (%p213) target = $region40
      $region39: #{residual_block.3} parent=31 // pred_region
        %p216 = scmp.lt.s32.totalorder %s12, 1
        %s217 = scalar_select %p216, %s12, 1
        %s218 = smul.addr %s217, 3
        %s219 = smul.addr %s218, 4
        %s220 = scalar_lea.vmem %s5, %s219
      $region40: #{residual_block.3} parent=31 // pred_fallthru
        _
    $region32: #{residual_block.3} parent=5 // pred_fallthru
      _
    %p221 = scmp.le.s32.totalorder 1, %s12
    %p222 = scmp.lt.s32.totalorder %s12, 3
    %p223 = pnand %p221, %p222
    %p224 = pneg %p223
    // Predicated region
    $region41: #{residual_block.3} parent=5 // pred_check
      _
    $region42: #{residual_block.3} parent=5 // pred_check_branch
      %226 = sbr.rel (%p223) target = $region44
    $region43: #{residual_block.3} parent=5 // pred_region
      %s227 = ssub.s32 %s12, 1
      %p228 = scmp.lt.s32.totalorder %s17, 1
      %s229 = scalar_select %p228, %s17, 1
      %s230 = smul.addr %s229, 3
      %s231 = smul.addr %s230, 4
      %s232 = scalar_lea.vmem %s0, %s231
      %p233 = pneg %p38
      %p234 = pneg %p35
      %p235 = pneg %p59
      %p236 = pneg %p56
      %p237 = pneg %p80
      %p238 = pneg %p77
      %p239 = pneg %p101
      %p240 = pneg %p98
      %p241 = pneg %p122
      %p242 = pneg %p119
      %p243 = scmp.lt.s32.totalorder %s17, 1
      %s244 = scalar_select %p243, %s17, 1
      %s245 = smul.addr %s244, 3
      %s246 = smul.addr %s245, 4
      %s247 = scalar_lea.vmem %s5, %s246
      %p248 = pneg %p148
      %p249 = pneg %p145
      %p250 = pneg %p174
      %p251 = pneg %p171
      %p252 = scmp.lt.s32.totalorder %s17, 1
      %s253 = scalar_select %p252, %s17, 1
      %s254 = smul.addr %s253, 3
      %s255 = smul.addr %s254, 4
      %s256 = scalar_lea.vmem %s6, %s255
      %p257 = scmp.lt.s32.totalorder %s17, 1
      %s258 = scalar_select %p257, %s17, 1
      %s259 = smul.addr %s258, 3
      %s260 = smul.addr %s259, 4
      %s261 = scalar_lea.vmem %s0, %s260
      %p262 = scmp.lt.s32.totalorder %s17, 1
      %s263 = scalar_select %p262, %s17, 1
      %s264 = smul.addr %s263, 3
      %s265 = smul.addr %s264, 4
      %s266 = scalar_lea.vmem %s5, %s265
      %p267 = scmp.lt.s32.totalorder %s17, 1
      %s268 = scalar_select %p267, %s17, 1
      %s269 = smul.addr %s268, 3
      %s270 = smul.addr %s269, 4
      %s271 = scalar_lea.vmem %s6, %s270
      %v272 = vld [vmem:[%s261] sm:$0xff]
      %v273 = vld [vmem:[%s261 + $0x8] sm:$0xf]
      %v274 = vld [vmem:[%s1] sm:$0xf]
      %s275 = scalar_lea.vmem %s1, 4
      %v276 = vld [vmem:[%s275] sm:$0xf]
      %v279 = vcombine.high %v272, %v272
      %280 = vrot.lane.b32.xlu0 %v272, 127
      %v281 = vpop.permute.xlu0 %280
      %282 = vrot.lane.b32.xlu0 %v279, 127
      %v283 = vpop.permute.xlu0 %282
      %284 = vrot.lane.b32.xlu0 %v273, 127
      %v285 = vpop.permute.xlu0 %284
      %vm286 = vcmask 1039360
      %v287 = vsel %vm286, %v281, %v283
      %v288 = vsel %vm286, %v283, %v285
      %vm289 = vcmask 31744
      %v291 = vsel %vm289, %v276, 0
      %vm293 = vcmask 1043456
      %v294 = vsel %vm293, %v287, 0
      %v296 = vsel %vm293, %v288, 0
      %v298 = vsel %vm293, %v285, 0
      %300 = vmatprep.subr.mxu0 %v296
      %301 = vmatpush1.msra.mxu0 %v294
      %302 = vmatprep.subr.mxu0 0.0
      %303 = vmatpush1.msra.mxu0 0.0
      %304 = vmatprep.subr.mxu0 0.0
      %305 = vmatpush1.msra.mxu0 0.0
      %306 = vmatprep.subr.mxu0 0.0
      %307 = vmatpush1.msra.mxu0 0.0
      %308 = vmatprep.subr.mxu0 0.0
      %309 = vmatpush1.msra.mxu0 0.0
      %310 = vmatprep.subr.mxu0 0.0
      %311 = vmatpush1.msra.mxu0 0.0
      %312 = vmatprep.subr.mxu0 0.0
      %313 = vmatpush1.msra.mxu0 0.0
      %314 = vmatprep.subr.mxu0 0.0
      %315 = vmatpush1.msra.mxu0 0.0
      %316 = vmatprep.subr.mxu0 0.0
      %317 = vmatpush1.msra.mxu0 0.0
      %318 = vmatprep.subr.mxu0 0.0
      %319 = vmatpush1.msra.mxu0 0.0
      %320 = vmatprep.subr.mxu0 0.0
      %321 = vmatpush1.msra.mxu0 0.0
      %322 = vmatprep.subr.mxu0 0.0
      %323 = vmatpush1.msra.mxu0 0.0
      %324 = vmatprep.subr.mxu0 0.0
      %325 = vmatpush1.msra.mxu0 0.0
      %326 = vmatprep.subr.mxu0 0.0
      %327 = vmatpush1.msra.mxu0 0.0
      %328 = vmatprep.subr.mxu0 0.0
      %329 = vmatpush1.msra.mxu0 0.0
      %330 = vmatprep.subr.mxu0 0.0
      %331 = vmatpush1.msra.mxu0 0.0
      %332 = vmatprep.subr.mxu0 0.0
      %333 = vmatpush1.msra.mxu0 0.0
      %334 = vmatprep.subr.mxu0 0.0
      %335 = vmatpush1.msra.mxu0 0.0
      %336 = vmatprep.subr.mxu0 0.0
      %337 = vmatpush1.msra.mxu0 0.0
      %338 = vmatprep.subr.mxu0 0.0
      %339 = vmatpush1.msra.mxu0 0.0
      %340 = vmatprep.subr.mxu0 0.0
      %341 = vmatpush1.msra.mxu0 0.0
      %342 = vmatprep.subr.mxu0 0.0
      %343 = vmatpush1.msra.mxu0 0.0
      %344 = vmatprep.subr.mxu0 0.0
      %345 = vmatpush1.msra.mxu0 0.0
      %346 = vmatprep.subr.mxu0 0.0
      %347 = vmatpush1.msra.mxu0 0.0
      %348 = vmatprep.subr.mxu0 0.0
      %349 = vmatpush1.msra.mxu0 0.0
      %350 = vmatprep.subr.mxu0 0.0
      %351 = vmatpush1.msra.mxu0 0.0
      %352 = vmatprep.subr.mxu0 0.0
      %353 = vmatpush1.msra.mxu0 0.0
      %354 = vmatprep.subr.mxu0 0.0
      %355 = vmatpush1.msra.mxu0 0.0
      %356 = vmatprep.subr.mxu0 0.0
      %357 = vmatpush1.msra.mxu0 0.0
      %358 = vmatprep.subr.mxu0 0.0
      %359 = vmatpush1.msra.mxu0 0.0
      %360 = vmatprep.subr.mxu0 0.0
      %361 = vmatpush1.msra.mxu0 0.0
      %362 = vmatprep.subr.mxu0 0.0
      %363 = vmatpush1.msra.mxu0 0.0
      %364 = vmatprep.mubr.f32.mxu0 0.0
      %365 = vmatmul.mubr.f32.gmra.mrb[0].mxu0 %v291
      %v366 = vpop.f32.mrb[0].mxu0
      %v367 = vadd.f32 0.0, %v366
      %v368 = vpop.f32.mrb[0].mxu0
      %v369 = vadd.f32 0.0, %v368
      %370 = vdwg.mxu0
      %371 = vmatprep.subr.mxu0 0.0
      %372 = vmatpush1.msra.mxu0 %v298
      %373 = vmatprep.subr.mxu0 0.0
      %374 = vmatpush1.msra.mxu0 0.0
      %375 = vmatprep.subr.mxu0 0.0
      %376 = vmatpush1.msra.mxu0 0.0
      %377 = vmatprep.subr.mxu0 0.0
      %378 = vmatpush1.msra.mxu0 0.0
      %379 = vmatprep.subr.mxu0 0.0
      %380 = vmatpush1.msra.mxu0 0.0
      %381 = vmatprep.subr.mxu0 0.0
      %382 = vmatpush1.msra.mxu0 0.0
      %383 = vmatprep.subr.mxu0 0.0
      %384 = vmatpush1.msra.mxu0 0.0
      %385 = vmatprep.subr.mxu0 0.0
      %386 = vmatpush1.msra.mxu0 0.0
      %387 = vmatprep.subr.mxu0 0.0
      %388 = vmatpush1.msra.mxu0 0.0
      %389 = vmatprep.subr.mxu0 0.0
      %390 = vmatpush1.msra.mxu0 0.0
      %391 = vmatprep.subr.mxu0 0.0
      %392 = vmatpush1.msra.mxu0 0.0
      %393 = vmatprep.subr.mxu0 0.0
      %394 = vmatpush1.msra.mxu0 0.0
      %395 = vmatprep.subr.mxu0 0.0
      %396 = vmatpush1.msra.mxu0 0.0
      %397 = vmatprep.subr.mxu0 0.0
      %398 = vmatpush1.msra.mxu0 0.0
      %399 = vmatprep.subr.mxu0 0.0
      %400 = vmatpush1.msra.mxu0 0.0
      %401 = vmatprep.subr.mxu0 0.0
      %402 = vmatpush1.msra.mxu0 0.0
      %403 = vmatprep.subr.mxu0 0.0
      %404 = vmatpush1.msra.mxu0 0.0
      %405 = vmatprep.subr.mxu0 0.0
      %406 = vmatpush1.msra.mxu0 0.0
      %407 = vmatprep.subr.mxu0 0.0
      %408 = vmatpush1.msra.mxu0 0.0
      %409 = vmatprep.subr.mxu0 0.0
      %410 = vmatpush1.msra.mxu0 0.0
      %411 = vmatprep.subr.mxu0 0.0
      %412 = vmatpush1.msra.mxu0 0.0
      %413 = vmatprep.subr.mxu0 0.0
      %414 = vmatpush1.msra.mxu0 0.0
      %415 = vmatprep.subr.mxu0 0.0
      %416 = vmatpush1.msra.mxu0 0.0
      %417 = vmatprep.subr.mxu0 0.0
      %418 = vmatpush1.msra.mxu0 0.0
      %419 = vmatprep.subr.mxu0 0.0
      %420 = vmatpush1.msra.mxu0 0.0
      %421 = vmatprep.subr.mxu0 0.0
      %422 = vmatpush1.msra.mxu0 0.0
      %423 = vmatprep.subr.mxu0 0.0
      %424 = vmatpush1.msra.mxu0 0.0
      %425 = vmatprep.subr.mxu0 0.0
      %426 = vmatpush1.msra.mxu0 0.0
      %427 = vmatprep.subr.mxu0 0.0
      %428 = vmatpush1.msra.mxu0 0.0
      %429 = vmatprep.subr.mxu0 0.0
      %430 = vmatpush1.msra.mxu0 0.0
      %431 = vmatprep.subr.mxu0 0.0
      %432 = vmatpush1.msra.mxu0 0.0
      %433 = vmatprep.subr.mxu0 0.0
      %434 = vmatpush1.msra.mxu0 0.0
      %435 = vmatprep.mubr.f32.mxu0 0.0
      %436 = vmatmul.mubr.f32.gmra.mrb[0].mxu0 %v291
      %v437 = vpop.f32.mrb[0].mxu0
      %v438 = vadd.f32 0.0, %v437
      %v439 = vpop.f32.mrb[0].mxu0
      %440 = vdwg.mxu0
      %v442 = vsel %vm289, %v274, 0
      %v444 = vsel %vm293, %v272, 0
      %v446 = vsel %vm293, %v279, 0
      %v448 = vsel %vm293, %v273, 0
      %450 = vmatprep.subr.mxu0 %v446
      %451 = vmatpush1.msra.mxu0 %v444
      %452 = vmatprep.subr.mxu0 0.0
      %453 = vmatpush1.msra.mxu0 0.0
      %454 = vmatprep.subr.mxu0 0.0
      %455 = vmatpush1.msra.mxu0 0.0
      %456 = vmatprep.subr.mxu0 0.0
      %457 = vmatpush1.msra.mxu0 0.0
      %458 = vmatprep.subr.mxu0 0.0
      %459 = vmatpush1.msra.mxu0 0.0
      %460 = vmatprep.subr.mxu0 0.0
      %461 = vmatpush1.msra.mxu0 0.0
      %462 = vmatprep.subr.mxu0 0.0
      %463 = vmatpush1.msra.mxu0 0.0
      %464 = vmatprep.subr.mxu0 0.0
      %465 = vmatpush1.msra.mxu0 0.0
      %466 = vmatprep.subr.mxu0 0.0
      %467 = vmatpush1.msra.mxu0 0.0
      %468 = vmatprep.subr.mxu0 0.0
      %469 = vmatpush1.msra.mxu0 0.0
      %470 = vmatprep.subr.mxu0 0.0
      %471 = vmatpush1.msra.mxu0 0.0
      %472 = vmatprep.subr.mxu0 0.0
      %473 = vmatpush1.msra.mxu0 0.0
      %474 = vmatprep.subr.mxu0 0.0
      %475 = vmatpush1.msra.mxu0 0.0
      %476 = vmatprep.subr.mxu0 0.0
      %477 = vmatpush1.msra.mxu0 0.0
      %478 = vmatprep.subr.mxu0 0.0
      %479 = vmatpush1.msra.mxu0 0.0
      %480 = vmatprep.subr.mxu0 0.0
      %481 = vmatpush1.msra.mxu0 0.0
      %482 = vmatprep.subr.mxu0 0.0
      %483 = vmatpush1.msra.mxu0 0.0
      %484 = vmatprep.subr.mxu0 0.0
      %485 = vmatpush1.msra.mxu0 0.0
      %486 = vmatprep.subr.mxu0 0.0
      %487 = vmatpush1.msra.mxu0 0.0
      %488 = vmatprep.subr.mxu0 0.0
      %489 = vmatpush1.msra.mxu0 0.0
      %490 = vmatprep.subr.mxu0 0.0
      %491 = vmatpush1.msra.mxu0 0.0
      %492 = vmatprep.subr.mxu0 0.0
      %493 = vmatpush1.msra.mxu0 0.0
      %494 = vmatprep.subr.mxu0 0.0
      %495 = vmatpush1.msra.mxu0 0.0
      %496 = vmatprep.subr.mxu0 0.0
      %497 = vmatpush1.msra.mxu0 0.0
      %498 = vmatprep.subr.mxu0 0.0
      %499 = vmatpush1.msra.mxu0 0.0
      %500 = vmatprep.subr.mxu0 0.0
      %501 = vmatpush1.msra.mxu0 0.0
      %502 = vmatprep.subr.mxu0 0.0
      %503 = vmatpush1.msra.mxu0 0.0
      %504 = vmatprep.subr.mxu0 0.0
      %505 = vmatpush1.msra.mxu0 0.0
      %506 = vmatprep.subr.mxu0 0.0
      %507 = vmatpush1.msra.mxu0 0.0
      %508 = vmatprep.subr.mxu0 0.0
      %509 = vmatpush1.msra.mxu0 0.0
      %510 = vmatprep.subr.mxu0 0.0
      %511 = vmatpush1.msra.mxu0 0.0
      %512 = vmatprep.subr.mxu0 0.0
      %513 = vmatpush1.msra.mxu0 0.0
      %514 = vmatprep.mubr.f32.mxu0 0.0
      %515 = vmatmul.mubr.f32.gmra.mrb[0].mxu0 %v442
      %v516 = vpop.f32.mrb[0].mxu0
      %v517 = vadd.f32 %v367, %v516
      %v518 = vpop.f32.mrb[0].mxu0
      %v519 = vadd.f32 %v369, %v518
      %520 = vdwg.mxu0
      %521 = vmatprep.subr.mxu0 0.0
      %522 = vmatpush1.msra.mxu0 %v448
      %523 = vmatprep.subr.mxu0 0.0
      %524 = vmatpush1.msra.mxu0 0.0
      %525 = vmatprep.subr.mxu0 0.0
      %526 = vmatpush1.msra.mxu0 0.0
      %527 = vmatprep.subr.mxu0 0.0
      %528 = vmatpush1.msra.mxu0 0.0
      %529 = vmatprep.subr.mxu0 0.0
      %530 = vmatpush1.msra.mxu0 0.0
      %531 = vmatprep.subr.mxu0 0.0
      %532 = vmatpush1.msra.mxu0 0.0
      %533 = vmatprep.subr.mxu0 0.0
      %534 = vmatpush1.msra.mxu0 0.0
      %535 = vmatprep.subr.mxu0 0.0
      %536 = vmatpush1.msra.mxu0 0.0
      %537 = vmatprep.subr.mxu0 0.0
      %538 = vmatpush1.msra.mxu0 0.0
      %539 = vmatprep.subr.mxu0 0.0
      %540 = vmatpush1.msra.mxu0 0.0
      %541 = vmatprep.subr.mxu0 0.0
      %542 = vmatpush1.msra.mxu0 0.0
      %543 = vmatprep.subr.mxu0 0.0
      %544 = vmatpush1.msra.mxu0 0.0
      %545 = vmatprep.subr.mxu0 0.0
      %546 = vmatpush1.msra.mxu0 0.0
      %547 = vmatprep.subr.mxu0 0.0
      %548 = vmatpush1.msra.mxu0 0.0
      %549 = vmatprep.subr.mxu0 0.0
      %550 = vmatpush1.msra.mxu0 0.0
      %551 = vmatprep.subr.mxu0 0.0
      %552 = vmatpush1.msra.mxu0 0.0
      %553 = vmatprep.subr.mxu0 0.0
      %554 = vmatpush1.msra.mxu0 0.0
      %555 = vmatprep.subr.mxu0 0.0
      %556 = vmatpush1.msra.mxu0 0.0
      %557 = vmatprep.subr.mxu0 0.0
      %558 = vmatpush1.msra.mxu0 0.0
      %559 = vmatprep.subr.mxu0 0.0
      %560 = vmatpush1.msra.mxu0 0.0
      %561 = vmatprep.subr.mxu0 0.0
      %562 = vmatpush1.msra.mxu0 0.0
      %563 = vmatprep.subr.mxu0 0.0
      %564 = vmatpush1.msra.mxu0 0.0
      %565 = vmatprep.subr.mxu0 0.0
      %566 = vmatpush1.msra.mxu0 0.0
      %567 = vmatprep.subr.mxu0 0.0
      %568 = vmatpush1.msra.mxu0 0.0
      %569 = vmatprep.subr.mxu0 0.0
      %570 = vmatpush1.msra.mxu0 0.0
      %571 = vmatprep.subr.mxu0 0.0
      %572 = vmatpush1.msra.mxu0 0.0
      %573 = vmatprep.subr.mxu0 0.0
      %574 = vmatpush1.msra.mxu0 0.0
      %575 = vmatprep.subr.mxu0 0.0
      %576 = vmatpush1.msra.mxu0 0.0
      %577 = vmatprep.subr.mxu0 0.0
      %578 = vmatpush1.msra.mxu0 0.0
      %579 = vmatprep.subr.mxu0 0.0
      %580 = vmatpush1.msra.mxu0 0.0
      %581 = vmatprep.subr.mxu0 0.0
      %582 = vmatpush1.msra.mxu0 0.0
      %583 = vmatprep.subr.mxu0 0.0
      %584 = vmatpush1.msra.mxu0 0.0
      %585 = vmatprep.mubr.f32.mxu0 0.0
      %586 = vmatmul.mubr.f32.gmra.mrb[0].mxu0 %v442
      %v587 = vpop.f32.mrb[0].mxu0
      %v588 = vadd.f32 %v438, %v587
      %v589 = vpop.f32.mrb[0].mxu0
      %590 = vdwg.mxu0
      %v591 = vld [vmem:[%s261] sm:$0xff]
      %v592 = vld [vmem:[%s261 + $0x8] sm:$0xf]
      %s593 = scalar_lea.vmem %s1, 8
      %v594 = vld [vmem:[%s593] sm:$0xf]
      %v597 = vcombine.high %v591, %v591
      %598 = vrot.lane.b32.xlu0 %v591, 126
      %v599 = vpop.permute.xlu0 %598
      %600 = vrot.lane.b32.xlu0 %v597, 126
      %v601 = vpop.permute.xlu0 %600
      %602 = vrot.lane.b32.xlu0 %v592, 126
      %v603 = vpop.permute.xlu0 %602
      %vm604 = vcmask 1031168
      %v605 = vsel %vm604, %v599, %v601
      %v606 = vsel %vm604, %v601, %v603
      %v608 = vsel %vm289, %v594, 0
      %v610 = vsel %vm293, %v605, 0
      %v612 = vsel %vm293, %v606, 0
      %v614 = vsel %vm293, %v603, 0
      %616 = vmatprep.subr.mxu0 %v612
      %617 = vmatpush1.msra.mxu0 %v610
      %618 = vmatprep.subr.mxu0 0.0
      %619 = vmatpush1.msra.mxu0 0.0
      %620 = vmatprep.subr.mxu0 0.0
      %621 = vmatpush1.msra.mxu0 0.0
      %622 = vmatprep.subr.mxu0 0.0
      %623 = vmatpush1.msra.mxu0 0.0
      %624 = vmatprep.subr.mxu0 0.0
      %625 = vmatpush1.msra.mxu0 0.0
      %626 = vmatprep.subr.mxu0 0.0
      %627 = vmatpush1.msra.mxu0 0.0
      %628 = vmatprep.subr.mxu0 0.0
      %629 = vmatpush1.msra.mxu0 0.0
      %630 = vmatprep.subr.mxu0 0.0
      %631 = vmatpush1.msra.mxu0 0.0
      %632 = vmatprep.subr.mxu0 0.0
      %633 = vmatpush1.msra.mxu0 0.0
      %634 = vmatprep.subr.mxu0 0.0
      %635 = vmatpush1.msra.mxu0 0.0
      %636 = vmatprep.subr.mxu0 0.0
      %637 = vmatpush1.msra.mxu0 0.0
      %638 = vmatprep.subr.mxu0 0.0
      %639 = vmatpush1.msra.mxu0 0.0
      %640 = vmatprep.subr.mxu0 0.0
      %641 = vmatpush1.msra.mxu0 0.0
      %642 = vmatprep.subr.mxu0 0.0
      %643 = vmatpush1.msra.mxu0 0.0
      %644 = vmatprep.subr.mxu0 0.0
      %645 = vmatpush1.msra.mxu0 0.0
      %646 = vmatprep.subr.mxu0 0.0
      %647 = vmatpush1.msra.mxu0 0.0
      %648 = vmatprep.subr.mxu0 0.0
      %649 = vmatpush1.msra.mxu0 0.0
      %650 = vmatprep.subr.mxu0 0.0
      %651 = vmatpush1.msra.mxu0 0.0
      %652 = vmatprep.subr.mxu0 0.0
      %653 = vmatpush1.msra.mxu0 0.0
      %654 = vmatprep.subr.mxu0 0.0
      %655 = vmatpush1.msra.mxu0 0.0
      %656 = vmatprep.subr.mxu0 0.0
      %657 = vmatpush1.msra.mxu0 0.0
      %658 = vmatprep.subr.mxu0 0.0
      %659 = vmatpush1.msra.mxu0 0.0
      %660 = vmatprep.subr.mxu0 0.0
      %661 = vmatpush1.msra.mxu0 0.0
      %662 = vmatprep.subr.mxu0 0.0
      %663 = vmatpush1.msra.mxu0 0.0
      %664 = vmatprep.subr.mxu0 0.0
      %665 = vmatpush1.msra.mxu0 0.0
      %666 = vmatprep.subr.mxu0 0.0
      %667 = vmatpush1.msra.mxu0 0.0
      %668 = vmatprep.subr.mxu0 0.0
      %669 = vmatpush1.msra.mxu0 0.0
      %670 = vmatprep.subr.mxu0 0.0
      %671 = vmatpush1.msra.mxu0 0.0
      %672 = vmatprep.subr.mxu0 0.0
      %673 = vmatpush1.msra.mxu0 0.0
      %674 = vmatprep.subr.mxu0 0.0
      %675 = vmatpush1.msra.mxu0 0.0
      %676 = vmatprep.subr.mxu0 0.0
      %677 = vmatpush1.msra.mxu0 0.0
      %678 = vmatprep.subr.mxu0 0.0
      %679 = vmatpush1.msra.mxu0 0.0
      %680 = vmatprep.mubr.f32.mxu0 0.0
      %681 = vmatmul.mubr.f32.gmra.mrb[0].mxu0 %v608
      %v682 = vpop.f32.mrb[0].mxu0
      %v683 = vadd.f32 0.0, %v682
      %v684 = vpop.f32.mrb[0].mxu0
      %v685 = vadd.f32 0.0, %v684
      %686 = vdwg.mxu0
      %687 = vmatprep.subr.mxu0 0.0
      %688 = vmatpush1.msra.mxu0 %v614
      %689 = vmatprep.subr.mxu0 0.0
      %690 = vmatpush1.msra.mxu0 0.0
      %691 = vmatprep.subr.mxu0 0.0
      %692 = vmatpush1.msra.mxu0 0.0
      %693 = vmatprep.subr.mxu0 0.0
      %694 = vmatpush1.msra.mxu0 0.0
      %695 = vmatprep.subr.mxu0 0.0
      %696 = vmatpush1.msra.mxu0 0.0
      %697 = vmatprep.subr.mxu0 0.0
      %698 = vmatpush1.msra.mxu0 0.0
      %699 = vmatprep.subr.mxu0 0.0
      %700 = vmatpush1.msra.mxu0 0.0
      %701 = vmatprep.subr.mxu0 0.0
      %702 = vmatpush1.msra.mxu0 0.0
      %703 = vmatprep.subr.mxu0 0.0
      %704 = vmatpush1.msra.mxu0 0.0
      %705 = vmatprep.subr.mxu0 0.0
      %706 = vmatpush1.msra.mxu0 0.0
      %707 = vmatprep.subr.mxu0 0.0
      %708 = vmatpush1.msra.mxu0 0.0
      %709 = vmatprep.subr.mxu0 0.0
      %710 = vmatpush1.msra.mxu0 0.0
      %711 = vmatprep.subr.mxu0 0.0
      %712 = vmatpush1.msra.mxu0 0.0
      %713 = vmatprep.subr.mxu0 0.0
      %714 = vmatpush1.msra.mxu0 0.0
      %715 = vmatprep.subr.mxu0 0.0
      %716 = vmatpush1.msra.mxu0 0.0
      %717 = vmatprep.subr.mxu0 0.0
      %718 = vmatpush1.msra.mxu0 0.0
      %719 = vmatprep.subr.mxu0 0.0
      %720 = vmatpush1.msra.mxu0 0.0
      %721 = vmatprep.subr.mxu0 0.0
      %722 = vmatpush1.msra.mxu0 0.0
      %723 = vmatprep.subr.mxu0 0.0
      %724 = vmatpush1.msra.mxu0 0.0
      %725 = vmatprep.subr.mxu0 0.0
      %726 = vmatpush1.msra.mxu0 0.0
      %727 = vmatprep.subr.mxu0 0.0
      %728 = vmatpush1.msra.mxu0 0.0
      %729 = vmatprep.subr.mxu0 0.0
      %730 = vmatpush1.msra.mxu0 0.0
      %731 = vmatprep.subr.mxu0 0.0
      %732 = vmatpush1.msra.mxu0 0.0
      %733 = vmatprep.subr.mxu0 0.0
      %734 = vmatpush1.msra.mxu0 0.0
      %735 = vmatprep.subr.mxu0 0.0
      %736 = vmatpush1.msra.mxu0 0.0
      %737 = vmatprep.subr.mxu0 0.0
      %738 = vmatpush1.msra.mxu0 0.0
      %739 = vmatprep.subr.mxu0 0.0
      %740 = vmatpush1.msra.mxu0 0.0
      %741 = vmatprep.subr.mxu0 0.0
      %742 = vmatpush1.msra.mxu0 0.0
      %743 = vmatprep.subr.mxu0 0.0
      %744 = vmatpush1.msra.mxu0 0.0
      %745 = vmatprep.subr.mxu0 0.0
      %746 = vmatpush1.msra.mxu0 0.0
      %747 = vmatprep.subr.mxu0 0.0
      %748 = vmatpush1.msra.mxu0 0.0
      %749 = vmatprep.subr.mxu0 0.0
      %750 = vmatpush1.msra.mxu0 0.0
      %751 = vmatprep.mubr.f32.mxu0 0.0
      %752 = vmatmul.mubr.f32.gmra.mrb[0].mxu0 %v608
      %v753 = vpop.f32.mrb[0].mxu0
      %v754 = vadd.f32 0.0, %v753
      %v755 = vpop.f32.mrb[0].mxu0
      %756 = vdwg.mxu0
      %v757 = vadd.f32 %v517, %v683
      %v758 = vadd.f32 %v519, %v685
      %v759 = vadd.f32 %v588, %v754
      %v760 = vld [vmem:[%s261] sm:$0xff]
      %v761 = vld [vmem:[%s261 + $0x8] sm:$0xf]
      %s762 = scalar_lea.vmem %s1, 12
      %v763 = vld [vmem:[%s762] sm:$0xf]
      %v766 = vcombine.high %v760, %v760
      %767 = vrot.lane.b32.xlu0 %v760, 110
      %v768 = vpop.permute.xlu0 %767
      %769 = vrot.lane.b32.xlu0 %v766, 110
      %v770 = vpop.permute.xlu0 %769
      %771 = vrot.lane.b32.xlu0 %v761, 110
      %v772 = vpop.permute.xlu0 %771
      %vm773 = vcmask 900096
      %v774 = vsel %vm773, %v768, %v770
      %v775 = vsel %vm773, %v770, %v772
      %v777 = vsel %vm289, %v763, 0
      %v779 = vsel %vm293, %v774, 0
      %v781 = vsel %vm293, %v775, 0
      %v783 = vsel %vm293, %v772, 0
      %785 = vmatprep.subr.mxu0 %v781
      %786 = vmatpush1.msra.mxu0 %v779
      %787 = vmatprep.subr.mxu0 0.0
      %788 = vmatpush1.msra.mxu0 0.0
      %789 = vmatprep.subr.mxu0 0.0
      %790 = vmatpush1.msra.mxu0 0.0
      %791 = vmatprep.subr.mxu0 0.0
      %792 = vmatpush1.msra.mxu0 0.0
      %793 = vmatprep.subr.mxu0 0.0
      %794 = vmatpush1.msra.mxu0 0.0
      %795 = vmatprep.subr.mxu0 0.0
      %796 = vmatpush1.msra.mxu0 0.0
      %797 = vmatprep.subr.mxu0 0.0
      %798 = vmatpush1.msra.mxu0 0.0
      %799 = vmatprep.subr.mxu0 0.0
      %800 = vmatpush1.msra.mxu0 0.0
      %801 = vmatprep.subr.mxu0 0.0
      %802 = vmatpush1.msra.mxu0 0.0
      %803 = vmatprep.subr.mxu0 0.0
      %804 = vmatpush1.msra.mxu0 0.0
      %805 = vmatprep.subr.mxu0 0.0
      %806 = vmatpush1.msra.mxu0 0.0
      %807 = vmatprep.subr.mxu0 0.0
      %808 = vmatpush1.msra.mxu0 0.0
      %809 = vmatprep.subr.mxu0 0.0
      %810 = vmatpush1.msra.mxu0 0.0
      %811 = vmatprep.subr.mxu0 0.0
      %812 = vmatpush1.msra.mxu0 0.0
      %813 = vmatprep.subr.mxu0 0.0
      %814 = vmatpush1.msra.mxu0 0.0
      %815 = vmatprep.subr.mxu0 0.0
      %816 = vmatpush1.msra.mxu0 0.0
      %817 = vmatprep.subr.mxu0 0.0
      %818 = vmatpush1.msra.mxu0 0.0
      %819 = vmatprep.subr.mxu0 0.0
      %820 = vmatpush1.msra.mxu0 0.0
      %821 = vmatprep.subr.mxu0 0.0
      %822 = vmatpush1.msra.mxu0 0.0
      %823 = vmatprep.subr.mxu0 0.0
      %824 = vmatpush1.msra.mxu0 0.0
      %825 = vmatprep.subr.mxu0 0.0
      %826 = vmatpush1.msra.mxu0 0.0
      %827 = vmatprep.subr.mxu0 0.0
      %828 = vmatpush1.msra.mxu0 0.0
      %829 = vmatprep.subr.mxu0 0.0
      %830 = vmatpush1.msra.mxu0 0.0
      %831 = vmatprep.subr.mxu0 0.0
      %832 = vmatpush1.msra.mxu0 0.0
      %833 = vmatprep.subr.mxu0 0.0
      %834 = vmatpush1.msra.mxu0 0.0
      %835 = vmatprep.subr.mxu0 0.0
      %836 = vmatpush1.msra.mxu0 0.0
      %837 = vmatprep.subr.mxu0 0.0
      %838 = vmatpush1.msra.mxu0 0.0
      %839 = vmatprep.subr.mxu0 0.0
      %840 = vmatpush1.msra.mxu0 0.0
      %841 = vmatprep.subr.mxu0 0.0
      %842 = vmatpush1.msra.mxu0 0.0
      %843 = vmatprep.subr.mxu0 0.0
      %844 = vmatpush1.msra.mxu0 0.0
      %845 = vmatprep.subr.mxu0 0.0
      %846 = vmatpush1.msra.mxu0 0.0
      %847 = vmatprep.subr.mxu0 0.0
      %848 = vmatpush1.msra.mxu0 0.0
      %849 = vmatprep.mubr.f32.mxu0 0.0
      %850 = vmatmul.mubr.f32.gmra.mrb[0].mxu0 %v777
      %v851 = vpop.f32.mrb[0].mxu0
      %v852 = vadd.f32 0.0, %v851
      %v853 = vpop.f32.mrb[0].mxu0
      %v854 = vadd.f32 0.0, %v853
      %855 = vdwg.mxu0
      %856 = vmatprep.subr.mxu0 0.0
      %857 = vmatpush1.msra.mxu0 %v783
      %858 = vmatprep.subr.mxu0 0.0
      %859 = vmatpush1.msra.mxu0 0.0
      %860 = vmatprep.subr.mxu0 0.0
      %861 = vmatpush1.msra.mxu0 0.0
      %862 = vmatprep.subr.mxu0 0.0
      %863 = vmatpush1.msra.mxu0 0.0
      %864 = vmatprep.subr.mxu0 0.0
      %865 = vmatpush1.msra.mxu0 0.0
      %866 = vmatprep.subr.mxu0 0.0
      %867 = vmatpush1.msra.mxu0 0.0
      %868 = vmatprep.subr.mxu0 0.0
      %869 = vmatpush1.msra.mxu0 0.0
      %870 = vmatprep.subr.mxu0 0.0
      %871 = vmatpush1.msra.mxu0 0.0
      %872 = vmatprep.subr.mxu0 0.0
      %873 = vmatpush1.msra.mxu0 0.0
      %874 = vmatprep.subr.mxu0 0.0
      %875 = vmatpush1.msra.mxu0 0.0
      %876 = vmatprep.subr.mxu0 0.0
      %877 = vmatpush1.msra.mxu0 0.0
      %878 = vmatprep.subr.mxu0 0.0
      %879 = vmatpush1.msra.mxu0 0.0
      %880 = vmatprep.subr.mxu0 0.0
      %881 = vmatpush1.msra.mxu0 0.0
      %882 = vmatprep.subr.mxu0 0.0
      %883 = vmatpush1.msra.mxu0 0.0
      %884 = vmatprep.subr.mxu0 0.0
      %885 = vmatpush1.msra.mxu0 0.0
      %886 = vmatprep.subr.mxu0 0.0
      %887 = vmatpush1.msra.mxu0 0.0
      %888 = vmatprep.subr.mxu0 0.0
      %889 = vmatpush1.msra.mxu0 0.0
      %890 = vmatprep.subr.mxu0 0.0
      %891 = vmatpush1.msra.mxu0 0.0
      %892 = vmatprep.subr.mxu0 0.0
      %893 = vmatpush1.msra.mxu0 0.0
      %894 = vmatprep.subr.mxu0 0.0
      %895 = vmatpush1.msra.mxu0 0.0
      %896 = vmatprep.subr.mxu0 0.0
      %897 = vmatpush1.msra.mxu0 0.0
      %898 = vmatprep.subr.mxu0 0.0
      %899 = vmatpush1.msra.mxu0 0.0
      %900 = vmatprep.subr.mxu0 0.0
      %901 = vmatpush1.msra.mxu0 0.0
      %902 = vmatprep.subr.mxu0 0.0
      %903 = vmatpush1.msra.mxu0 0.0
      %904 = vmatprep.subr.mxu0 0.0
      %905 = vmatpush1.msra.mxu0 0.0
      %906 = vmatprep.subr.mxu0 0.0
      %907 = vmatpush1.msra.mxu0 0.0
      %908 = vmatprep.subr.mxu0 0.0
      %909 = vmatpush1.msra.mxu0 0.0
      %910 = vmatprep.subr.mxu0 0.0
      %911 = vmatpush1.msra.mxu0 0.0
      %912 = vmatprep.subr.mxu0 0.0
      %913 = vmatpush1.msra.mxu0 0.0
      %914 = vmatprep.subr.mxu0 0.0
      %915 = vmatpush1.msra.mxu0 0.0
      %916 = vmatprep.subr.mxu0 0.0
      %917 = vmatpush1.msra.mxu0 0.0
      %918 = vmatprep.subr.mxu0 0.0
      %919 = vmatpush1.msra.mxu0 0.0
      %920 = vmatprep.mubr.f32.mxu0 0.0
      %921 = vmatmul.mubr.f32.gmra.mrb[0].mxu0 %v777
      %v922 = vpop.f32.mrb[0].mxu0
      %v923 = vadd.f32 0.0, %v922
      %v924 = vpop.f32.mrb[0].mxu0
      %925 = vdwg.mxu0
      %v926 = vadd.f32 %v757, %v852
      %v927 = vadd.f32 %v758, %v854
      %v928 = vadd.f32 %v759, %v923
      %v929 = vld [vmem:[%s261] sm:$0xff]
      %v930 = vld [vmem:[%s261 + $0x8] sm:$0xf]
      %s931 = scalar_lea.vmem %s1, 16
      %v932 = vld [vmem:[%s931] sm:$0xf]
      %v935 = vcombine.high %v929, %v929
      %936 = vrot.lane.b32.xlu0 %v929, 109
      %v937 = vpop.permute.xlu0 %936
      %938 = vrot.lane.b32.xlu0 %v935, 109
      %v939 = vpop.permute.xlu0 %938
      %940 = vrot.lane.b32.xlu0 %v930, 109
      %v941 = vpop.permute.xlu0 %940
      %vm942 = vcmask 891904
      %v943 = vsel %vm942, %v937, %v939
      %v944 = vsel %vm942, %v939, %v941
      %v946 = vsel %vm289, %v932, 0
      %v948 = vsel %vm293, %v943, 0
      %v950 = vsel %vm293, %v944, 0
      %v952 = vsel %vm293, %v941, 0
      %954 = vmatprep.subr.mxu0 %v950
      %955 = vmatpush1.msra.mxu0 %v948
      %956 = vmatprep.subr.mxu0 0.0
      %957 = vmatpush1.msra.mxu0 0.0
      %958 = vmatprep.subr.mxu0 0.0
      %959 = vmatpush1.msra.mxu0 0.0
      %960 = vmatprep.subr.mxu0 0.0
      %961 = vmatpush1.msra.mxu0 0.0
      %962 = vmatprep.subr.mxu0 0.0
      %963 = vmatpush1.msra.mxu0 0.0
      %964 = vmatprep.subr.mxu0 0.0
      %965 = vmatpush1.msra.mxu0 0.0
      %966 = vmatprep.subr.mxu0 0.0
      %967 = vmatpush1.msra.mxu0 0.0
      %968 = vmatprep.subr.mxu0 0.0
      %969 = vmatpush1.msra.mxu0 0.0
      %970 = vmatprep.subr.mxu0 0.0
      %971 = vmatpush1.msra.mxu0 0.0
      %972 = vmatprep.subr.mxu0 0.0
      %973 = vmatpush1.msra.mxu0 0.0
      %974 = vmatprep.subr.mxu0 0.0
      %975 = vmatpush1.msra.mxu0 0.0
      %976 = vmatprep.subr.mxu0 0.0
      %977 = vmatpush1.msra.mxu0 0.0
      %978 = vmatprep.subr.mxu0 0.0
      %979 = vmatpush1.msra.mxu0 0.0
      %980 = vmatprep.subr.mxu0 0.0
      %981 = vmatpush1.msra.mxu0 0.0
      %982 = vmatprep.subr.mxu0 0.0
      %983 = vmatpush1.msra.mxu0 0.0
      %984 = vmatprep.subr.mxu0 0.0
      %985 = vmatpush1.msra.mxu0 0.0
      %986 = vmatprep.subr.mxu0 0.0
      %987 = vmatpush1.msra.mxu0 0.0
      %988 = vmatprep.subr.mxu0 0.0
      %989 = vmatpush1.msra.mxu0 0.0
      %990 = vmatprep.subr.mxu0 0.0
      %991 = vmatpush1.msra.mxu0 0.0
      %992 = vmatprep.subr.mxu0 0.0
      %993 = vmatpush1.msra.mxu0 0.0
      %994 = vmatprep.subr.mxu0 0.0
      %995 = vmatpush1.msra.mxu0 0.0
      %996 = vmatprep.subr.mxu0 0.0
      %997 = vmatpush1.msra.mxu0 0.0
      %998 = vmatprep.subr.mxu0 0.0
      %999 = vmatpush1.msra.mxu0 0.0
      %1000 = vmatprep.subr.mxu0 0.0
      %1001 = vmatpush1.msra.mxu0 0.0
      %1002 = vmatprep.subr.mxu0 0.0
      %1003 = vmatpush1.msra.mxu0 0.0
      %1004 = vmatprep.subr.mxu0 0.0
      %1005 = vmatpush1.msra.mxu0 0.0
      %1006 = vmatprep.subr.mxu0 0.0
      %1007 = vmatpush1.msra.mxu0 0.0
      %1008 = vmatprep.subr.mxu0 0.0
      %1009 = vmatpush1.msra.mxu0 0.0
      %1010 = vmatprep.subr.mxu0 0.0
      %1011 = vmatpush1.msra.mxu0 0.0
      %1012 = vmatprep.subr.mxu0 0.0
      %1013 = vmatpush1.msra.mxu0 0.0
      %1014 = vmatprep.subr.mxu0 0.0
      %1015 = vmatpush1.msra.mxu0 0.0
      %1016 = vmatprep.subr.mxu0 0.0
      %1017 = vmatpush1.msra.mxu0 0.0
      %1018 = vmatprep.mubr.f32.mxu0 0.0
      %1019 = vmatmul.mubr.f32.gmra.mrb[0].mxu0 %v946
      %v1020 = vpop.f32.mrb[0].mxu0
      %v1021 = vadd.f32 0.0, %v1020
      %v1022 = vpop.f32.mrb[0].mxu0
      %v1023 = vadd.f32 0.0, %v1022
      %1024 = vdwg.mxu0
      %1025 = vmatprep.subr.mxu0 0.0
      %1026 = vmatpush1.msra.mxu0 %v952
      %1027 = vmatprep.subr.mxu0 0.0
      %1028 = vmatpush1.msra.mxu0 0.0
      %1029 = vmatprep.subr.mxu0 0.0
      %1030 = vmatpush1.msra.mxu0 0.0
      %1031 = vmatprep.subr.mxu0 0.0
      %1032 = vmatpush1.msra.mxu0 0.0
      %1033 = vmatprep.subr.mxu0 0.0
      %1034 = vmatpush1.msra.mxu0 0.0
      %1035 = vmatprep.subr.mxu0 0.0
      %1036 = vmatpush1.msra.mxu0 0.0
      %1037 = vmatprep.subr.mxu0 0.0
      %1038 = vmatpush1.msra.mxu0 0.0
      %1039 = vmatprep.subr.mxu0 0.0
      %1040 = vmatpush1.msra.mxu0 0.0
      %1041 = vmatprep.subr.mxu0 0.0
      %1042 = vmatpush1.msra.mxu0 0.0
      %1043 = vmatprep.subr.mxu0 0.0
      %1044 = vmatpush1.msra.mxu0 0.0
      %1045 = vmatprep.subr.mxu0 0.0
      %1046 = vmatpush1.msra.mxu0 0.0
      %1047 = vmatprep.subr.mxu0 0.0
      %1048 = vmatpush1.msra.mxu0 0.0
      %1049 = vmatprep.subr.mxu0 0.0
      %1050 = vmatpush1.msra.mxu0 0.0
      %1051 = vmatprep.subr.mxu0 0.0
      %1052 = vmatpush1.msra.mxu0 0.0
      %1053 = vmatprep.subr.mxu0 0.0
      %1054 = vmatpush1.msra.mxu0 0.0
      %1055 = vmatprep.subr.mxu0 0.0
      %1056 = vmatpush1.msra.mxu0 0.0
      %1057 = vmatprep.subr.mxu0 0.0
      %1058 = vmatpush1.msra.mxu0 0.0
      %1059 = vmatprep.subr.mxu0 0.0
      %1060 = vmatpush1.msra.mxu0 0.0
      %1061 = vmatprep.subr.mxu0 0.0
      %1062 = vmatpush1.msra.mxu0 0.0
      %1063 = vmatprep.subr.mxu0 0.0
      %1064 = vmatpush1.msra.mxu0 0.0
      %1065 = vmatprep.subr.mxu0 0.0
      %1066 = vmatpush1.msra.mxu0 0.0
      %1067 = vmatprep.subr.mxu0 0.0
      %1068 = vmatpush1.msra.mxu0 0.0
      %1069 = vmatprep.subr.mxu0 0.0
      %1070 = vmatpush1.msra.mxu0 0.0
      %1071 = vmatprep.subr.mxu0 0.0
      %1072 = vmatpush1.msra.mxu0 0.0
      %1073 = vmatprep.subr.mxu0 0.0
      %1074 = vmatpush1.msra.mxu0 0.0
      %1075 = vmatprep.subr.mxu0 0.0
      %1076 = vmatpush1.msra.mxu0 0.0
      %1077 = vmatprep.subr.mxu0 0.0
      %1078 = vmatpush1.msra.mxu0 0.0
      %1079 = vmatprep.subr.mxu0 0.0
      %1080 = vmatpush1.msra.mxu0 0.0
      %1081 = vmatprep.subr.mxu0 0.0
      %1082 = vmatpush1.msra.mxu0 0.0
      %1083 = vmatprep.subr.mxu0 0.0
      %1084 = vmatpush1.msra.mxu0 0.0
      %1085 = vmatprep.subr.mxu0 0.0
      %1086 = vmatpush1.msra.mxu0 0.0
      %1087 = vmatprep.subr.mxu0 0.0
      %1088 = vmatpush1.msra.mxu0 0.0
      %1089 = vmatprep.mubr.f32.mxu0 0.0
      %1090 = vmatmul.mubr.f32.gmra.mrb[0].mxu0 %v946
      %v1091 = vpop.f32.mrb[0].mxu0
      %v1092 = vadd.f32 0.0, %v1091
      %v1093 = vpop.f32.mrb[0].mxu0
      %1094 = vdwg.mxu0
      %v1095 = vadd.f32 %v926, %v1021
      %v1096 = vadd.f32 %v927, %v1023
      %v1097 = vadd.f32 %v928, %v1092
      %v1098 = vld [vmem:[%s261] sm:$0xff]
      %v1099 = vld [vmem:[%s261 + $0x8] sm:$0xf]
      %s1100 = scalar_lea.vmem %s1, 20
      %v1101 = vld [vmem:[%s1100] sm:$0xf]
      %v1104 = vcombine.high %v1098, %v1098
      %1105 = vrot.lane.b32.xlu0 %v1098, 108
      %v1106 = vpop.permute.xlu0 %1105
      %1107 = vrot.lane.b32.xlu0 %v1104, 108
      %v1108 = vpop.permute.xlu0 %1107
      %1109 = vrot.lane.b32.xlu0 %v1099, 108
      %v1110 = vpop.permute.xlu0 %1109
      %vm1111 = vcmask 883712
      %v1112 = vsel %vm1111, %v1106, %v1108
      %v1113 = vsel %vm1111, %v1108, %v1110
      %v1115 = vsel %vm289, %v1101, 0
      %v1117 = vsel %vm293, %v1112, 0
      %v1119 = vsel %vm293, %v1113, 0
      %v1121 = vsel %vm293, %v1110, 0
      %1123 = vmatprep.subr.mxu0 %v1119
      %1124 = vmatpush1.msra.mxu0 %v1117
      %1125 = vmatprep.subr.mxu0 0.0
      %1126 = vmatpush1.msra.mxu0 0.0
      %1127 = vmatprep.subr.mxu0 0.0
      %1128 = vmatpush1.msra.mxu0 0.0
      %1129 = vmatprep.subr.mxu0 0.0
      %1130 = vmatpush1.msra.mxu0 0.0
      %1131 = vmatprep.subr.mxu0 0.0
      %1132 = vmatpush1.msra.mxu0 0.0
      %1133 = vmatprep.subr.mxu0 0.0
      %1134 = vmatpush1.msra.mxu0 0.0
      %1135 = vmatprep.subr.mxu0 0.0
      %1136 = vmatpush1.msra.mxu0 0.0
      %1137 = vmatprep.subr.mxu0 0.0
      %1138 = vmatpush1.msra.mxu0 0.0
      %1139 = vmatprep.subr.mxu0 0.0
      %1140 = vmatpush1.msra.mxu0 0.0
      %1141 = vmatprep.subr.mxu0 0.0
      %1142 = vmatpush1.msra.mxu0 0.0
      %1143 = vmatprep.subr.mxu0 0.0
      %1144 = vmatpush1.msra.mxu0 0.0
      %1145 = vmatprep.subr.mxu0 0.0
      %1146 = vmatpush1.msra.mxu0 0.0
      %1147 = vmatprep.subr.mxu0 0.0
      %1148 = vmatpush1.msra.mxu0 0.0
      %1149 = vmatprep.subr.mxu0 0.0
      %1150 = vmatpush1.msra.mxu0 0.0
      %1151 = vmatprep.subr.mxu0 0.0
      %1152 = vmatpush1.msra.mxu0 0.0
      %1153 = vmatprep.subr.mxu0 0.0
      %1154 = vmatpush1.msra.mxu0 0.0
      %1155 = vmatprep.subr.mxu0 0.0
      %1156 = vmatpush1.msra.mxu0 0.0
      %1157 = vmatprep.subr.mxu0 0.0
      %1158 = vmatpush1.msra.mxu0 0.0
      %1159 = vmatprep.subr.mxu0 0.0
      %1160 = vmatpush1.msra.mxu0 0.0
      %1161 = vmatprep.subr.mxu0 0.0
      %1162 = vmatpush1.msra.mxu0 0.0
      %1163 = vmatprep.subr.mxu0 0.0
      %1164 = vmatpush1.msra.mxu0 0.0
      %1165 = vmatprep.subr.mxu0 0.0
      %1166 = vmatpush1.msra.mxu0 0.0
      %1167 = vmatprep.subr.mxu0 0.0
      %1168 = vmatpush1.msra.mxu0 0.0
      %1169 = vmatprep.subr.mxu0 0.0
      %1170 = vmatpush1.msra.mxu0 0.0
      %1171 = vmatprep.subr.mxu0 0.0
      %1172 = vmatpush1.msra.mxu0 0.0
      %1173 = vmatprep.subr.mxu0 0.0
      %1174 = vmatpush1.msra.mxu0 0.0
      %1175 = vmatprep.subr.mxu0 0.0
      %1176 = vmatpush1.msra.mxu0 0.0
      %1177 = vmatprep.subr.mxu0 0.0
      %1178 = vmatpush1.msra.mxu0 0.0
      %1179 = vmatprep.subr.mxu0 0.0
      %1180 = vmatpush1.msra.mxu0 0.0
      %1181 = vmatprep.subr.mxu0 0.0
      %1182 = vmatpush1.msra.mxu0 0.0
      %1183 = vmatprep.subr.mxu0 0.0
      %1184 = vmatpush1.msra.mxu0 0.0
      %1185 = vmatprep.subr.mxu0 0.0
      %1186 = vmatpush1.msra.mxu0 0.0
      %1187 = vmatprep.mubr.f32.mxu0 0.0
      %1188 = vmatmul.mubr.f32.gmra.mrb[0].mxu0 %v1115
      %v1189 = vpop.f32.mrb[0].mxu0
      %v1190 = vadd.f32 0.0, %v1189
      %v1191 = vpop.f32.mrb[0].mxu0
      %v1192 = vadd.f32 0.0, %v1191
      %1193 = vdwg.mxu0
      %1194 = vmatprep.subr.mxu0 0.0
      %1195 = vmatpush1.msra.mxu0 %v1121
      %1196 = vmatprep.subr.mxu0 0.0
      %1197 = vmatpush1.msra.mxu0 0.0
      %1198 = vmatprep.subr.mxu0 0.0
      %1199 = vmatpush1.msra.mxu0 0.0
      %1200 = vmatprep.subr.mxu0 0.0
      %1201 = vmatpush1.msra.mxu0 0.0
      %1202 = vmatprep.subr.mxu0 0.0
      %1203 = vmatpush1.msra.mxu0 0.0
      %1204 = vmatprep.subr.mxu0 0.0
      %1205 = vmatpush1.msra.mxu0 0.0
      %1206 = vmatprep.subr.mxu0 0.0
      %1207 = vmatpush1.msra.mxu0 0.0
      %1208 = vmatprep.subr.mxu0 0.0
      %1209 = vmatpush1.msra.mxu0 0.0
      %1210 = vmatprep.subr.mxu0 0.0
      %1211 = vmatpush1.msra.mxu0 0.0
      %1212 = vmatprep.subr.mxu0 0.0
      %1213 = vmatpush1.msra.mxu0 0.0
      %1214 = vmatprep.subr.mxu0 0.0
      %1215 = vmatpush1.msra.mxu0 0.0
      %1216 = vmatprep.subr.mxu0 0.0
      %1217 = vmatpush1.msra.mxu0 0.0
      %1218 = vmatprep.subr.mxu0 0.0
      %1219 = vmatpush1.msra.mxu0 0.0
      %1220 = vmatprep.subr.mxu0 0.0
      %1221 = vmatpush1.msra.mxu0 0.0
      %1222 = vmatprep.subr.mxu0 0.0
      %1223 = vmatpush1.msra.mxu0 0.0
      %1224 = vmatprep.subr.mxu0 0.0
      %1225 = vmatpush1.msra.mxu0 0.0
      %1226 = vmatprep.subr.mxu0 0.0
      %1227 = vmatpush1.msra.mxu0 0.0
      %1228 = vmatprep.subr.mxu0 0.0
      %1229 = vmatpush1.msra.mxu0 0.0
      %1230 = vmatprep.subr.mxu0 0.0
      %1231 = vmatpush1.msra.mxu0 0.0
      %1232 = vmatprep.subr.mxu0 0.0
      %1233 = vmatpush1.msra.mxu0 0.0
      %1234 = vmatprep.subr.mxu0 0.0
      %1235 = vmatpush1.msra.mxu0 0.0
      %1236 = vmatprep.subr.mxu0 0.0
      %1237 = vmatpush1.msra.mxu0 0.0
      %1238 = vmatprep.subr.mxu0 0.0
      %1239 = vmatpush1.msra.mxu0 0.0
      %1240 = vmatprep.subr.mxu0 0.0
      %1241 = vmatpush1.msra.mxu0 0.0
      %1242 = vmatprep.subr.mxu0 0.0
      %1243 = vmatpush1.msra.mxu0 0.0
      %1244 = vmatprep.subr.mxu0 0.0
      %1245 = vmatpush1.msra.mxu0 0.0
      %1246 = vmatprep.subr.mxu0 0.0
      %1247 = vmatpush1.msra.mxu0 0.0
      %1248 = vmatprep.subr.mxu0 0.0
      %1249 = vmatpush1.msra.mxu0 0.0
      %1250 = vmatprep.subr.mxu0 0.0
      %1251 = vmatpush1.msra.mxu0 0.0
      %1252 = vmatprep.subr.mxu0 0.0
      %1253 = vmatpush1.msra.mxu0 0.0
      %1254 = vmatprep.subr.mxu0 0.0
      %1255 = vmatpush1.msra.mxu0 0.0
      %1256 = vmatprep.subr.mxu0 0.0
      %1257 = vmatpush1.msra.mxu0 0.0
      %1258 = vmatprep.mubr.f32.mxu0 0.0
      %1259 = vmatmul.mubr.f32.gmra.mrb[0].mxu0 %v1115
      %v1260 = vpop.f32.mrb[0].mxu0
      %v1261 = vadd.f32 0.0, %v1260
      %v1262 = vpop.f32.mrb[0].mxu0
      %1263 = vdwg.mxu0
      %v1264 = vadd.f32 %v1095, %v1190
      %v1265 = vadd.f32 %v1096, %v1192
      %v1266 = vadd.f32 %v1097, %v1261
      %v1267 = vld [vmem:[%s261] sm:$0xff]
      %v1268 = vld [vmem:[%s261 + $0x8] sm:$0xf]
      %s1269 = scalar_lea.vmem %s1, 24
      %v1270 = vld [vmem:[%s1269] sm:$0xf]
      %v1273 = vcombine.high %v1267, %v1267
      %1274 = vrot.lane.b32.xlu0 %v1267, 92
      %v1275 = vpop.permute.xlu0 %1274
      %1276 = vrot.lane.b32.xlu0 %v1273, 92
      %v1277 = vpop.permute.xlu0 %1276
      %1278 = vrot.lane.b32.xlu0 %v1268, 92
      %v1279 = vpop.permute.xlu0 %1278
      %vm1280 = vcmask 752640
      %v1281 = vsel %vm1280, %v1275, %v1277
      %v1282 = vsel %vm1280, %v1277, %v1279
      %v1284 = vsel %vm289, %v1270, 0
      %v1286 = vsel %vm293, %v1281, 0
      %v1288 = vsel %vm293, %v1282, 0
      %v1290 = vsel %vm293, %v1279, 0
      %1292 = vmatprep.subr.mxu0 %v1288
      %1293 = vmatpush1.msra.mxu0 %v1286
      %1294 = vmatprep.subr.mxu0 0.0
      %1295 = vmatpush1.msra.mxu0 0.0
      %1296 = vmatprep.subr.mxu0 0.0
      %1297 = vmatpush1.msra.mxu0 0.0
      %1298 = vmatprep.subr.mxu0 0.0
      %1299 = vmatpush1.msra.mxu0 0.0
      %1300 = vmatprep.subr.mxu0 0.0
      %1301 = vmatpush1.msra.mxu0 0.0
      %1302 = vmatprep.subr.mxu0 0.0
      %1303 = vmatpush1.msra.mxu0 0.0
      %1304 = vmatprep.subr.mxu0 0.0
      %1305 = vmatpush1.msra.mxu0 0.0
      %1306 = vmatprep.subr.mxu0 0.0
      %1307 = vmatpush1.msra.mxu0 0.0
      %1308 = vmatprep.subr.mxu0 0.0
      %1309 = vmatpush1.msra.mxu0 0.0
      %1310 = vmatprep.subr.mxu0 0.0
      %1311 = vmatpush1.msra.mxu0 0.0
      %1312 = vmatprep.subr.mxu0 0.0
      %1313 = vmatpush1.msra.mxu0 0.0
      %1314 = vmatprep.subr.mxu0 0.0
      %1315 = vmatpush1.msra.mxu0 0.0
      %1316 = vmatprep.subr.mxu0 0.0
      %1317 = vmatpush1.msra.mxu0 0.0
      %1318 = vmatprep.subr.mxu0 0.0
      %1319 = vmatpush1.msra.mxu0 0.0
      %1320 = vmatprep.subr.mxu0 0.0
      %1321 = vmatpush1.msra.mxu0 0.0
      %1322 = vmatprep.subr.mxu0 0.0
      %1323 = vmatpush1.msra.mxu0 0.0
      %1324 = vmatprep.subr.mxu0 0.0
      %1325 = vmatpush1.msra.mxu0 0.0
      %1326 = vmatprep.subr.mxu0 0.0
      %1327 = vmatpush1.msra.mxu0 0.0
      %1328 = vmatprep.subr.mxu0 0.0
      %1329 = vmatpush1.msra.mxu0 0.0
      %1330 = vmatprep.subr.mxu0 0.0
      %1331 = vmatpush1.msra.mxu0 0.0
      %1332 = vmatprep.subr.mxu0 0.0
      %1333 = vmatpush1.msra.mxu0 0.0
      %1334 = vmatprep.subr.mxu0 0.0
      %1335 = vmatpush1.msra.mxu0 0.0
      %1336 = vmatprep.subr.mxu0 0.0
      %1337 = vmatpush1.msra.mxu0 0.0
      %1338 = vmatprep.subr.mxu0 0.0
      %1339 = vmatpush1.msra.mxu0 0.0
      %1340 = vmatprep.subr.mxu0 0.0
      %1341 = vmatpush1.msra.mxu0 0.0
      %1342 = vmatprep.subr.mxu0 0.0
      %1343 = vmatpush1.msra.mxu0 0.0
      %1344 = vmatprep.subr.mxu0 0.0
      %1345 = vmatpush1.msra.mxu0 0.0
      %1346 = vmatprep.subr.mxu0 0.0
      %1347 = vmatpush1.msra.mxu0 0.0
      %1348 = vmatprep.subr.mxu0 0.0
      %1349 = vmatpush1.msra.mxu0 0.0
      %1350 = vmatprep.subr.mxu0 0.0
      %1351 = vmatpush1.msra.mxu0 0.0
      %1352 = vmatprep.subr.mxu0 0.0
      %1353 = vmatpush1.msra.mxu0 0.0
      %1354 = vmatprep.subr.mxu0 0.0
      %1355 = vmatpush1.msra.mxu0 0.0
      %1356 = vmatprep.mubr.f32.mxu0 0.0
      %1357 = vmatmul.mubr.f32.gmra.mrb[0].mxu0 %v1284
      %v1358 = vpop.f32.mrb[0].mxu0
      %v1359 = vadd.f32 0.0, %v1358
      %v1360 = vpop.f32.mrb[0].mxu0
      %v1361 = vadd.f32 0.0, %v1360
      %1362 = vdwg.mxu0
      %1363 = vmatprep.subr.mxu0 0.0
      %1364 = vmatpush1.msra.mxu0 %v1290
      %1365 = vmatprep.subr.mxu0 0.0
      %1366 = vmatpush1.msra.mxu0 0.0
      %1367 = vmatprep.subr.mxu0 0.0
      %1368 = vmatpush1.msra.mxu0 0.0
      %1369 = vmatprep.subr.mxu0 0.0
      %1370 = vmatpush1.msra.mxu0 0.0
      %1371 = vmatprep.subr.mxu0 0.0
      %1372 = vmatpush1.msra.mxu0 0.0
      %1373 = vmatprep.subr.mxu0 0.0
      %1374 = vmatpush1.msra.mxu0 0.0
      %1375 = vmatprep.subr.mxu0 0.0
      %1376 = vmatpush1.msra.mxu0 0.0
      %1377 = vmatprep.subr.mxu0 0.0
      %1378 = vmatpush1.msra.mxu0 0.0
      %1379 = vmatprep.subr.mxu0 0.0
      %1380 = vmatpush1.msra.mxu0 0.0
      %1381 = vmatprep.subr.mxu0 0.0
      %1382 = vmatpush1.msra.mxu0 0.0
      %1383 = vmatprep.subr.mxu0 0.0
      %1384 = vmatpush1.msra.mxu0 0.0
      %1385 = vmatprep.subr.mxu0 0.0
      %1386 = vmatpush1.msra.mxu0 0.0
      %1387 = vmatprep.subr.mxu0 0.0
      %1388 = vmatpush1.msra.mxu0 0.0
      %1389 = vmatprep.subr.mxu0 0.0
      %1390 = vmatpush1.msra.mxu0 0.0
      %1391 = vmatprep.subr.mxu0 0.0
      %1392 = vmatpush1.msra.mxu0 0.0
      %1393 = vmatprep.subr.mxu0 0.0
      %1394 = vmatpush1.msra.mxu0 0.0
      %1395 = vmatprep.subr.mxu0 0.0
      %1396 = vmatpush1.msra.mxu0 0.0
      %1397 = vmatprep.subr.mxu0 0.0
      %1398 = vmatpush1.msra.mxu0 0.0
      %1399 = vmatprep.subr.mxu0 0.0
      %1400 = vmatpush1.msra.mxu0 0.0
      %1401 = vmatprep.subr.mxu0 0.0
      %1402 = vmatpush1.msra.mxu0 0.0
      %1403 = vmatprep.subr.mxu0 0.0
      %1404 = vmatpush1.msra.mxu0 0.0
      %1405 = vmatprep.subr.mxu0 0.0
      %1406 = vmatpush1.msra.mxu0 0.0
      %1407 = vmatprep.subr.mxu0 0.0
      %1408 = vmatpush1.msra.mxu0 0.0
      %1409 = vmatprep.subr.mxu0 0.0
      %1410 = vmatpush1.msra.mxu0 0.0
      %1411 = vmatprep.subr.mxu0 0.0
      %1412 = vmatpush1.msra.mxu0 0.0
      %1413 = vmatprep.subr.mxu0 0.0
      %1414 = vmatpush1.msra.mxu0 0.0
      %1415 = vmatprep.subr.mxu0 0.0
      %1416 = vmatpush1.msra.mxu0 0.0
      %1417 = vmatprep.subr.mxu0 0.0
      %1418 = vmatpush1.msra.mxu0 0.0
      %1419 = vmatprep.subr.mxu0 0.0
      %1420 = vmatpush1.msra.mxu0 0.0
      %1421 = vmatprep.subr.mxu0 0.0
      %1422 = vmatpush1.msra.mxu0 0.0
      %1423 = vmatprep.subr.mxu0 0.0
      %1424 = vmatpush1.msra.mxu0 0.0
      %1425 = vmatprep.subr.mxu0 0.0
      %1426 = vmatpush1.msra.mxu0 0.0
      %1427 = vmatprep.mubr.f32.mxu0 0.0
      %1428 = vmatmul.mubr.f32.gmra.mrb[0].mxu0 %v1284
      %v1429 = vpop.f32.mrb[0].mxu0
      %v1430 = vadd.f32 0.0, %v1429
      %v1431 = vpop.f32.mrb[0].mxu0
      %1432 = vdwg.mxu0
      %v1433 = vadd.f32 %v1264, %v1359
      %v1434 = vadd.f32 %v1265, %v1361
      %v1435 = vadd.f32 %v1266, %v1430
      %v1436 = vld [vmem:[%s261] sm:$0xff]
      %v1437 = vld [vmem:[%s261 + $0x8] sm:$0xf]
      %s1438 = scalar_lea.vmem %s1, 28
      %v1439 = vld [vmem:[%s1438] sm:$0xf]
      %v1442 = vcombine.high %v1436, %v1436
      %1443 = vrot.lane.b32.xlu0 %v1436, 91
      %v1444 = vpop.permute.xlu0 %1443
      %1445 = vrot.lane.b32.xlu0 %v1442, 91
      %v1446 = vpop.permute.xlu0 %1445
      %1447 = vrot.lane.b32.xlu0 %v1437, 91
      %v1448 = vpop.permute.xlu0 %1447
      %vm1449 = vcmask 744448
      %v1450 = vsel %vm1449, %v1444, %v1446
      %v1451 = vsel %vm1449, %v1446, %v1448
      %v1453 = vsel %vm289, %v1439, 0
      %v1455 = vsel %vm293, %v1450, 0
      %v1457 = vsel %vm293, %v1451, 0
      %v1459 = vsel %vm293, %v1448, 0
      %1461 = vmatprep.subr.mxu0 %v1457
      %1462 = vmatpush1.msra.mxu0 %v1455
      %1463 = vmatprep.subr.mxu0 0.0
      %1464 = vmatpush1.msra.mxu0 0.0
      %1465 = vmatprep.subr.mxu0 0.0
      %1466 = vmatpush1.msra.mxu0 0.0
      %1467 = vmatprep.subr.mxu0 0.0
      %1468 = vmatpush1.msra.mxu0 0.0
      %1469 = vmatprep.subr.mxu0 0.0
      %1470 = vmatpush1.msra.mxu0 0.0
      %1471 = vmatprep.subr.mxu0 0.0
      %1472 = vmatpush1.msra.mxu0 0.0
      %1473 = vmatprep.subr.mxu0 0.0
      %1474 = vmatpush1.msra.mxu0 0.0
      %1475 = vmatprep.subr.mxu0 0.0
      %1476 = vmatpush1.msra.mxu0 0.0
      %1477 = vmatprep.subr.mxu0 0.0
      %1478 = vmatpush1.msra.mxu0 0.0
      %1479 = vmatprep.subr.mxu0 0.0
      %1480 = vmatpush1.msra.mxu0 0.0
      %1481 = vmatprep.subr.mxu0 0.0
      %1482 = vmatpush1.msra.mxu0 0.0
      %1483 = vmatprep.subr.mxu0 0.0
      %1484 = vmatpush1.msra.mxu0 0.0
      %1485 = vmatprep.subr.mxu0 0.0
      %1486 = vmatpush1.msra.mxu0 0.0
      %1487 = vmatprep.subr.mxu0 0.0
      %1488 = vmatpush1.msra.mxu0 0.0
      %1489 = vmatprep.subr.mxu0 0.0
      %1490 = vmatpush1.msra.mxu0 0.0
      %1491 = vmatprep.subr.mxu0 0.0
      %1492 = vmatpush1.msra.mxu0 0.0
      %1493 = vmatprep.subr.mxu0 0.0
      %1494 = vmatpush1.msra.mxu0 0.0
      %1495 = vmatprep.subr.mxu0 0.0
      %1496 = vmatpush1.msra.mxu0 0.0
      %1497 = vmatprep.subr.mxu0 0.0
      %1498 = vmatpush1.msra.mxu0 0.0
      %1499 = vmatprep.subr.mxu0 0.0
      %1500 = vmatpush1.msra.mxu0 0.0
      %1501 = vmatprep.subr.mxu0 0.0
      %1502 = vmatpush1.msra.mxu0 0.0
      %1503 = vmatprep.subr.mxu0 0.0
      %1504 = vmatpush1.msra.mxu0 0.0
      %1505 = vmatprep.subr.mxu0 0.0
      %1506 = vmatpush1.msra.mxu0 0.0
      %1507 = vmatprep.subr.mxu0 0.0
      %1508 = vmatpush1.msra.mxu0 0.0
      %1509 = vmatprep.subr.mxu0 0.0
      %1510 = vmatpush1.msra.mxu0 0.0
      %1511 = vmatprep.subr.mxu0 0.0
      %1512 = vmatpush1.msra.mxu0 0.0
      %1513 = vmatprep.subr.mxu0 0.0
      %1514 = vmatpush1.msra.mxu0 0.0
      %1515 = vmatprep.subr.mxu0 0.0
      %1516 = vmatpush1.msra.mxu0 0.0
      %1517 = vmatprep.subr.mxu0 0.0
      %1518 = vmatpush1.msra.mxu0 0.0
      %1519 = vmatprep.subr.mxu0 0.0
      %1520 = vmatpush1.msra.mxu0 0.0
      %1521 = vmatprep.subr.mxu0 0.0
      %1522 = vmatpush1.msra.mxu0 0.0
      %1523 = vmatprep.subr.mxu0 0.0
      %1524 = vmatpush1.msra.mxu0 0.0
      %1525 = vmatprep.mubr.f32.mxu0 0.0
      %1526 = vmatmul.mubr.f32.gmra.mrb[0].mxu0 %v1453
      %v1527 = vpop.f32.mrb[0].mxu0
      %v1528 = vadd.f32 0.0, %v1527
      %v1529 = vpop.f32.mrb[0].mxu0
      %v1530 = vadd.f32 0.0, %v1529
      %1531 = vdwg.mxu0
      %1532 = vmatprep.subr.mxu0 0.0
      %1533 = vmatpush1.msra.mxu0 %v1459
      %1534 = vmatprep.subr.mxu0 0.0
      %1535 = vmatpush1.msra.mxu0 0.0
      %1536 = vmatprep.subr.mxu0 0.0
      %1537 = vmatpush1.msra.mxu0 0.0
      %1538 = vmatprep.subr.mxu0 0.0
      %1539 = vmatpush1.msra.mxu0 0.0
      %1540 = vmatprep.subr.mxu0 0.0
      %1541 = vmatpush1.msra.mxu0 0.0
      %1542 = vmatprep.subr.mxu0 0.0
      %1543 = vmatpush1.msra.mxu0 0.0
      %1544 = vmatprep.subr.mxu0 0.0
      %1545 = vmatpush1.msra.mxu0 0.0
      %1546 = vmatprep.subr.mxu0 0.0
      %1547 = vmatpush1.msra.mxu0 0.0
      %1548 = vmatprep.subr.mxu0 0.0
      %1549 = vmatpush1.msra.mxu0 0.0
      %1550 = vmatprep.subr.mxu0 0.0
      %1551 = vmatpush1.msra.mxu0 0.0
      %1552 = vmatprep.subr.mxu0 0.0
      %1553 = vmatpush1.msra.mxu0 0.0
      %1554 = vmatprep.subr.mxu0 0.0
      %1555 = vmatpush1.msra.mxu0 0.0
      %1556 = vmatprep.subr.mxu0 0.0
      %1557 = vmatpush1.msra.mxu0 0.0
      %1558 = vmatprep.subr.mxu0 0.0
      %1559 = vmatpush1.msra.mxu0 0.0
      %1560 = vmatprep.subr.mxu0 0.0
      %1561 = vmatpush1.msra.mxu0 0.0
      %1562 = vmatprep.subr.mxu0 0.0
      %1563 = vmatpush1.msra.mxu0 0.0
      %1564 = vmatprep.subr.mxu0 0.0
      %1565 = vmatpush1.msra.mxu0 0.0
      %1566 = vmatprep.subr.mxu0 0.0
      %1567 = vmatpush1.msra.mxu0 0.0
      %1568 = vmatprep.subr.mxu0 0.0
      %1569 = vmatpush1.msra.mxu0 0.0
      %1570 = vmatprep.subr.mxu0 0.0
      %1571 = vmatpush1.msra.mxu0 0.0
      %1572 = vmatprep.subr.mxu0 0.0
      %1573 = vmatpush1.msra.mxu0 0.0
      %1574 = vmatprep.subr.mxu0 0.0
      %1575 = vmatpush1.msra.mxu0 0.0
      %1576 = vmatprep.subr.mxu0 0.0
      %1577 = vmatpush1.msra.mxu0 0.0
      %1578 = vmatprep.subr.mxu0 0.0
      %1579 = vmatpush1.msra.mxu0 0.0
      %1580 = vmatprep.subr.mxu0 0.0
      %1581 = vmatpush1.msra.mxu0 0.0
      %1582 = vmatprep.subr.mxu0 0.0
      %1583 = vmatpush1.msra.mxu0 0.0
      %1584 = vmatprep.subr.mxu0 0.0
      %1585 = vmatpush1.msra.mxu0 0.0
      %1586 = vmatprep.subr.mxu0 0.0
      %1587 = vmatpush1.msra.mxu0 0.0
      %1588 = vmatprep.subr.mxu0 0.0
      %1589 = vmatpush1.msra.mxu0 0.0
      %1590 = vmatprep.subr.mxu0 0.0
      %1591 = vmatpush1.msra.mxu0 0.0
      %1592 = vmatprep.subr.mxu0 0.0
      %1593 = vmatpush1.msra.mxu0 0.0
      %1594 = vmatprep.subr.mxu0 0.0
      %1595 = vmatpush1.msra.mxu0 0.0
      %1596 = vmatprep.mubr.f32.mxu0 0.0
      %1597 = vmatmul.mubr.f32.gmra.mrb[0].mxu0 %v1453
      %v1598 = vpop.f32.mrb[0].mxu0
      %v1599 = vadd.f32 0.0, %v1598
      %v1600 = vpop.f32.mrb[0].mxu0
      %1601 = vdwg.mxu0
      %v1602 = vadd.f32 %v1433, %v1528
      %v1603 = vadd.f32 %v1434, %v1530
      %v1604 = vadd.f32 %v1435, %v1599
      %v1605 = vld [vmem:[%s261] sm:$0xff]
      %v1606 = vld [vmem:[%s261 + $0x8] sm:$0xf]
      %s1607 = scalar_lea.vmem %s1, 32
      %v1608 = vld [vmem:[%s1607] sm:$0xf]
      %v1611 = vcombine.high %v1605, %v1605
      %1612 = vrot.lane.b32.xlu0 %v1605, 90
      %v1613 = vpop.permute.xlu0 %1612
      %1614 = vrot.lane.b32.xlu0 %v1611, 90
      %v1615 = vpop.permute.xlu0 %1614
      %1616 = vrot.lane.b32.xlu0 %v1606, 90
      %v1617 = vpop.permute.xlu0 %1616
      %vm1618 = vcmask 736256
      %v1619 = vsel %vm1618, %v1613, %v1615
      %v1620 = vsel %vm1618, %v1615, %v1617
      %v1622 = vsel %vm289, %v1608, 0
      %v1624 = vsel %vm293, %v1619, 0
      %v1626 = vsel %vm293, %v1620, 0
      %v1628 = vsel %vm293, %v1617, 0
      %1630 = vmatprep.subr.mxu0 %v1626
      %1631 = vmatpush1.msra.mxu0 %v1624
      %1632 = vmatprep.subr.mxu0 0.0
      %1633 = vmatpush1.msra.mxu0 0.0
      %1634 = vmatprep.subr.mxu0 0.0
      %1635 = vmatpush1.msra.mxu0 0.0
      %1636 = vmatprep.subr.mxu0 0.0
      %1637 = vmatpush1.msra.mxu0 0.0
      %1638 = vmatprep.subr.mxu0 0.0
      %1639 = vmatpush1.msra.mxu0 0.0
      %1640 = vmatprep.subr.mxu0 0.0
      %1641 = vmatpush1.msra.mxu0 0.0
      %1642 = vmatprep.subr.mxu0 0.0
      %1643 = vmatpush1.msra.mxu0 0.0
      %1644 = vmatprep.subr.mxu0 0.0
      %1645 = vmatpush1.msra.mxu0 0.0
      %1646 = vmatprep.subr.mxu0 0.0
      %1647 = vmatpush1.msra.mxu0 0.0
      %1648 = vmatprep.subr.mxu0 0.0
      %1649 = vmatpush1.msra.mxu0 0.0
      %1650 = vmatprep.subr.mxu0 0.0
      %1651 = vmatpush1.msra.mxu0 0.0
      %1652 = vmatprep.subr.mxu0 0.0
      %1653 = vmatpush1.msra.mxu0 0.0
      %1654 = vmatprep.subr.mxu0 0.0
      %1655 = vmatpush1.msra.mxu0 0.0
      %1656 = vmatprep.subr.mxu0 0.0
      %1657 = vmatpush1.msra.mxu0 0.0
      %1658 = vmatprep.subr.mxu0 0.0
      %1659 = vmatpush1.msra.mxu0 0.0
      %1660 = vmatprep.subr.mxu0 0.0
      %1661 = vmatpush1.msra.mxu0 0.0
      %1662 = vmatprep.subr.mxu0 0.0
      %1663 = vmatpush1.msra.mxu0 0.0
      %1664 = vmatprep.subr.mxu0 0.0
      %1665 = vmatpush1.msra.mxu0 0.0
      %1666 = vmatprep.subr.mxu0 0.0
      %1667 = vmatpush1.msra.mxu0 0.0
      %1668 = vmatprep.subr.mxu0 0.0
      %1669 = vmatpush1.msra.mxu0 0.0
      %1670 = vmatprep.subr.mxu0 0.0
      %1671 = vmatpush1.msra.mxu0 0.0
      %1672 = vmatprep.subr.mxu0 0.0
      %1673 = vmatpush1.msra.mxu0 0.0
      %1674 = vmatprep.subr.mxu0 0.0
      %1675 = vmatpush1.msra.mxu0 0.0
      %1676 = vmatprep.subr.mxu0 0.0
      %1677 = vmatpush1.msra.mxu0 0.0
      %1678 = vmatprep.subr.mxu0 0.0
      %1679 = vmatpush1.msra.mxu0 0.0
      %1680 = vmatprep.subr.mxu0 0.0
      %1681 = vmatpush1.msra.mxu0 0.0
      %1682 = vmatprep.subr.mxu0 0.0
      %1683 = vmatpush1.msra.mxu0 0.0
      %1684 = vmatprep.subr.mxu0 0.0
      %1685 = vmatpush1.msra.mxu0 0.0
      %1686 = vmatprep.subr.mxu0 0.0
      %1687 = vmatpush1.msra.mxu0 0.0
      %1688 = vmatprep.subr.mxu0 0.0
      %1689 = vmatpush1.msra.mxu0 0.0
      %1690 = vmatprep.subr.mxu0 0.0
      %1691 = vmatpush1.msra.mxu0 0.0
      %1692 = vmatprep.subr.mxu0 0.0
      %1693 = vmatpush1.msra.mxu0 0.0
      %1694 = vmatprep.mubr.f32.mxu0 0.0
      %1695 = vmatmul.mubr.f32.gmra.mrb[0].mxu0 %v1622
      %v1696 = vpop.f32.mrb[0].mxu0
      %v1697 = vadd.f32 0.0, %v1696
      %v1698 = vpop.f32.mrb[0].mxu0
      %v1699 = vadd.f32 0.0, %v1698
      %1700 = vdwg.mxu0
      %1701 = vmatprep.subr.mxu0 0.0
      %1702 = vmatpush1.msra.mxu0 %v1628
      %1703 = vmatprep.subr.mxu0 0.0
      %1704 = vmatpush1.msra.mxu0 0.0
      %1705 = vmatprep.subr.mxu0 0.0
      %1706 = vmatpush1.msra.mxu0 0.0
      %1707 = vmatprep.subr.mxu0 0.0
      %1708 = vmatpush1.msra.mxu0 0.0
      %1709 = vmatprep.subr.mxu0 0.0
      %1710 = vmatpush1.msra.mxu0 0.0
      %1711 = vmatprep.subr.mxu0 0.0
      %1712 = vmatpush1.msra.mxu0 0.0
      %1713 = vmatprep.subr.mxu0 0.0
      %1714 = vmatpush1.msra.mxu0 0.0
      %1715 = vmatprep.subr.mxu0 0.0
      %1716 = vmatpush1.msra.mxu0 0.0
      %1717 = vmatprep.subr.mxu0 0.0
      %1718 = vmatpush1.msra.mxu0 0.0
      %1719 = vmatprep.subr.mxu0 0.0
      %1720 = vmatpush1.msra.mxu0 0.0
      %1721 = vmatprep.subr.mxu0 0.0
      %1722 = vmatpush1.msra.mxu0 0.0
      %1723 = vmatprep.subr.mxu0 0.0
      %1724 = vmatpush1.msra.mxu0 0.0
      %1725 = vmatprep.subr.mxu0 0.0
      %1726 = vmatpush1.msra.mxu0 0.0
      %1727 = vmatprep.subr.mxu0 0.0
      %1728 = vmatpush1.msra.mxu0 0.0
      %1729 = vmatprep.subr.mxu0 0.0
      %1730 = vmatpush1.msra.mxu0 0.0
      %1731 = vmatprep.subr.mxu0 0.0
      %1732 = vmatpush1.msra.mxu0 0.0
      %1733 = vmatprep.subr.mxu0 0.0
      %1734 = vmatpush1.msra.mxu0 0.0
      %1735 = vmatprep.subr.mxu0 0.0
      %1736 = vmatpush1.msra.mxu0 0.0
      %1737 = vmatprep.subr.mxu0 0.0
      %1738 = vmatpush1.msra.mxu0 0.0
      %1739 = vmatprep.subr.mxu0 0.0
      %1740 = vmatpush1.msra.mxu0 0.0
      %1741 = vmatprep.subr.mxu0 0.0
      %1742 = vmatpush1.msra.mxu0 0.0
      %1743 = vmatprep.subr.mxu0 0.0
      %1744 = vmatpush1.msra.mxu0 0.0
      %1745 = vmatprep.subr.mxu0 0.0
      %1746 = vmatpush1.msra.mxu0 0.0
      %1747 = vmatprep.subr.mxu0 0.0
      %1748 = vmatpush1.msra.mxu0 0.0
      %1749 = vmatprep.subr.mxu0 0.0
      %1750 = vmatpush1.msra.mxu0 0.0
      %1751 = vmatprep.subr.mxu0 0.0
      %1752 = vmatpush1.msra.mxu0 0.0
      %1753 = vmatprep.subr.mxu0 0.0
      %1754 = vmatpush1.msra.mxu0 0.0
      %1755 = vmatprep.subr.mxu0 0.0
      %1756 = vmatpush1.msra.mxu0 0.0
      %1757 = vmatprep.subr.mxu0 0.0
      %1758 = vmatpush1.msra.mxu0 0.0
      %1759 = vmatprep.subr.mxu0 0.0
      %1760 = vmatpush1.msra.mxu0 0.0
      %1761 = vmatprep.subr.mxu0 0.0
      %1762 = vmatpush1.msra.mxu0 0.0
      %1763 = vmatprep.subr.mxu0 0.0
      %1764 = vmatpush1.msra.mxu0 0.0
      %1765 = vmatprep.mubr.f32.mxu0 0.0
      %1766 = vmatmul.mubr.f32.gmra.mrb[0].mxu0 %v1622
      %v1767 = vpop.f32.mrb[0].mxu0
      %v1768 = vadd.f32 0.0, %v1767
      %v1769 = vpop.f32.mrb[0].mxu0
      %1770 = vdwg.mxu0
      %v1771 = vadd.f32 %v1602, %v1697
      %v1772 = vadd.f32 %v1603, %v1699
      %v1773 = vadd.f32 %v1604, %v1768
      %v1774 = vld [vmem:[%s2] sm:$0xf]
      %1776 = vset.pattern.permute.xlu0 0
      %1777 = vperm.xlu0 %1776, %v1774
      %v1778 = vpop.permute.xlu0 %1777
      %v1780 = vadd.f32 %v1771, %v1778
      %v1781 = vadd.f32 %v1772, %v1778
      %v1782 = vadd.f32 %v1773, %v1778
      %vm1783 = vcmp.ge.f32.partialorder %v1780, 0.0
      %vm1784 = vcmp.ge.f32.partialorder %v1781, 0.0
      %vm1785 = vcmp.ge.f32.partialorder %v1782, 0.0
      %v1786 = vmul.f32 %v1780, 0.01
      %v1787 = vmul.f32 %v1781, 0.01
      %v1788 = vmul.f32 %v1782, 0.01
      %v1789 = vsel %vm1783, %v1780, %v1786
      %v1790 = vsel %vm1784, %v1781, %v1787
      %v1791 = vsel %vm1785, %v1782, %v1788
      %v1792 = vld [vmem:[%s3] sm:$0xf]
      %1794 = vset.pattern.permute.xlu0 0
      %1795 = vperm.xlu0 %1794, %v1792
      %v1796 = vpop.permute.xlu0 %1795
      %v1798 = vmul.f32 %v1789, %v1796
      %v1799 = vmul.f32 %v1790, %v1796
      %v1800 = vmul.f32 %v1791, %v1796
      %v1801 = vld [vmem:[%s4] sm:$0xf]
      %1803 = vset.pattern.permute.xlu0 0
      %1804 = vperm.xlu0 %1803, %v1801
      %v1805 = vpop.permute.xlu0 %1804
      %v1807 = vadd.f32 %v1798, %v1805
      %v1808 = vadd.f32 %v1799, %v1805
      %v1809 = vadd.f32 %v1800, %v1805
      %v1810 = vld [vmem:[%s266] sm:$0xff]
      %v1811 = vld [vmem:[%s266 + $0x8] sm:$0xf]
      %v1813 = vcombine.high %v1810, %v1810
      %v1815 = vadd.f32 %v1807, %v1810
      %v1816 = vadd.f32 %v1808, %v1813
      %v1817 = vadd.f32 %v1809, %v1811
      %v1818 = vmax.f32 %v1815, 0.0
      %v1819 = vmax.f32 %v1816, 0.0
      %v1820 = vmax.f32 %v1817, 0.0
      %v1823 = vcombine.low %v1818, %v1819
      %1825 = vst [vmem:[%s271] sm:$0xff] %v1823
      %vm1826 = vcmask 257024
      %1827 = vst.msk [vmem:[%s271 + $0x8] sm:$0xf] %vm1826, %v1820
      %p1828 = scmp.lt.s32.totalorder %s17, 1
      %s1829 = scalar_select %p1828, %s17, 1
      %s1830 = smul.addr %s1829, 3
      %s1831 = smul.addr %s1830, 4
      %s1832 = scalar_lea.vmem %s6, %s1831
      // Predicated region
      $region45: #{residual_block.3} parent=43 // pred_check
        %p1833 = pneg %p171
      $region46: #{residual_block.3} parent=43 // pred_check_branch
        %1835 = sbr.rel (%p1833) target = $region48
      $region47: #{residual_block.3} parent=43 // pred_region
        _
      $region48: #{residual_block.3} parent=43 // pred_fallthru
        _
    $region44: #{residual_block.3} parent=5 // pred_fallthru
      _
    %p1836 = scmp.le.s32.totalorder 2, %s12
    // Predicated region
    $region49: #{residual_block.3} parent=5 // pred_check
      %p1837 = pneg %p1836
    $region50: #{residual_block.3} parent=5 // pred_check_branch
      %1839 = sbr.rel (%p1837) target = $region52
    $region51: #{residual_block.3} parent=5 // pred_region
      %s1840 = ssub.s32 %s12, 2
      // Predicated region
      $region53: #{residual_block.3} parent=51 // pred_check
        %p1841 = pneg %p177
      $region54: #{residual_block.3} parent=51 // pred_check_branch
        %1843 = sbr.rel (%p1841) target = $region56
      $region55: #{residual_block.3} parent=51 // pred_region
        %p1844 = scmp.lt.s32.totalorder %s18, 1
        %s1845 = scalar_select %p1844, %s18, 1
        %s1846 = smul.addr %s1845, 3
        %s1847 = smul.addr %s1846, 4
        %s1848 = scalar_lea.vmem %s6, %s1847
      $region56: #{residual_block.3} parent=51 // pred_fallthru
        _
    $region52: #{residual_block.3} parent=5 // pred_fallthru
      _
  $region6: #{residual_block.3} parent=0 // loop_footer
    %s16 = sadd.s32 1, %s12
  $region7: #{residual_block.3} parent=0 // loop_footer_branch
    %11 = sbr.rel target = $region3
  $region8: #{residual_block.3} parent=0 // loop_exit
    _

</llo_original>
